<compile_context>
chip_gen: v5e
topology: v5e:2x2
jax: 0.10.0
libtpu: 0.0.40
codegen_flags: <defaults>
</compile_context>

<pallas_src>
import jax
import jax.numpy as jnp
from jax.experimental import pallas as pl
from jax.experimental.pallas import tpu as pltpu

N_SOURCE_NODES = 16   # IMAN uses 35; small deterministic synthetic size here
N_TARGET_NODES = 32   # IMAN uses 160; small deterministic synthetic size here
BN_EPS = 1e-3         # matches BatchNorm(..., eps=0.001, ...) in the module


def _generator_kernel(x_ref, graph_ref, wb_ref, rb_ref, out_ref, hsrc_scr):
    f32 = jnp.float32
    cdt = wb_ref.dtype            # bf16 on v6e/v7x, f32 otherwise (static)

    Fs, Ft = N_SOURCE_NODES, N_TARGET_NODES
    N = x_ref.shape[0]
    E = graph_ref.shape[1]        # lane-padded edge count

    x = x_ref[...]                                # [N, Fs]   node features
    gsrc_t = graph_ref[0:N, :]                    # [N, E]    source one-hot (transposed)
    tgt_scaled = graph_ref[N:2 * N, :]            # [N, E]    target one-hot * 1/deg
    ea_row = graph_ref[2 * N:2 * N + 1, :]        # [1, E]    edge attrs

    def nnconv_bn_sigmoid(h, layer, c_in, c_out):
        # ---- gather source-node features edge-major-transposed (one MXU matmul):
        #      h_src_T[i, e] = h[src[e], i]  ->  [c_in, E]
        hsrc_scr[...] = jax.lax.dot_general(
            h, gsrc_t, (((0,), (0,)), ((), ())), preferred_element_type=f32)

        # hoisted: broadcast edge attrs once per layer (not re-emitted per iter)
        ea_b = jnp.broadcast_to(ea_row.astype(cdt), (c_out, E))   # [c_out, E]
        base = layer * Fs

        # ---- per-input-channel message term, E on the lane axis:
        #      term_i[o, e] = h_src_T[i, e] * relu(ea[e]*W[i,o] + B[i,o])
        def chan_term(i):
            blk = wb_ref[base + i]                        # [Ft, 2]  (cdt)
            w_col = blk[0:c_out, 0:1]                     # [c_out, 1]
            b_col = blk[0:c_out, 1:2]                     # [c_out, 1]
            w_e = jnp.maximum(ea_b * w_col + b_col, 0.0)  # [c_out, E]  (cdt)
            h_row = hsrc_scr[pl.ds(i, 1), :].astype(cdt)  # [1, E] sublane row
            return (h_row * w_e).astype(f32)              # accumulate in f32

        # ---- accumulate in a register carry; init with the i=0 term
        msg = jax.lax.fori_loop(
            1, c_in, lambda i, acc: acc + chan_term(i), chan_term(0),
            unroll=True)                                   # [c_out, E] f32

        # ---- scatter-mean over incoming edges (1/deg folded into tgt_scaled):
        #      agg[n, o] = sum_e tgt_scaled[n, e] * msg[o, e]
        agg = jax.lax.dot_general(
            tgt_scaled, msg, (((1,), (1,)), ((), ())),
            preferred_element_type=f32)                    # [N, c_out]

        # ---- root weight + bias, folded BatchNorm (eval), sigmoid
        rb = rb_ref[layer]                                 # [Fs+3, Ft]  f32
        root = rb[0:c_in, 0:c_out]                         # [c_in, c_out]
        bias = rb[c_in:c_in + 1, 0:c_out]                  # [1, c_out]
        scale = rb[c_in + 1:c_in + 2, 0:c_out]             # gamma * rsqrt(var+eps)
        shift = rb[c_in + 2:c_in + 3, 0:c_out]             # beta - mean*scale
        z = agg + jnp.dot(h, root, preferred_element_type=f32) + bias
        return jax.nn.sigmoid(z * scale + shift)

    # x1 = sigmoid(BN(conv1(x)));  x3 = sigmoid(BN(conv3(x1)));  dropout = id (eval)
    x1 = nnconv_bn_sigmoid(x, 0, Fs, Fs)
    x3 = nnconv_bn_sigmoid(x1, 1, Fs, Ft)

    # x4 = x3.T @ x3  ->  [Ft, Ft]
    out_ref[...] = jax.lax.dot_general(
        x3, x3, (((0,), (0,)), ((), ())), preferred_element_type=f32)


def _bf16_message_loop_supported():
    """bf16 VPU exists on v6e/v7x; fall back to f32 everywhere else (incl. v5e)."""
    try:
        kind = jax.devices()[0].device_kind.lower()
    except Exception:
        return False
    return ("v6" in kind) or ("v7" in kind)


def prepare_graph(edge_index, edge_attr, num_nodes):
    """One-time plumbing for the static graph: [2N+1, E_pad] f32 pack.

    Rows 0..N-1   : source one-hot, transposed (gather matrix)
    Rows N..2N-1  : target one-hot * 1/max(in-degree,1) (scatter-mean matrix)
    Row  2N       : edge attributes
    The edge axis is zero-padded to a multiple of 128 (exact: padded columns
    contribute nothing to either matmul).
    """
    f32 = jnp.float32
    src, tgt = edge_index[0], edge_index[1]
    E = edge_attr.shape[0]
    E_pad = ((E + 127) // 128) * 128

    gsrc_t = jax.nn.one_hot(src, num_nodes, dtype=f32).T          # [N, E]
    tgt_t = jax.nn.one_hot(tgt, num_nodes, dtype=f32).T           # [N, E]
    deg = jnp.sum(tgt_t, axis=1, keepdims=True)
    inv_deg = 1.0 / jnp.maximum(deg, 1.0)
    tgt_scaled = tgt_t * inv_deg                                   # mean folded in
    ea_row = edge_attr.astype(f32).reshape(1, E)

    pad = E_pad - E
    gsrc_t = jnp.pad(gsrc_t, ((0, 0), (0, pad)))
    tgt_scaled = jnp.pad(tgt_scaled, ((0, 0), (0, pad)))
    ea_row = jnp.pad(ea_row, ((0, 0), (0, pad)))
    return jnp.concatenate([gsrc_t, tgt_scaled, ea_row], axis=0)   # [2N+1, E_pad]


def prepare_params(params, use_bf16):
    """Pack the 16 small parameter tensors into 2 refs (BN folded to affine, eval)."""
    f32 = jnp.float32
    Fs, Ft = N_SOURCE_NODES, N_TARGET_NODES
    wdt = jnp.bfloat16 if use_bf16 else f32

    def wb_block(w_nn, b_nn, c_in, c_out):
        # Edge-MLP params as per-input-channel column blocks: [c_in, Ft, 2]
        wb = jnp.stack([w_nn.reshape(c_in, c_out),
                        b_nn.reshape(c_in, c_out)], axis=-1).astype(f32)
        return jnp.pad(wb, ((0, 0), (0, Ft - c_out), (0, 0)))

    def rb_block(root, bias, gamma, beta, mean, var, c_out):
        scale = gamma * jax.lax.rsqrt(var + BN_EPS)
        shift = beta - mean * scale
        rb = jnp.concatenate([root, bias, scale, shift], axis=0).astype(f32)
        return jnp.pad(rb, ((0, 0), (0, Ft - c_out)))               # [Fs+3, Ft]

    wb_pack = jnp.concatenate(
        [wb_block(params['w_nn1'], params['b_nn1'], Fs, Fs),
         wb_block(params['w_nn3'], params['b_nn3'], Fs, Ft)], axis=0).astype(wdt)
    rb_pack = jnp.stack(
        [rb_block(params['root1'], params['bias1'], params['g1'],
                  params['be1'], params['m1'], params['v1'], Fs),
         rb_block(params['root3'], params['bias3'], params['g3'],
                  params['be3'], params['m3'], params['v3'], Ft)], axis=0)
    return wb_pack, rb_pack                                        # [2Fs,Ft,2], [2,Fs+3,Ft]


@jax.jit
def generator_forward(x, graph_pack, wb_pack, rb_pack):
    """Eval-mode forward of Generator. Returns [N_TARGET_NODES, N_TARGET_NODES] f32."""
    f32 = jnp.float32
    Fs, Ft = N_SOURCE_NODES, N_TARGET_NODES
    n = x.shape[0]
    E_pad = graph_pack.shape[1]

    args = (x.astype(f32), graph_pack.astype(f32), wb_pack, rb_pack.astype(f32))

    # Rough cost estimate so XLA schedules this tiny custom call sensibly.
    flops = int(2 * 2 * n * Fs * E_pad            # gathers (2 layers)
                + 5 * Fs * E_pad * (Fs + Ft)      # per-channel message loops
                + 2 * n * E_pad * (Fs + Ft)       # mean-aggregation matmuls
                + 2 * n * Fs * (Fs + Ft)          # root matmuls
                + 2 * n * Ft * Ft                 # final Gram matmul
                + 8 * n * (Fs + Ft))              # BN affine + sigmoid misc
    transcendentals = int(n * (Fs + Ft))          # sigmoids
    bytes_accessed = int(sum(int(a.size) * a.dtype.itemsize for a in args)
                         + Ft * Ft * 4)

    vmem = pl.BlockSpec(memory_space=pltpu.MemorySpace.VMEM)
    return pl.pallas_call(
        _generator_kernel,
        out_shape=jax.ShapeDtypeStruct((Ft, Ft), f32),
        in_specs=[vmem] * len(args),
        out_specs=vmem,
        scratch_shapes=[
            pltpu.VMEM((Fs, E_pad), f32),   # h_src_T (shared by both layers)
        ],
        compiler_params=pltpu.CompilerParams(
            vmem_limit_bytes=4 * 1024 * 1024),
        cost_estimate=pl.CostEstimate(flops=flops,
                                      transcendentals=transcendentals,
                                      bytes_accessed=bytes_accessed),
    )(*args)


def init_params(key):
    Fs, Ft = N_SOURCE_NODES, N_TARGET_NODES
    ks = jax.random.split(key, 12)
    f = jnp.float32

    def nrm(k, shape, scale=0.1):
        return (scale * jax.random.normal(k, shape)).astype(f)

    params = {
        # conv1: NNConv(Fs, Fs, nn=Linear(1, Fs*Fs)+ReLU), root [Fs,Fs], bias [Fs]
        'w_nn1': nrm(ks[0], (1, Fs * Fs)),
        'b_nn1': nrm(ks[1], (1, Fs * Fs)),
        'root1': nrm(ks[2], (Fs, Fs)),
        'bias1': nrm(ks[3], (1, Fs)),
        # BatchNorm(Fs) — affine params + (synthetic) running stats, eval mode
        'g1': 1.0 + nrm(ks[4], (1, Fs), 0.05),
        'be1': nrm(ks[4], (1, Fs), 0.05),
        'm1': nrm(ks[5], (1, Fs), 0.05),
        'v1': (1.0 + 0.5 * jax.random.uniform(ks[5], (1, Fs))).astype(f),
        # conv3: NNConv(Fs, Ft, nn=Linear(1, Ft*Fs)+ReLU), root [Fs,Ft], bias [Ft]
        'w_nn3': nrm(ks[6], (1, Fs * Ft)),
        'b_nn3': nrm(ks[7], (1, Fs * Ft)),
        'root3': nrm(ks[8], (Fs, Ft)),
        'bias3': nrm(ks[9], (1, Ft)),
        # BatchNorm(Ft)
        'g3': 1.0 + nrm(ks[10], (1, Ft), 0.05),
        'be3': nrm(ks[10], (1, Ft), 0.05),
        'm3': nrm(ks[11], (1, Ft), 0.05),
        'v3': (1.0 + 0.5 * jax.random.uniform(ks[11], (1, Ft))).astype(f),
    }
    # NOTE: conv2 / conv22 exist in __init__ but are unused in forward().
    return params


if __name__ == "__main__":
    key = jax.random.PRNGKey(0)
    k_x, k_ea, k_p = jax.random.split(key, 3)

    N = N_SOURCE_NODES
    x = jax.random.uniform(k_x, (N, N_SOURCE_NODES), dtype=jnp.float32)

    # Fully connected directed graph without self-loops.
    ii, jj = jnp.meshgrid(jnp.arange(N), jnp.arange(N), indexing='ij')
    mask = (ii != jj)
    src = ii[mask].astype(jnp.int32)
    tgt = jj[mask].astype(jnp.int32)
    edge_index = jnp.stack([src, tgt], axis=0)                     # [2, E]
    E = edge_index.shape[1]
    edge_attr = jax.random.uniform(k_ea, (E, 1), dtype=jnp.float32)

    params = init_params(k_p)

    use_bf16 = _bf16_message_loop_supported()
    graph_pack = prepare_graph(edge_index, edge_attr, N)   # one-time (static graph)
    wb_pack, rb_pack = prepare_params(params, use_bf16)    # one-time

    # TODO(synk): dropout is implemented as eval-mode identity (training=False);
    # training-mode dropout/BN-batch-stats are not reproduced here.
    out = generator_forward(x, graph_pack, wb_pack, rb_pack)
    out = jax.block_until_ready(out)

    assert out.shape == (N_TARGET_NODES, N_TARGET_NODES)
    assert bool(jnp.all(jnp.isfinite(out)))
    print("KERNEL_OK")
</pallas_src>

<mosaic_0001>
module attributes {stable_mosaic.version = 11 : i64} {
  func.func @_generator_kernel(%arg0: memref<16x16xf32, #tpu.memory_space<vmem>>, %arg1: memref<33x256xf32, #tpu.memory_space<vmem>>, %arg2: memref<32x32x2xf32, #tpu.memory_space<vmem>>, %arg3: memref<2x19x32xf32, #tpu.memory_space<vmem>>, %arg4: memref<32x32xf32, #tpu.memory_space<vmem>>, %arg5: memref<16x256xf32, #tpu.memory_space<vmem>>) attributes {dimension_semantics = [], scalar_prefetch = 0 : i64, scratch_operands = 1 : i64, tpu.core_type = #tpu.core_type<tc>} {
    %c0 = arith.constant 0 : index
    %c0_0 = arith.constant 0 : index
    %0 = vector.load %arg0[%c0, %c0_0] : memref<16x16xf32, #tpu.memory_space<vmem>>, vector<16x16xf32>
    %c0_1 = arith.constant 0 : index
    %c0_2 = arith.constant 0 : index
    %1 = vector.load %arg1[%c0_1, %c0_2] : memref<33x256xf32, #tpu.memory_space<vmem>>, vector<16x256xf32>
    %c16 = arith.constant 16 : index
    %c0_3 = arith.constant 0 : index
    %2 = vector.load %arg1[%c16, %c0_3] : memref<33x256xf32, #tpu.memory_space<vmem>>, vector<16x256xf32>
    %c32 = arith.constant 32 : index
    %c0_4 = arith.constant 0 : index
    %3 = vector.load %arg1[%c32, %c0_4] : memref<33x256xf32, #tpu.memory_space<vmem>>, vector<1x256xf32>
    %cst = arith.constant dense<0.000000e+00> : vector<16x256xf32>
    %4 = tpu.matmul %0, %1, %cst {dimension_numbers = #tpu.dot_dimension_numbers<[0], [0], [1], [1], [0, 1, 1, 1], [], []>} : vector<16x16xf32>, vector<16x256xf32>, vector<16x256xf32> -> vector<16x256xf32>
    %c0_5 = arith.constant 0 : index
    %c0_6 = arith.constant 0 : index
    %5 = vector.load %arg5[%c0_5, %c0_6] : memref<16x256xf32, #tpu.memory_space<vmem>>, vector<16x256xf32>
    tpu.vector_store %arg5[%c0_5, %c0_6], %4 {strides = array<i32>} : memref<16x256xf32, #tpu.memory_space<vmem>>, vector<16x256xf32>,
    %6 = vector.shape_cast %3 : vector<1x256xf32> to vector<1x256xf32>
    %7 = vector.broadcast %6 : vector<1x256xf32> to vector<16x256xf32>
    %c0_7 = arith.constant 0 : index
    %c0_8 = arith.constant 0 : index
    %c0_9 = arith.constant 0 : index
    %8 = vector.load %arg2[%c0_7, %c0_8, %c0_9] : memref<32x32x2xf32, #tpu.memory_space<vmem>>, vector<1x32x2xf32>
    %9 = vector.shape_cast %8 : vector<1x32x2xf32> to vector<32x2xf32>
    %10 = vector.extract_strided_slice %9 {offsets = [0, 0], sizes = [16, 1], strides = [1, 1]} : vector<32x2xf32> to vector<16x1xf32>
    %11 = vector.extract_strided_slice %9 {offsets = [0, 1], sizes = [16, 1], strides = [1, 1]} : vector<32x2xf32> to vector<16x1xf32>
    %12 = vector.broadcast %10 : vector<16x1xf32> to vector<16x256xf32>
    %13 = arith.mulf %7, %12 : vector<16x256xf32>
    %14 = vector.broadcast %11 : vector<16x1xf32> to vector<16x256xf32>
    %15 = arith.addf %13, %14 : vector<16x256xf32>
    %cst_10 = arith.constant 0.000000e+00 : f32
    %16 = vector.broadcast %cst_10 : f32 to vector<16x256xf32>
    %17 = arith.maximumf %15, %16 : vector<16x256xf32>
    %c0_11 = arith.constant 0 : index
    %c0_12 = arith.constant 0 : index
    %18 = vector.load %arg5[%c0_11, %c0_12] : memref<16x256xf32, #tpu.memory_space<vmem>>, vector<1x256xf32>
    %19 = vector.broadcast %18 : vector<1x256xf32> to vector<16x256xf32>
    %20 = arith.mulf %19, %17 : vector<16x256xf32>
    %c1_i32 = arith.constant 1 : i32
    %c0_i32 = arith.constant 0 : i32
    %21 = arith.addi %c0_i32, %c1_i32 : i32
    %22 = arith.index_cast %21 : i32 to index
    %c0_13 = arith.constant 0 : index
    %c0_14 = arith.constant 0 : index
    %23 = vector.load %arg2[%22, %c0_13, %c0_14] : memref<32x32x2xf32, #tpu.memory_space<vmem>>, vector<1x32x2xf32>
    %24 = vector.shape_cast %23 : vector<1x32x2xf32> to vector<32x2xf32>
    %25 = vector.extract_strided_slice %24 {offsets = [0, 0], sizes = [16, 1], strides = [1, 1]} : vector<32x2xf32> to vector<16x1xf32>
    %26 = vector.extract_strided_slice %24 {offsets = [0, 1], sizes = [16, 1], strides = [1, 1]} : vector<32x2xf32> to vector<16x1xf32>
    %27 = vector.broadcast %25 : vector<16x1xf32> to vector<16x256xf32>
    %28 = arith.mulf %7, %27 : vector<16x256xf32>
    %29 = vector.broadcast %26 : vector<16x1xf32> to vector<16x256xf32>
    %30 = arith.addf %28, %29 : vector<16x256xf32>
    %cst_15 = arith.constant 0.000000e+00 : f32
    %31 = vector.broadcast %cst_15 : f32 to vector<16x256xf32>
    %32 = arith.maximumf %30, %31 : vector<16x256xf32>
    %33 = arith.index_cast %c1_i32 : i32 to index
    %c0_16 = arith.constant 0 : index
    %34 = vector.load %arg5[%33, %c0_16] : memref<16x256xf32, #tpu.memory_space<vmem>>, vector<1x256xf32>
    %35 = vector.broadcast %34 : vector<1x256xf32> to vector<16x256xf32>
    %36 = arith.mulf %35, %32 : vector<16x256xf32>
    %37 = arith.addf %20, %36 : vector<16x256xf32>
    %c2_i32 = arith.constant 2 : i32
    %c0_i32_17 = arith.constant 0 : i32
    %38 = arith.addi %c0_i32_17, %c2_i32 : i32
    %39 = arith.index_cast %38 : i32 to index
    %c0_18 = arith.constant 0 : index
    %c0_19 = arith.constant 0 : index
    %40 = vector.load %arg2[%39, %c0_18, %c0_19] : memref<32x32x2xf32, #tpu.memory_space<vmem>>, vector<1x32x2xf32>
    %41 = vector.shape_cast %40 : vector<1x32x2xf32> to vector<32x2xf32>
    %42 = vector.extract_strided_slice %41 {offsets = [0, 0], sizes = [16, 1], strides = [1, 1]} : vector<32x2xf32> to vector<16x1xf32>
    %43 = vector.extract_strided_slice %41 {offsets = [0, 1], sizes = [16, 1], strides = [1, 1]} : vector<32x2xf32> to vector<16x1xf32>
    %44 = vector.broadcast %42 : vector<16x1xf32> to vector<16x256xf32>
    %45 = arith.mulf %7, %44 : vector<16x256xf32>
    %46 = vector.broadcast %43 : vector<16x1xf32> to vector<16x256xf32>
    %47 = arith.addf %45, %46 : vector<16x256xf32>
    %cst_20 = arith.constant 0.000000e+00 : f32
    %48 = vector.broadcast %cst_20 : f32 to vector<16x256xf32>
    %49 = arith.maximumf %47, %48 : vector<16x256xf32>
    %50 = arith.index_cast %c2_i32 : i32 to index
    %c0_21 = arith.constant 0 : index
    %51 = vector.load %arg5[%50, %c0_21] : memref<16x256xf32, #tpu.memory_space<vmem>>, vector<1x256xf32>
    %52 = vector.broadcast %51 : vector<1x256xf32> to vector<16x256xf32>
    %53 = arith.mulf %52, %49 : vector<16x256xf32>
    %54 = arith.addf %37, %53 : vector<16x256xf32>
    %c3_i32 = arith.constant 3 : i32
    %c0_i32_22 = arith.constant 0 : i32
    %55 = arith.addi %c0_i32_22, %c3_i32 : i32
    %56 = arith.index_cast %55 : i32 to index
    %c0_23 = arith.constant 0 : index
    %c0_24 = arith.constant 0 : index
    %57 = vector.load %arg2[%56, %c0_23, %c0_24] : memref<32x32x2xf32, #tpu.memory_space<vmem>>, vector<1x32x2xf32>
    %58 = vector.shape_cast %57 : vector<1x32x2xf32> to vector<32x2xf32>
    %59 = vector.extract_strided_slice %58 {offsets = [0, 0], sizes = [16, 1], strides = [1, 1]} : vector<32x2xf32> to vector<16x1xf32>
    %60 = vector.extract_strided_slice %58 {offsets = [0, 1], sizes = [16, 1], strides = [1, 1]} : vector<32x2xf32> to vector<16x1xf32>
    %61 = vector.broadcast %59 : vector<16x1xf32> to vector<16x256xf32>
    %62 = arith.mulf %7, %61 : vector<16x256xf32>
    %63 = vector.broadcast %60 : vector<16x1xf32> to vector<16x256xf32>
    %64 = arith.addf %62, %63 : vector<16x256xf32>
    %cst_25 = arith.constant 0.000000e+00 : f32
    %65 = vector.broadcast %cst_25 : f32 to vector<16x256xf32>
    %66 = arith.maximumf %64, %65 : vector<16x256xf32>
    %67 = arith.index_cast %c3_i32 : i32 to index
    %c0_26 = arith.constant 0 : index
    %68 = vector.load %arg5[%67, %c0_26] : memref<16x256xf32, #tpu.memory_space<vmem>>, vector<1x256xf32>
    %69 = vector.broadcast %68 : vector<1x256xf32> to vector<16x256xf32>
    %70 = arith.mulf %69, %66 : vector<16x256xf32>
    %71 = arith.addf %54, %70 : vector<16x256xf32>
    %c4_i32 = arith.constant 4 : i32
    %c0_i32_27 = arith.constant 0 : i32
    %72 = arith.addi %c0_i32_27, %c4_i32 : i32
    %73 = arith.index_cast %72 : i32 to index
    %c0_28 = arith.constant 0 : index
    %c0_29 = arith.constant 0 : index
    %74 = vector.load %arg2[%73, %c0_28, %c0_29] : memref<32x32x2xf32, #tpu.memory_space<vmem>>, vector<1x32x2xf32>
    %75 = vector.shape_cast %74 : vector<1x32x2xf32> to vector<32x2xf32>
    %76 = vector.extract_strided_slice %75 {offsets = [0, 0], sizes = [16, 1], strides = [1, 1]} : vector<32x2xf32> to vector<16x1xf32>
    %77 = vector.extract_strided_slice %75 {offsets = [0, 1], sizes = [16, 1], strides = [1, 1]} : vector<32x2xf32> to vector<16x1xf32>
    %78 = vector.broadcast %76 : vector<16x1xf32> to vector<16x256xf32>
    %79 = arith.mulf %7, %78 : vector<16x256xf32>
    %80 = vector.broadcast %77 : vector<16x1xf32> to vector<16x256xf32>
    %81 = arith.addf %79, %80 : vector<16x256xf32>
    %cst_30 = arith.constant 0.000000e+00 : f32
    %82 = vector.broadcast %cst_30 : f32 to vector<16x256xf32>
    %83 = arith.maximumf %81, %82 : vector<16x256xf32>
    %84 = arith.index_cast %c4_i32 : i32 to index
    %c0_31 = arith.constant 0 : index
    %85 = vector.load %arg5[%84, %c0_31] : memref<16x256xf32, #tpu.memory_space<vmem>>, vector<1x256xf32>
    %86 = vector.broadcast %85 : vector<1x256xf32> to vector<16x256xf32>
    %87 = arith.mulf %86, %83 : vector<16x256xf32>
    %88 = arith.addf %71, %87 : vector<16x256xf32>
    %c5_i32 = arith.constant 5 : i32
    %c0_i32_32 = arith.constant 0 : i32
    %89 = arith.addi %c0_i32_32, %c5_i32 : i32
    %90 = arith.index_cast %89 : i32 to index
    %c0_33 = arith.constant 0 : index
    %c0_34 = arith.constant 0 : index
    %91 = vector.load %arg2[%90, %c0_33, %c0_34] : memref<32x32x2xf32, #tpu.memory_space<vmem>>, vector<1x32x2xf32>
    %92 = vector.shape_cast %91 : vector<1x32x2xf32> to vector<32x2xf32>
    %93 = vector.extract_strided_slice %92 {offsets = [0, 0], sizes = [16, 1], strides = [1, 1]} : vector<32x2xf32> to vector<16x1xf32>
    %94 = vector.extract_strided_slice %92 {offsets = [0, 1], sizes = [16, 1], strides = [1, 1]} : vector<32x2xf32> to vector<16x1xf32>
    %95 = vector.broadcast %93 : vector<16x1xf32> to vector<16x256xf32>
    %96 = arith.mulf %7, %95 : vector<16x256xf32>
    %97 = vector.broadcast %94 : vector<16x1xf32> to vector<16x256xf32>
    %98 = arith.addf %96, %97 : vector<16x256xf32>
    %cst_35 = arith.constant 0.000000e+00 : f32
    %99 = vector.broadcast %cst_35 : f32 to vector<16x256xf32>
    %100 = arith.maximumf %98, %99 : vector<16x256xf32>
    %101 = arith.index_cast %c5_i32 : i32 to index
    %c0_36 = arith.constant 0 : index
    %102 = vector.load %arg5[%101, %c0_36] : memref<16x256xf32, #tpu.memory_space<vmem>>, vector<1x256xf32>
    %103 = vector.broadcast %102 : vector<1x256xf32> to vector<16x256xf32>
    %104 = arith.mulf %103, %100 : vector<16x256xf32>
    %105 = arith.addf %88, %104 : vector<16x256xf32>
    %c6_i32 = arith.constant 6 : i32
    %c0_i32_37 = arith.constant 0 : i32
    %106 = arith.addi %c0_i32_37, %c6_i32 : i32
    %107 = arith.index_cast %106 : i32 to index
    %c0_38 = arith.constant 0 : index
    %c0_39 = arith.constant 0 : index
    %108 = vector.load %arg2[%107, %c0_38, %c0_39] : memref<32x32x2xf32, #tpu.memory_space<vmem>>, vector<1x32x2xf32>
    %109 = vector.shape_cast %108 : vector<1x32x2xf32> to vector<32x2xf32>
    %110 = vector.extract_strided_slice %109 {offsets = [0, 0], sizes = [16, 1], strides = [1, 1]} : vector<32x2xf32> to vector<16x1xf32>
    %111 = vector.extract_strided_slice %109 {offsets = [0, 1], sizes = [16, 1], strides = [1, 1]} : vector<32x2xf32> to vector<16x1xf32>
    %112 = vector.broadcast %110 : vector<16x1xf32> to vector<16x256xf32>
    %113 = arith.mulf %7, %112 : vector<16x256xf32>
    %114 = vector.broadcast %111 : vector<16x1xf32> to vector<16x256xf32>
    %115 = arith.addf %113, %114 : vector<16x256xf32>
    %cst_40 = arith.constant 0.000000e+00 : f32
    %116 = vector.broadcast %cst_40 : f32 to vector<16x256xf32>
    %117 = arith.maximumf %115, %116 : vector<16x256xf32>
    %118 = arith.index_cast %c6_i32 : i32 to index
    %c0_41 = arith.constant 0 : index
    %119 = vector.load %arg5[%118, %c0_41] : memref<16x256xf32, #tpu.memory_space<vmem>>, vector<1x256xf32>
    %120 = vector.broadcast %119 : vector<1x256xf32> to vector<16x256xf32>
    %121 = arith.mulf %120, %117 : vector<16x256xf32>
    %122 = arith.addf %105, %121 : vector<16x256xf32>
    %c7_i32 = arith.constant 7 : i32
    %c0_i32_42 = arith.constant 0 : i32
    %123 = arith.addi %c0_i32_42, %c7_i32 : i32
    %124 = arith.index_cast %123 : i32 to index
    %c0_43 = arith.constant 0 : index
    %c0_44 = arith.constant 0 : index
    %125 = vector.load %arg2[%124, %c0_43, %c0_44] : memref<32x32x2xf32, #tpu.memory_space<vmem>>, vector<1x32x2xf32>
    %126 = vector.shape_cast %125 : vector<1x32x2xf32> to vector<32x2xf32>
    %127 = vector.extract_strided_slice %126 {offsets = [0, 0], sizes = [16, 1], strides = [1, 1]} : vector<32x2xf32> to vector<16x1xf32>
    %128 = vector.extract_strided_slice %126 {offsets = [0, 1], sizes = [16, 1], strides = [1, 1]} : vector<32x2xf32> to vector<16x1xf32>
    %129 = vector.broadcast %127 : vector<16x1xf32> to vector<16x256xf32>
    %130 = arith.mulf %7, %129 : vector<16x256xf32>
    %131 = vector.broadcast %128 : vector<16x1xf32> to vector<16x256xf32>
    %132 = arith.addf %130, %131 : vector<16x256xf32>
    %cst_45 = arith.constant 0.000000e+00 : f32
    %133 = vector.broadcast %cst_45 : f32 to vector<16x256xf32>
    %134 = arith.maximumf %132, %133 : vector<16x256xf32>
    %135 = arith.index_cast %c7_i32 : i32 to index
    %c0_46 = arith.constant 0 : index
    %136 = vector.load %arg5[%135, %c0_46] : memref<16x256xf32, #tpu.memory_space<vmem>>, vector<1x256xf32>
    %137 = vector.broadcast %136 : vector<1x256xf32> to vector<16x256xf32>
    %138 = arith.mulf %137, %134 : vector<16x256xf32>
    %139 = arith.addf %122, %138 : vector<16x256xf32>
    %c8_i32 = arith.constant 8 : i32
    %c0_i32_47 = arith.constant 0 : i32
    %140 = arith.addi %c0_i32_47, %c8_i32 : i32
    %141 = arith.index_cast %140 : i32 to index
    %c0_48 = arith.constant 0 : index
    %c0_49 = arith.constant 0 : index
    %142 = vector.load %arg2[%141, %c0_48, %c0_49] : memref<32x32x2xf32, #tpu.memory_space<vmem>>, vector<1x32x2xf32>
    %143 = vector.shape_cast %142 : vector<1x32x2xf32> to vector<32x2xf32>
    %144 = vector.extract_strided_slice %143 {offsets = [0, 0], sizes = [16, 1], strides = [1, 1]} : vector<32x2xf32> to vector<16x1xf32>
    %145 = vector.extract_strided_slice %143 {offsets = [0, 1], sizes = [16, 1], strides = [1, 1]} : vector<32x2xf32> to vector<16x1xf32>
    %146 = vector.broadcast %144 : vector<16x1xf32> to vector<16x256xf32>
    %147 = arith.mulf %7, %146 : vector<16x256xf32>
    %148 = vector.broadcast %145 : vector<16x1xf32> to vector<16x256xf32>
    %149 = arith.addf %147, %148 : vector<16x256xf32>
    %cst_50 = arith.constant 0.000000e+00 : f32
    %150 = vector.broadcast %cst_50 : f32 to vector<16x256xf32>
    %151 = arith.maximumf %149, %150 : vector<16x256xf32>
    %152 = arith.index_cast %c8_i32 : i32 to index
    %c0_51 = arith.constant 0 : index
    %153 = vector.load %arg5[%152, %c0_51] : memref<16x256xf32, #tpu.memory_space<vmem>>, vector<1x256xf32>
    %154 = vector.broadcast %153 : vector<1x256xf32> to vector<16x256xf32>
    %155 = arith.mulf %154, %151 : vector<16x256xf32>
    %156 = arith.addf %139, %155 : vector<16x256xf32>
    %c9_i32 = arith.constant 9 : i32
    %c0_i32_52 = arith.constant 0 : i32
    %157 = arith.addi %c0_i32_52, %c9_i32 : i32
    %158 = arith.index_cast %157 : i32 to index
    %c0_53 = arith.constant 0 : index
    %c0_54 = arith.constant 0 : index
    %159 = vector.load %arg2[%158, %c0_53, %c0_54] : memref<32x32x2xf32, #tpu.memory_space<vmem>>, vector<1x32x2xf32>
    %160 = vector.shape_cast %159 : vector<1x32x2xf32> to vector<32x2xf32>
    %161 = vector.extract_strided_slice %160 {offsets = [0, 0], sizes = [16, 1], strides = [1, 1]} : vector<32x2xf32> to vector<16x1xf32>
    %162 = vector.extract_strided_slice %160 {offsets = [0, 1], sizes = [16, 1], strides = [1, 1]} : vector<32x2xf32> to vector<16x1xf32>
    %163 = vector.broadcast %161 : vector<16x1xf32> to vector<16x256xf32>
    %164 = arith.mulf %7, %163 : vector<16x256xf32>
    %165 = vector.broadcast %162 : vector<16x1xf32> to vector<16x256xf32>
    %166 = arith.addf %164, %165 : vector<16x256xf32>
    %cst_55 = arith.constant 0.000000e+00 : f32
    %167 = vector.broadcast %cst_55 : f32 to vector<16x256xf32>
    %168 = arith.maximumf %166, %167 : vector<16x256xf32>
    %169 = arith.index_cast %c9_i32 : i32 to index
    %c0_56 = arith.constant 0 : index
    %170 = vector.load %arg5[%169, %c0_56] : memref<16x256xf32, #tpu.memory_space<vmem>>, vector<1x256xf32>
    %171 = vector.broadcast %170 : vector<1x256xf32> to vector<16x256xf32>
    %172 = arith.mulf %171, %168 : vector<16x256xf32>
    %173 = arith.addf %156, %172 : vector<16x256xf32>
    %c10_i32 = arith.constant 10 : i32
    %c0_i32_57 = arith.constant 0 : i32
    %174 = arith.addi %c0_i32_57, %c10_i32 : i32
    %175 = arith.index_cast %174 : i32 to index
    %c0_58 = arith.constant 0 : index
    %c0_59 = arith.constant 0 : index
    %176 = vector.load %arg2[%175, %c0_58, %c0_59] : memref<32x32x2xf32, #tpu.memory_space<vmem>>, vector<1x32x2xf32>
    %177 = vector.shape_cast %176 : vector<1x32x2xf32> to vector<32x2xf32>
    %178 = vector.extract_strided_slice %177 {offsets = [0, 0], sizes = [16, 1], strides = [1, 1]} : vector<32x2xf32> to vector<16x1xf32>
    %179 = vector.extract_strided_slice %177 {offsets = [0, 1], sizes = [16, 1], strides = [1, 1]} : vector<32x2xf32> to vector<16x1xf32>
    %180 = vector.broadcast %178 : vector<16x1xf32> to vector<16x256xf32>
    %181 = arith.mulf %7, %180 : vector<16x256xf32>
    %182 = vector.broadcast %179 : vector<16x1xf32> to vector<16x256xf32>
    %183 = arith.addf %181, %182 : vector<16x256xf32>
    %cst_60 = arith.constant 0.000000e+00 : f32
    %184 = vector.broadcast %cst_60 : f32 to vector<16x256xf32>
    %185 = arith.maximumf %183, %184 : vector<16x256xf32>
    %186 = arith.index_cast %c10_i32 : i32 to index
    %c0_61 = arith.constant 0 : index
    %187 = vector.load %arg5[%186, %c0_61] : memref<16x256xf32, #tpu.memory_space<vmem>>, vector<1x256xf32>
    %188 = vector.broadcast %187 : vector<1x256xf32> to vector<16x256xf32>
    %189 = arith.mulf %188, %185 : vector<16x256xf32>
    %190 = arith.addf %173, %189 : vector<16x256xf32>
    %c11_i32 = arith.constant 11 : i32
    %c0_i32_62 = arith.constant 0 : i32
    %191 = arith.addi %c0_i32_62, %c11_i32 : i32
    %192 = arith.index_cast %191 : i32 to index
    %c0_63 = arith.constant 0 : index
    %c0_64 = arith.constant 0 : index
    %193 = vector.load %arg2[%192, %c0_63, %c0_64] : memref<32x32x2xf32, #tpu.memory_space<vmem>>, vector<1x32x2xf32>
    %194 = vector.shape_cast %193 : vector<1x32x2xf32> to vector<32x2xf32>
    %195 = vector.extract_strided_slice %194 {offsets = [0, 0], sizes = [16, 1], strides = [1, 1]} : vector<32x2xf32> to vector<16x1xf32>
    %196 = vector.extract_strided_slice %194 {offsets = [0, 1], sizes = [16, 1], strides = [1, 1]} : vector<32x2xf32> to vector<16x1xf32>
    %197 = vector.broadcast %195 : vector<16x1xf32> to vector<16x256xf32>
    %198 = arith.mulf %7, %197 : vector<16x256xf32>
    %199 = vector.broadcast %196 : vector<16x1xf32> to vector<16x256xf32>
    %200 = arith.addf %198, %199 : vector<16x256xf32>
    %cst_65 = arith.constant 0.000000e+00 : f32
    %201 = vector.broadcast %cst_65 : f32 to vector<16x256xf32>
    %202 = arith.maximumf %200, %201 : vector<16x256xf32>
    %203 = arith.index_cast %c11_i32 : i32 to index
    %c0_66 = arith.constant 0 : index
    %204 = vector.load %arg5[%203, %c0_66] : memref<16x256xf32, #tpu.memory_space<vmem>>, vector<1x256xf32>
    %205 = vector.broadcast %204 : vector<1x256xf32> to vector<16x256xf32>
    %206 = arith.mulf %205, %202 : vector<16x256xf32>
    %207 = arith.addf %190, %206 : vector<16x256xf32>
    %c12_i32 = arith.constant 12 : i32
    %c0_i32_67 = arith.constant 0 : i32
    %208 = arith.addi %c0_i32_67, %c12_i32 : i32
    %209 = arith.index_cast %208 : i32 to index
    %c0_68 = arith.constant 0 : index
    %c0_69 = arith.constant 0 : index
    %210 = vector.load %arg2[%209, %c0_68, %c0_69] : memref<32x32x2xf32, #tpu.memory_space<vmem>>, vector<1x32x2xf32>
    %211 = vector.shape_cast %210 : vector<1x32x2xf32> to vector<32x2xf32>
    %212 = vector.extract_strided_slice %211 {offsets = [0, 0], sizes = [16, 1], strides = [1, 1]} : vector<32x2xf32> to vector<16x1xf32>
    %213 = vector.extract_strided_slice %211 {offsets = [0, 1], sizes = [16, 1], strides = [1, 1]} : vector<32x2xf32> to vector<16x1xf32>
    %214 = vector.broadcast %212 : vector<16x1xf32> to vector<16x256xf32>
    %215 = arith.mulf %7, %214 : vector<16x256xf32>
    %216 = vector.broadcast %213 : vector<16x1xf32> to vector<16x256xf32>
    %217 = arith.addf %215, %216 : vector<16x256xf32>
    %cst_70 = arith.constant 0.000000e+00 : f32
    %218 = vector.broadcast %cst_70 : f32 to vector<16x256xf32>
    %219 = arith.maximumf %217, %218 : vector<16x256xf32>
    %220 = arith.index_cast %c12_i32 : i32 to index
    %c0_71 = arith.constant 0 : index
    %221 = vector.load %arg5[%220, %c0_71] : memref<16x256xf32, #tpu.memory_space<vmem>>, vector<1x256xf32>
    %222 = vector.broadcast %221 : vector<1x256xf32> to vector<16x256xf32>
    %223 = arith.mulf %222, %219 : vector<16x256xf32>
    %224 = arith.addf %207, %223 : vector<16x256xf32>
    %c13_i32 = arith.constant 13 : i32
    %c0_i32_72 = arith.constant 0 : i32
    %225 = arith.addi %c0_i32_72, %c13_i32 : i32
    %226 = arith.index_cast %225 : i32 to index
    %c0_73 = arith.constant 0 : index
    %c0_74 = arith.constant 0 : index
    %227 = vector.load %arg2[%226, %c0_73, %c0_74] : memref<32x32x2xf32, #tpu.memory_space<vmem>>, vector<1x32x2xf32>
    %228 = vector.shape_cast %227 : vector<1x32x2xf32> to vector<32x2xf32>
    %229 = vector.extract_strided_slice %228 {offsets = [0, 0], sizes = [16, 1], strides = [1, 1]} : vector<32x2xf32> to vector<16x1xf32>
    %230 = vector.extract_strided_slice %228 {offsets = [0, 1], sizes = [16, 1], strides = [1, 1]} : vector<32x2xf32> to vector<16x1xf32>
    %231 = vector.broadcast %229 : vector<16x1xf32> to vector<16x256xf32>
    %232 = arith.mulf %7, %231 : vector<16x256xf32>
    %233 = vector.broadcast %230 : vector<16x1xf32> to vector<16x256xf32>
    %234 = arith.addf %232, %233 : vector<16x256xf32>
    %cst_75 = arith.constant 0.000000e+00 : f32
    %235 = vector.broadcast %cst_75 : f32 to vector<16x256xf32>
    %236 = arith.maximumf %234, %235 : vector<16x256xf32>
    %237 = arith.index_cast %c13_i32 : i32 to index
    %c0_76 = arith.constant 0 : index
    %238 = vector.load %arg5[%237, %c0_76] : memref<16x256xf32, #tpu.memory_space<vmem>>, vector<1x256xf32>
    %239 = vector.broadcast %238 : vector<1x256xf32> to vector<16x256xf32>
    %240 = arith.mulf %239, %236 : vector<16x256xf32>
    %241 = arith.addf %224, %240 : vector<16x256xf32>
    %c14_i32 = arith.constant 14 : i32
    %c0_i32_77 = arith.constant 0 : i32
    %242 = arith.addi %c0_i32_77, %c14_i32 : i32
    %243 = arith.index_cast %242 : i32 to index
    %c0_78 = arith.constant 0 : index
    %c0_79 = arith.constant 0 : index
    %244 = vector.load %arg2[%243, %c0_78, %c0_79] : memref<32x32x2xf32, #tpu.memory_space<vmem>>, vector<1x32x2xf32>
    %245 = vector.shape_cast %244 : vector<1x32x2xf32> to vector<32x2xf32>
    %246 = vector.extract_strided_slice %245 {offsets = [0, 0], sizes = [16, 1], strides = [1, 1]} : vector<32x2xf32> to vector<16x1xf32>
    %247 = vector.extract_strided_slice %245 {offsets = [0, 1], sizes = [16, 1], strides = [1, 1]} : vector<32x2xf32> to vector<16x1xf32>
    %248 = vector.broadcast %246 : vector<16x1xf32> to vector<16x256xf32>
    %249 = arith.mulf %7, %248 : vector<16x256xf32>
    %250 = vector.broadcast %247 : vector<16x1xf32> to vector<16x256xf32>
    %251 = arith.addf %249, %250 : vector<16x256xf32>
    %cst_80 = arith.constant 0.000000e+00 : f32
    %252 = vector.broadcast %cst_80 : f32 to vector<16x256xf32>
    %253 = arith.maximumf %251, %252 : vector<16x256xf32>
    %254 = arith.index_cast %c14_i32 : i32 to index
    %c0_81 = arith.constant 0 : index
    %255 = vector.load %arg5[%254, %c0_81] : memref<16x256xf32, #tpu.memory_space<vmem>>, vector<1x256xf32>
    %256 = vector.broadcast %255 : vector<1x256xf32> to vector<16x256xf32>
    %257 = arith.mulf %256, %253 : vector<16x256xf32>
    %258 = arith.addf %241, %257 : vector<16x256xf32>
    %c15_i32 = arith.constant 15 : i32
    %c0_i32_82 = arith.constant 0 : i32
    %259 = arith.addi %c0_i32_82, %c15_i32 : i32
    %260 = arith.index_cast %259 : i32 to index
    %c0_83 = arith.constant 0 : index
    %c0_84 = arith.constant 0 : index
    %261 = vector.load %arg2[%260, %c0_83, %c0_84] : memref<32x32x2xf32, #tpu.memory_space<vmem>>, vector<1x32x2xf32>
    %262 = vector.shape_cast %261 : vector<1x32x2xf32> to vector<32x2xf32>
    %263 = vector.extract_strided_slice %262 {offsets = [0, 0], sizes = [16, 1], strides = [1, 1]} : vector<32x2xf32> to vector<16x1xf32>
    %264 = vector.extract_strided_slice %262 {offsets = [0, 1], sizes = [16, 1], strides = [1, 1]} : vector<32x2xf32> to vector<16x1xf32>
    %265 = vector.broadcast %263 : vector<16x1xf32> to vector<16x256xf32>
    %266 = arith.mulf %7, %265 : vector<16x256xf32>
    %267 = vector.broadcast %264 : vector<16x1xf32> to vector<16x256xf32>
    %268 = arith.addf %266, %267 : vector<16x256xf32>
    %cst_85 = arith.constant 0.000000e+00 : f32
    %269 = vector.broadcast %cst_85 : f32 to vector<16x256xf32>
    %270 = arith.maximumf %268, %269 : vector<16x256xf32>
    %271 = arith.index_cast %c15_i32 : i32 to index
    %c0_86 = arith.constant 0 : index
    %272 = vector.load %arg5[%271, %c0_86] : memref<16x256xf32, #tpu.memory_space<vmem>>, vector<1x256xf32>
    %273 = vector.broadcast %272 : vector<1x256xf32> to vector<16x256xf32>
    %274 = arith.mulf %273, %270 : vector<16x256xf32>
    %275 = arith.addf %258, %274 : vector<16x256xf32>
    %c15_i32_87 = arith.constant 15 : i32
    %cst_88 = arith.constant dense<0.000000e+00> : vector<16x16xf32>
    %276 = tpu.matmul %2, %275, %cst_88 {dimension_numbers = #tpu.dot_dimension_numbers<[1], [1], [0], [0], [0, 0, 1, 0], [], []>} : vector<16x256xf32>, vector<16x256xf32>, vector<16x16xf32> -> vector<16x16xf32>
    %c0_89 = arith.constant 0 : index
    %c0_90 = arith.constant 0 : index
    %c0_91 = arith.constant 0 : index
    %277 = vector.load %arg3[%c0_89, %c0_90, %c0_91] : memref<2x19x32xf32, #tpu.memory_space<vmem>>, vector<1x19x32xf32>
    %278 = vector.shape_cast %277 : vector<1x19x32xf32> to vector<19x32xf32>
    %279 = vector.extract_strided_slice %278 {offsets = [0, 0], sizes = [16, 16], strides = [1, 1]} : vector<19x32xf32> to vector<16x16xf32>
    %280 = vector.extract_strided_slice %278 {offsets = [16, 0], sizes = [1, 16], strides = [1, 1]} : vector<19x32xf32> to vector<1x16xf32>
    %281 = vector.extract_strided_slice %278 {offsets = [17, 0], sizes = [1, 16], strides = [1, 1]} : vector<19x32xf32> to vector<1x16xf32>
    %282 = vector.extract_strided_slice %278 {offsets = [18, 0], sizes = [1, 16], strides = [1, 1]} : vector<19x32xf32> to vector<1x16xf32>
    %cst_92 = arith.constant dense<0.000000e+00> : vector<16x16xf32>
    %283 = tpu.matmul %0, %279, %cst_92 {dimension_numbers = #tpu.dot_dimension_numbers<[1], [0], [0], [1], [0, 0, 1, 1], [], []>} : vector<16x16xf32>, vector<16x16xf32>, vector<16x16xf32> -> vector<16x16xf32>
    %284 = arith.addf %276, %283 : vector<16x16xf32>
    %285 = vector.broadcast %280 : vector<1x16xf32> to vector<16x16xf32>
    %286 = arith.addf %284, %285 : vector<16x16xf32>
    %287 = vector.broadcast %281 : vector<1x16xf32> to vector<16x16xf32>
    %288 = arith.mulf %286, %287 : vector<16x16xf32>
    %289 = vector.broadcast %282 : vector<1x16xf32> to vector<16x16xf32>
    %290 = arith.addf %288, %289 : vector<16x16xf32>
    %291 = arith.negf %290 : vector<16x16xf32>
    %292 = math.exp %291 : vector<16x16xf32>
    %cst_93 = arith.constant 1.000000e+00 : f32
    %293 = vector.broadcast %cst_93 : f32 to vector<16x16xf32>
    %294 = arith.addf %293, %292 : vector<16x16xf32>
    %295 = arith.divf %293, %294 : vector<16x16xf32>
    %cst_94 = arith.constant dense<0.000000e+00> : vector<16x256xf32>
    %296 = tpu.matmul %295, %1, %cst_94 {dimension_numbers = #tpu.dot_dimension_numbers<[0], [0], [1], [1], [0, 1, 1, 1], [], []>} : vector<16x16xf32>, vector<16x256xf32>, vector<16x256xf32> -> vector<16x256xf32>
    %c0_95 = arith.constant 0 : index
    %c0_96 = arith.constant 0 : index
    %297 = vector.load %arg5[%c0_95, %c0_96] : memref<16x256xf32, #tpu.memory_space<vmem>>, vector<16x256xf32>
    tpu.vector_store %arg5[%c0_95, %c0_96], %296 {strides = array<i32>} : memref<16x256xf32, #tpu.memory_space<vmem>>, vector<16x256xf32>,
    %298 = vector.shape_cast %3 : vector<1x256xf32> to vector<1x256xf32>
    %299 = vector.broadcast %298 : vector<1x256xf32> to vector<32x256xf32>
    %c16_97 = arith.constant 16 : index
    %c0_98 = arith.constant 0 : index
    %c0_99 = arith.constant 0 : index
    %300 = vector.load %arg2[%c16_97, %c0_98, %c0_99] : memref<32x32x2xf32, #tpu.memory_space<vmem>>, vector<1x32x2xf32>
    %301 = vector.shape_cast %300 : vector<1x32x2xf32> to vector<32x2xf32>
    %302 = vector.extract_strided_slice %301 {offsets = [0, 0], sizes = [32, 1], strides = [1, 1]} : vector<32x2xf32> to vector<32x1xf32>
    %303 = vector.extract_strided_slice %301 {offsets = [0, 1], sizes = [32, 1], strides = [1, 1]} : vector<32x2xf32> to vector<32x1xf32>
    %304 = vector.broadcast %302 : vector<32x1xf32> to vector<32x256xf32>
    %305 = arith.mulf %299, %304 : vector<32x256xf32>
    %306 = vector.broadcast %303 : vector<32x1xf32> to vector<32x256xf32>
    %307 = arith.addf %305, %306 : vector<32x256xf32>
    %cst_100 = arith.constant 0.000000e+00 : f32
    %308 = vector.broadcast %cst_100 : f32 to vector<32x256xf32>
    %309 = arith.maximumf %307, %308 : vector<32x256xf32>
    %c0_101 = arith.constant 0 : index
    %c0_102 = arith.constant 0 : index
    %310 = vector.load %arg5[%c0_101, %c0_102] : memref<16x256xf32, #tpu.memory_space<vmem>>, vector<1x256xf32>
    %311 = vector.broadcast %310 : vector<1x256xf32> to vector<32x256xf32>
    %312 = arith.mulf %311, %309 : vector<32x256xf32>
    %c1_i32_103 = arith.constant 1 : i32
    %c16_i32 = arith.constant 16 : i32
    %313 = arith.addi %c16_i32, %c1_i32_103 : i32
    %314 = arith.index_cast %313 : i32 to index
    %c0_104 = arith.constant 0 : index
    %c0_105 = arith.constant 0 : index
    %315 = vector.load %arg2[%314, %c0_104, %c0_105] : memref<32x32x2xf32, #tpu.memory_space<vmem>>, vector<1x32x2xf32>
    %316 = vector.shape_cast %315 : vector<1x32x2xf32> to vector<32x2xf32>
    %317 = vector.extract_strided_slice %316 {offsets = [0, 0], sizes = [32, 1], strides = [1, 1]} : vector<32x2xf32> to vector<32x1xf32>
    %318 = vector.extract_strided_slice %316 {offsets = [0, 1], sizes = [32, 1], strides = [1, 1]} : vector<32x2xf32> to vector<32x1xf32>
    %319 = vector.broadcast %317 : vector<32x1xf32> to vector<32x256xf32>
    %320 = arith.mulf %299, %319 : vector<32x256xf32>
    %321 = vector.broadcast %318 : vector<32x1xf32> to vector<32x256xf32>
    %322 = arith.addf %320, %321 : vector<32x256xf32>
    %cst_106 = arith.constant 0.000000e+00 : f32
    %323 = vector.broadcast %cst_106 : f32 to vector<32x256xf32>
    %324 = arith.maximumf %322, %323 : vector<32x256xf32>
    %325 = arith.index_cast %c1_i32_103 : i32 to index
    %c0_107 = arith.constant 0 : index
    %326 = vector.load %arg5[%325, %c0_107] : memref<16x256xf32, #tpu.memory_space<vmem>>, vector<1x256xf32>
    %327 = vector.broadcast %326 : vector<1x256xf32> to vector<32x256xf32>
    %328 = arith.mulf %327, %324 : vector<32x256xf32>
    %329 = arith.addf %312, %328 : vector<32x256xf32>
    %c2_i32_108 = arith.constant 2 : i32
    %c16_i32_109 = arith.constant 16 : i32
    %330 = arith.addi %c16_i32_109, %c2_i32_108 : i32
    %331 = arith.index_cast %330 : i32 to index
    %c0_110 = arith.constant 0 : index
    %c0_111 = arith.constant 0 : index
    %332 = vector.load %arg2[%331, %c0_110, %c0_111] : memref<32x32x2xf32, #tpu.memory_space<vmem>>, vector<1x32x2xf32>
    %333 = vector.shape_cast %332 : vector<1x32x2xf32> to vector<32x2xf32>
    %334 = vector.extract_strided_slice %333 {offsets = [0, 0], sizes = [32, 1], strides = [1, 1]} : vector<32x2xf32> to vector<32x1xf32>
    %335 = vector.extract_strided_slice %333 {offsets = [0, 1], sizes = [32, 1], strides = [1, 1]} : vector<32x2xf32> to vector<32x1xf32>
    %336 = vector.broadcast %334 : vector<32x1xf32> to vector<32x256xf32>
    %337 = arith.mulf %299, %336 : vector<32x256xf32>
    %338 = vector.broadcast %335 : vector<32x1xf32> to vector<32x256xf32>
    %339 = arith.addf %337, %338 : vector<32x256xf32>
    %cst_112 = arith.constant 0.000000e+00 : f32
    %340 = vector.broadcast %cst_112 : f32 to vector<32x256xf32>
    %341 = arith.maximumf %339, %340 : vector<32x256xf32>
    %342 = arith.index_cast %c2_i32_108 : i32 to index
    %c0_113 = arith.constant 0 : index
    %343 = vector.load %arg5[%342, %c0_113] : memref<16x256xf32, #tpu.memory_space<vmem>>, vector<1x256xf32>
    %344 = vector.broadcast %343 : vector<1x256xf32> to vector<32x256xf32>
    %345 = arith.mulf %344, %341 : vector<32x256xf32>
    %346 = arith.addf %329, %345 : vector<32x256xf32>
    %c3_i32_114 = arith.constant 3 : i32
    %c16_i32_115 = arith.constant 16 : i32
    %347 = arith.addi %c16_i32_115, %c3_i32_114 : i32
    %348 = arith.index_cast %347 : i32 to index
    %c0_116 = arith.constant 0 : index
    %c0_117 = arith.constant 0 : index
    %349 = vector.load %arg2[%348, %c0_116, %c0_117] : memref<32x32x2xf32, #tpu.memory_space<vmem>>, vector<1x32x2xf32>
    %350 = vector.shape_cast %349 : vector<1x32x2xf32> to vector<32x2xf32>
    %351 = vector.extract_strided_slice %350 {offsets = [0, 0], sizes = [32, 1], strides = [1, 1]} : vector<32x2xf32> to vector<32x1xf32>
    %352 = vector.extract_strided_slice %350 {offsets = [0, 1], sizes = [32, 1], strides = [1, 1]} : vector<32x2xf32> to vector<32x1xf32>
    %353 = vector.broadcast %351 : vector<32x1xf32> to vector<32x256xf32>
    %354 = arith.mulf %299, %353 : vector<32x256xf32>
    %355 = vector.broadcast %352 : vector<32x1xf32> to vector<32x256xf32>
    %356 = arith.addf %354, %355 : vector<32x256xf32>
    %cst_118 = arith.constant 0.000000e+00 : f32
    %357 = vector.broadcast %cst_118 : f32 to vector<32x256xf32>
    %358 = arith.maximumf %356, %357 : vector<32x256xf32>
    %359 = arith.index_cast %c3_i32_114 : i32 to index
    %c0_119 = arith.constant 0 : index
    %360 = vector.load %arg5[%359, %c0_119] : memref<16x256xf32, #tpu.memory_space<vmem>>, vector<1x256xf32>
    %361 = vector.broadcast %360 : vector<1x256xf32> to vector<32x256xf32>
    %362 = arith.mulf %361, %358 : vector<32x256xf32>
    %363 = arith.addf %346, %362 : vector<32x256xf32>
    %c4_i32_120 = arith.constant 4 : i32
    %c16_i32_121 = arith.constant 16 : i32
    %364 = arith.addi %c16_i32_121, %c4_i32_120 : i32
    %365 = arith.index_cast %364 : i32 to index
    %c0_122 = arith.constant 0 : index
    %c0_123 = arith.constant 0 : index
    %366 = vector.load %arg2[%365, %c0_122, %c0_123] : memref<32x32x2xf32, #tpu.memory_space<vmem>>, vector<1x32x2xf32>
    %367 = vector.shape_cast %366 : vector<1x32x2xf32> to vector<32x2xf32>
    %368 = vector.extract_strided_slice %367 {offsets = [0, 0], sizes = [32, 1], strides = [1, 1]} : vector<32x2xf32> to vector<32x1xf32>
    %369 = vector.extract_strided_slice %367 {offsets = [0, 1], sizes = [32, 1], strides = [1, 1]} : vector<32x2xf32> to vector<32x1xf32>
    %370 = vector.broadcast %368 : vector<32x1xf32> to vector<32x256xf32>
    %371 = arith.mulf %299, %370 : vector<32x256xf32>
    %372 = vector.broadcast %369 : vector<32x1xf32> to vector<32x256xf32>
    %373 = arith.addf %371, %372 : vector<32x256xf32>
    %cst_124 = arith.constant 0.000000e+00 : f32
    %374 = vector.broadcast %cst_124 : f32 to vector<32x256xf32>
    %375 = arith.maximumf %373, %374 : vector<32x256xf32>
    %376 = arith.index_cast %c4_i32_120 : i32 to index
    %c0_125 = arith.constant 0 : index
    %377 = vector.load %arg5[%376, %c0_125] : memref<16x256xf32, #tpu.memory_space<vmem>>, vector<1x256xf32>
    %378 = vector.broadcast %377 : vector<1x256xf32> to vector<32x256xf32>
    %379 = arith.mulf %378, %375 : vector<32x256xf32>
    %380 = arith.addf %363, %379 : vector<32x256xf32>
    %c5_i32_126 = arith.constant 5 : i32
    %c16_i32_127 = arith.constant 16 : i32
    %381 = arith.addi %c16_i32_127, %c5_i32_126 : i32
    %382 = arith.index_cast %381 : i32 to index
    %c0_128 = arith.constant 0 : index
    %c0_129 = arith.constant 0 : index
    %383 = vector.load %arg2[%382, %c0_128, %c0_129] : memref<32x32x2xf32, #tpu.memory_space<vmem>>, vector<1x32x2xf32>
    %384 = vector.shape_cast %383 : vector<1x32x2xf32> to vector<32x2xf32>
    %385 = vector.extract_strided_slice %384 {offsets = [0, 0], sizes = [32, 1], strides = [1, 1]} : vector<32x2xf32> to vector<32x1xf32>
    %386 = vector.extract_strided_slice %384 {offsets = [0, 1], sizes = [32, 1], strides = [1, 1]} : vector<32x2xf32> to vector<32x1xf32>
    %387 = vector.broadcast %385 : vector<32x1xf32> to vector<32x256xf32>
    %388 = arith.mulf %299, %387 : vector<32x256xf32>
    %389 = vector.broadcast %386 : vector<32x1xf32> to vector<32x256xf32>
    %390 = arith.addf %388, %389 : vector<32x256xf32>
    %cst_130 = arith.constant 0.000000e+00 : f32
    %391 = vector.broadcast %cst_130 : f32 to vector<32x256xf32>
    %392 = arith.maximumf %390, %391 : vector<32x256xf32>
    %393 = arith.index_cast %c5_i32_126 : i32 to index
    %c0_131 = arith.constant 0 : index
    %394 = vector.load %arg5[%393, %c0_131] : memref<16x256xf32, #tpu.memory_space<vmem>>, vector<1x256xf32>
    %395 = vector.broadcast %394 : vector<1x256xf32> to vector<32x256xf32>
    %396 = arith.mulf %395, %392 : vector<32x256xf32>
    %397 = arith.addf %380, %396 : vector<32x256xf32>
    %c6_i32_132 = arith.constant 6 : i32
    %c16_i32_133 = arith.constant 16 : i32
    %398 = arith.addi %c16_i32_133, %c6_i32_132 : i32
    %399 = arith.index_cast %398 : i32 to index
    %c0_134 = arith.constant 0 : index
    %c0_135 = arith.constant 0 : index
    %400 = vector.load %arg2[%399, %c0_134, %c0_135] : memref<32x32x2xf32, #tpu.memory_space<vmem>>, vector<1x32x2xf32>
    %401 = vector.shape_cast %400 : vector<1x32x2xf32> to vector<32x2xf32>
    %402 = vector.extract_strided_slice %401 {offsets = [0, 0], sizes = [32, 1], strides = [1, 1]} : vector<32x2xf32> to vector<32x1xf32>
    %403 = vector.extract_strided_slice %401 {offsets = [0, 1], sizes = [32, 1], strides = [1, 1]} : vector<32x2xf32> to vector<32x1xf32>
    %404 = vector.broadcast %402 : vector<32x1xf32> to vector<32x256xf32>
    %405 = arith.mulf %299, %404 : vector<32x256xf32>
    %406 = vector.broadcast %403 : vector<32x1xf32> to vector<32x256xf32>
    %407 = arith.addf %405, %406 : vector<32x256xf32>
    %cst_136 = arith.constant 0.000000e+00 : f32
    %408 = vector.broadcast %cst_136 : f32 to vector<32x256xf32>
    %409 = arith.maximumf %407, %408 : vector<32x256xf32>
    %410 = arith.index_cast %c6_i32_132 : i32 to index
    %c0_137 = arith.constant 0 : index
    %411 = vector.load %arg5[%410, %c0_137] : memref<16x256xf32, #tpu.memory_space<vmem>>, vector<1x256xf32>
    %412 = vector.broadcast %411 : vector<1x256xf32> to vector<32x256xf32>
    %413 = arith.mulf %412, %409 : vector<32x256xf32>
    %414 = arith.addf %397, %413 : vector<32x256xf32>
    %c7_i32_138 = arith.constant 7 : i32
    %c16_i32_139 = arith.constant 16 : i32
    %415 = arith.addi %c16_i32_139, %c7_i32_138 : i32
    %416 = arith.index_cast %415 : i32 to index
    %c0_140 = arith.constant 0 : index
    %c0_141 = arith.constant 0 : index
    %417 = vector.load %arg2[%416, %c0_140, %c0_141] : memref<32x32x2xf32, #tpu.memory_space<vmem>>, vector<1x32x2xf32>
    %418 = vector.shape_cast %417 : vector<1x32x2xf32> to vector<32x2xf32>
    %419 = vector.extract_strided_slice %418 {offsets = [0, 0], sizes = [32, 1], strides = [1, 1]} : vector<32x2xf32> to vector<32x1xf32>
    %420 = vector.extract_strided_slice %418 {offsets = [0, 1], sizes = [32, 1], strides = [1, 1]} : vector<32x2xf32> to vector<32x1xf32>
    %421 = vector.broadcast %419 : vector<32x1xf32> to vector<32x256xf32>
    %422 = arith.mulf %299, %421 : vector<32x256xf32>
    %423 = vector.broadcast %420 : vector<32x1xf32> to vector<32x256xf32>
    %424 = arith.addf %422, %423 : vector<32x256xf32>
    %cst_142 = arith.constant 0.000000e+00 : f32
    %425 = vector.broadcast %cst_142 : f32 to vector<32x256xf32>
    %426 = arith.maximumf %424, %425 : vector<32x256xf32>
    %427 = arith.index_cast %c7_i32_138 : i32 to index
    %c0_143 = arith.constant 0 : index
    %428 = vector.load %arg5[%427, %c0_143] : memref<16x256xf32, #tpu.memory_space<vmem>>, vector<1x256xf32>
    %429 = vector.broadcast %428 : vector<1x256xf32> to vector<32x256xf32>
    %430 = arith.mulf %429, %426 : vector<32x256xf32>
    %431 = arith.addf %414, %430 : vector<32x256xf32>
    %c8_i32_144 = arith.constant 8 : i32
    %c16_i32_145 = arith.constant 16 : i32
    %432 = arith.addi %c16_i32_145, %c8_i32_144 : i32
    %433 = arith.index_cast %432 : i32 to index
    %c0_146 = arith.constant 0 : index
    %c0_147 = arith.constant 0 : index
    %434 = vector.load %arg2[%433, %c0_146, %c0_147] : memref<32x32x2xf32, #tpu.memory_space<vmem>>, vector<1x32x2xf32>
    %435 = vector.shape_cast %434 : vector<1x32x2xf32> to vector<32x2xf32>
    %436 = vector.extract_strided_slice %435 {offsets = [0, 0], sizes = [32, 1], strides = [1, 1]} : vector<32x2xf32> to vector<32x1xf32>
    %437 = vector.extract_strided_slice %435 {offsets = [0, 1], sizes = [32, 1], strides = [1, 1]} : vector<32x2xf32> to vector<32x1xf32>
    %438 = vector.broadcast %436 : vector<32x1xf32> to vector<32x256xf32>
    %439 = arith.mulf %299, %438 : vector<32x256xf32>
    %440 = vector.broadcast %437 : vector<32x1xf32> to vector<32x256xf32>
    %441 = arith.addf %439, %440 : vector<32x256xf32>
    %cst_148 = arith.constant 0.000000e+00 : f32
    %442 = vector.broadcast %cst_148 : f32 to vector<32x256xf32>
    %443 = arith.maximumf %441, %442 : vector<32x256xf32>
    %444 = arith.index_cast %c8_i32_144 : i32 to index
    %c0_149 = arith.constant 0 : index
    %445 = vector.load %arg5[%444, %c0_149] : memref<16x256xf32, #tpu.memory_space<vmem>>, vector<1x256xf32>
    %446 = vector.broadcast %445 : vector<1x256xf32> to vector<32x256xf32>
    %447 = arith.mulf %446, %443 : vector<32x256xf32>
    %448 = arith.addf %431, %447 : vector<32x256xf32>
    %c9_i32_150 = arith.constant 9 : i32
    %c16_i32_151 = arith.constant 16 : i32
    %449 = arith.addi %c16_i32_151, %c9_i32_150 : i32
    %450 = arith.index_cast %449 : i32 to index
    %c0_152 = arith.constant 0 : index
    %c0_153 = arith.constant 0 : index
    %451 = vector.load %arg2[%450, %c0_152, %c0_153] : memref<32x32x2xf32, #tpu.memory_space<vmem>>, vector<1x32x2xf32>
    %452 = vector.shape_cast %451 : vector<1x32x2xf32> to vector<32x2xf32>
    %453 = vector.extract_strided_slice %452 {offsets = [0, 0], sizes = [32, 1], strides = [1, 1]} : vector<32x2xf32> to vector<32x1xf32>
    %454 = vector.extract_strided_slice %452 {offsets = [0, 1], sizes = [32, 1], strides = [1, 1]} : vector<32x2xf32> to vector<32x1xf32>
    %455 = vector.broadcast %453 : vector<32x1xf32> to vector<32x256xf32>
    %456 = arith.mulf %299, %455 : vector<32x256xf32>
    %457 = vector.broadcast %454 : vector<32x1xf32> to vector<32x256xf32>
    %458 = arith.addf %456, %457 : vector<32x256xf32>
    %cst_154 = arith.constant 0.000000e+00 : f32
    %459 = vector.broadcast %cst_154 : f32 to vector<32x256xf32>
    %460 = arith.maximumf %458, %459 : vector<32x256xf32>
    %461 = arith.index_cast %c9_i32_150 : i32 to index
    %c0_155 = arith.constant 0 : index
    %462 = vector.load %arg5[%461, %c0_155] : memref<16x256xf32, #tpu.memory_space<vmem>>, vector<1x256xf32>
    %463 = vector.broadcast %462 : vector<1x256xf32> to vector<32x256xf32>
    %464 = arith.mulf %463, %460 : vector<32x256xf32>
    %465 = arith.addf %448, %464 : vector<32x256xf32>
    %c10_i32_156 = arith.constant 10 : i32
    %c16_i32_157 = arith.constant 16 : i32
    %466 = arith.addi %c16_i32_157, %c10_i32_156 : i32
    %467 = arith.index_cast %466 : i32 to index
    %c0_158 = arith.constant 0 : index
    %c0_159 = arith.constant 0 : index
    %468 = vector.load %arg2[%467, %c0_158, %c0_159] : memref<32x32x2xf32, #tpu.memory_space<vmem>>, vector<1x32x2xf32>
    %469 = vector.shape_cast %468 : vector<1x32x2xf32> to vector<32x2xf32>
    %470 = vector.extract_strided_slice %469 {offsets = [0, 0], sizes = [32, 1], strides = [1, 1]} : vector<32x2xf32> to vector<32x1xf32>
    %471 = vector.extract_strided_slice %469 {offsets = [0, 1], sizes = [32, 1], strides = [1, 1]} : vector<32x2xf32> to vector<32x1xf32>
    %472 = vector.broadcast %470 : vector<32x1xf32> to vector<32x256xf32>
    %473 = arith.mulf %299, %472 : vector<32x256xf32>
    %474 = vector.broadcast %471 : vector<32x1xf32> to vector<32x256xf32>
    %475 = arith.addf %473, %474 : vector<32x256xf32>
    %cst_160 = arith.constant 0.000000e+00 : f32
    %476 = vector.broadcast %cst_160 : f32 to vector<32x256xf32>
    %477 = arith.maximumf %475, %476 : vector<32x256xf32>
    %478 = arith.index_cast %c10_i32_156 : i32 to index
    %c0_161 = arith.constant 0 : index
    %479 = vector.load %arg5[%478, %c0_161] : memref<16x256xf32, #tpu.memory_space<vmem>>, vector<1x256xf32>
    %480 = vector.broadcast %479 : vector<1x256xf32> to vector<32x256xf32>
    %481 = arith.mulf %480, %477 : vector<32x256xf32>
    %482 = arith.addf %465, %481 : vector<32x256xf32>
    %c11_i32_162 = arith.constant 11 : i32
    %c16_i32_163 = arith.constant 16 : i32
    %483 = arith.addi %c16_i32_163, %c11_i32_162 : i32
    %484 = arith.index_cast %483 : i32 to index
    %c0_164 = arith.constant 0 : index
    %c0_165 = arith.constant 0 : index
    %485 = vector.load %arg2[%484, %c0_164, %c0_165] : memref<32x32x2xf32, #tpu.memory_space<vmem>>, vector<1x32x2xf32>
    %486 = vector.shape_cast %485 : vector<1x32x2xf32> to vector<32x2xf32>
    %487 = vector.extract_strided_slice %486 {offsets = [0, 0], sizes = [32, 1], strides = [1, 1]} : vector<32x2xf32> to vector<32x1xf32>
    %488 = vector.extract_strided_slice %486 {offsets = [0, 1], sizes = [32, 1], strides = [1, 1]} : vector<32x2xf32> to vector<32x1xf32>
    %489 = vector.broadcast %487 : vector<32x1xf32> to vector<32x256xf32>
    %490 = arith.mulf %299, %489 : vector<32x256xf32>
    %491 = vector.broadcast %488 : vector<32x1xf32> to vector<32x256xf32>
    %492 = arith.addf %490, %491 : vector<32x256xf32>
    %cst_166 = arith.constant 0.000000e+00 : f32
    %493 = vector.broadcast %cst_166 : f32 to vector<32x256xf32>
    %494 = arith.maximumf %492, %493 : vector<32x256xf32>
    %495 = arith.index_cast %c11_i32_162 : i32 to index
    %c0_167 = arith.constant 0 : index
    %496 = vector.load %arg5[%495, %c0_167] : memref<16x256xf32, #tpu.memory_space<vmem>>, vector<1x256xf32>
    %497 = vector.broadcast %496 : vector<1x256xf32> to vector<32x256xf32>
    %498 = arith.mulf %497, %494 : vector<32x256xf32>
    %499 = arith.addf %482, %498 : vector<32x256xf32>
    %c12_i32_168 = arith.constant 12 : i32
    %c16_i32_169 = arith.constant 16 : i32
    %500 = arith.addi %c16_i32_169, %c12_i32_168 : i32
    %501 = arith.index_cast %500 : i32 to index
    %c0_170 = arith.constant 0 : index
    %c0_171 = arith.constant 0 : index
    %502 = vector.load %arg2[%501, %c0_170, %c0_171] : memref<32x32x2xf32, #tpu.memory_space<vmem>>, vector<1x32x2xf32>
    %503 = vector.shape_cast %502 : vector<1x32x2xf32> to vector<32x2xf32>
    %504 = vector.extract_strided_slice %503 {offsets = [0, 0], sizes = [32, 1], strides = [1, 1]} : vector<32x2xf32> to vector<32x1xf32>
    %505 = vector.extract_strided_slice %503 {offsets = [0, 1], sizes = [32, 1], strides = [1, 1]} : vector<32x2xf32> to vector<32x1xf32>
    %506 = vector.broadcast %504 : vector<32x1xf32> to vector<32x256xf32>
    %507 = arith.mulf %299, %506 : vector<32x256xf32>
    %508 = vector.broadcast %505 : vector<32x1xf32> to vector<32x256xf32>
    %509 = arith.addf %507, %508 : vector<32x256xf32>
    %cst_172 = arith.constant 0.000000e+00 : f32
    %510 = vector.broadcast %cst_172 : f32 to vector<32x256xf32>
    %511 = arith.maximumf %509, %510 : vector<32x256xf32>
    %512 = arith.index_cast %c12_i32_168 : i32 to index
    %c0_173 = arith.constant 0 : index
    %513 = vector.load %arg5[%512, %c0_173] : memref<16x256xf32, #tpu.memory_space<vmem>>, vector<1x256xf32>
    %514 = vector.broadcast %513 : vector<1x256xf32> to vector<32x256xf32>
    %515 = arith.mulf %514, %511 : vector<32x256xf32>
    %516 = arith.addf %499, %515 : vector<32x256xf32>
    %c13_i32_174 = arith.constant 13 : i32
    %c16_i32_175 = arith.constant 16 : i32
    %517 = arith.addi %c16_i32_175, %c13_i32_174 : i32
    %518 = arith.index_cast %517 : i32 to index
    %c0_176 = arith.constant 0 : index
    %c0_177 = arith.constant 0 : index
    %519 = vector.load %arg2[%518, %c0_176, %c0_177] : memref<32x32x2xf32, #tpu.memory_space<vmem>>, vector<1x32x2xf32>
    %520 = vector.shape_cast %519 : vector<1x32x2xf32> to vector<32x2xf32>
    %521 = vector.extract_strided_slice %520 {offsets = [0, 0], sizes = [32, 1], strides = [1, 1]} : vector<32x2xf32> to vector<32x1xf32>
    %522 = vector.extract_strided_slice %520 {offsets = [0, 1], sizes = [32, 1], strides = [1, 1]} : vector<32x2xf32> to vector<32x1xf32>
    %523 = vector.broadcast %521 : vector<32x1xf32> to vector<32x256xf32>
    %524 = arith.mulf %299, %523 : vector<32x256xf32>
    %525 = vector.broadcast %522 : vector<32x1xf32> to vector<32x256xf32>
    %526 = arith.addf %524, %525 : vector<32x256xf32>
    %cst_178 = arith.constant 0.000000e+00 : f32
    %527 = vector.broadcast %cst_178 : f32 to vector<32x256xf32>
    %528 = arith.maximumf %526, %527 : vector<32x256xf32>
    %529 = arith.index_cast %c13_i32_174 : i32 to index
    %c0_179 = arith.constant 0 : index
    %530 = vector.load %arg5[%529, %c0_179] : memref<16x256xf32, #tpu.memory_space<vmem>>, vector<1x256xf32>
    %531 = vector.broadcast %530 : vector<1x256xf32> to vector<32x256xf32>
    %532 = arith.mulf %531, %528 : vector<32x256xf32>
    %533 = arith.addf %516, %532 : vector<32x256xf32>
    %c14_i32_180 = arith.constant 14 : i32
    %c16_i32_181 = arith.constant 16 : i32
    %534 = arith.addi %c16_i32_181, %c14_i32_180 : i32
    %535 = arith.index_cast %534 : i32 to index
    %c0_182 = arith.constant 0 : index
    %c0_183 = arith.constant 0 : index
    %536 = vector.load %arg2[%535, %c0_182, %c0_183] : memref<32x32x2xf32, #tpu.memory_space<vmem>>, vector<1x32x2xf32>
    %537 = vector.shape_cast %536 : vector<1x32x2xf32> to vector<32x2xf32>
    %538 = vector.extract_strided_slice %537 {offsets = [0, 0], sizes = [32, 1], strides = [1, 1]} : vector<32x2xf32> to vector<32x1xf32>
    %539 = vector.extract_strided_slice %537 {offsets = [0, 1], sizes = [32, 1], strides = [1, 1]} : vector<32x2xf32> to vector<32x1xf32>
    %540 = vector.broadcast %538 : vector<32x1xf32> to vector<32x256xf32>
    %541 = arith.mulf %299, %540 : vector<32x256xf32>
    %542 = vector.broadcast %539 : vector<32x1xf32> to vector<32x256xf32>
    %543 = arith.addf %541, %542 : vector<32x256xf32>
    %cst_184 = arith.constant 0.000000e+00 : f32
    %544 = vector.broadcast %cst_184 : f32 to vector<32x256xf32>
    %545 = arith.maximumf %543, %544 : vector<32x256xf32>
    %546 = arith.index_cast %c14_i32_180 : i32 to index
    %c0_185 = arith.constant 0 : index
    %547 = vector.load %arg5[%546, %c0_185] : memref<16x256xf32, #tpu.memory_space<vmem>>, vector<1x256xf32>
    %548 = vector.broadcast %547 : vector<1x256xf32> to vector<32x256xf32>
    %549 = arith.mulf %548, %545 : vector<32x256xf32>
    %550 = arith.addf %533, %549 : vector<32x256xf32>
    %c15_i32_186 = arith.constant 15 : i32
    %c16_i32_187 = arith.constant 16 : i32
    %551 = arith.addi %c16_i32_187, %c15_i32_186 : i32
    %552 = arith.index_cast %551 : i32 to index
    %c0_188 = arith.constant 0 : index
    %c0_189 = arith.constant 0 : index
    %553 = vector.load %arg2[%552, %c0_188, %c0_189] : memref<32x32x2xf32, #tpu.memory_space<vmem>>, vector<1x32x2xf32>
    %554 = vector.shape_cast %553 : vector<1x32x2xf32> to vector<32x2xf32>
    %555 = vector.extract_strided_slice %554 {offsets = [0, 0], sizes = [32, 1], strides = [1, 1]} : vector<32x2xf32> to vector<32x1xf32>
    %556 = vector.extract_strided_slice %554 {offsets = [0, 1], sizes = [32, 1], strides = [1, 1]} : vector<32x2xf32> to vector<32x1xf32>
    %557 = vector.broadcast %555 : vector<32x1xf32> to vector<32x256xf32>
    %558 = arith.mulf %299, %557 : vector<32x256xf32>
    %559 = vector.broadcast %556 : vector<32x1xf32> to vector<32x256xf32>
    %560 = arith.addf %558, %559 : vector<32x256xf32>
    %cst_190 = arith.constant 0.000000e+00 : f32
    %561 = vector.broadcast %cst_190 : f32 to vector<32x256xf32>
    %562 = arith.maximumf %560, %561 : vector<32x256xf32>
    %563 = arith.index_cast %c15_i32_186 : i32 to index
    %c0_191 = arith.constant 0 : index
    %564 = vector.load %arg5[%563, %c0_191] : memref<16x256xf32, #tpu.memory_space<vmem>>, vector<1x256xf32>
    %565 = vector.broadcast %564 : vector<1x256xf32> to vector<32x256xf32>
    %566 = arith.mulf %565, %562 : vector<32x256xf32>
    %567 = arith.addf %550, %566 : vector<32x256xf32>
    %c15_i32_192 = arith.constant 15 : i32
    %cst_193 = arith.constant dense<0.000000e+00> : vector<16x32xf32>
    %568 = tpu.matmul %2, %567, %cst_193 {dimension_numbers = #tpu.dot_dimension_numbers<[1], [1], [0], [0], [0, 0, 1, 0], [], []>} : vector<16x256xf32>, vector<32x256xf32>, vector<16x32xf32> -> vector<16x32xf32>
    %c1 = arith.constant 1 : index
    %c0_194 = arith.constant 0 : index
    %c0_195 = arith.constant 0 : index
    %569 = vector.load %arg3[%c1, %c0_194, %c0_195] : memref<2x19x32xf32, #tpu.memory_space<vmem>>, vector<1x19x32xf32>
    %570 = vector.shape_cast %569 : vector<1x19x32xf32> to vector<19x32xf32>
    %571 = vector.extract_strided_slice %570 {offsets = [0, 0], sizes = [16, 32], strides = [1, 1]} : vector<19x32xf32> to vector<16x32xf32>
    %572 = vector.extract_strided_slice %570 {offsets = [16, 0], sizes = [1, 32], strides = [1, 1]} : vector<19x32xf32> to vector<1x32xf32>
    %573 = vector.extract_strided_slice %570 {offsets = [17, 0], sizes = [1, 32], strides = [1, 1]} : vector<19x32xf32> to vector<1x32xf32>
    %574 = vector.extract_strided_slice %570 {offsets = [18, 0], sizes = [1, 32], strides = [1, 1]} : vector<19x32xf32> to vector<1x32xf32>
    %cst_196 = arith.constant dense<0.000000e+00> : vector<16x32xf32>
    %575 = tpu.matmul %295, %571, %cst_196 {dimension_numbers = #tpu.dot_dimension_numbers<[1], [0], [0], [1], [0, 0, 1, 1], [], []>} : vector<16x16xf32>, vector<16x32xf32>, vector<16x32xf32> -> vector<16x32xf32>
    %576 = arith.addf %568, %575 : vector<16x32xf32>
    %577 = vector.broadcast %572 : vector<1x32xf32> to vector<16x32xf32>
    %578 = arith.addf %576, %577 : vector<16x32xf32>
    %579 = vector.broadcast %573 : vector<1x32xf32> to vector<16x32xf32>
    %580 = arith.mulf %578, %579 : vector<16x32xf32>
    %581 = vector.broadcast %574 : vector<1x32xf32> to vector<16x32xf32>
    %582 = arith.addf %580, %581 : vector<16x32xf32>
    %583 = arith.negf %582 : vector<16x32xf32>
    %584 = math.exp %583 : vector<16x32xf32>
    %cst_197 = arith.constant 1.000000e+00 : f32
    %585 = vector.broadcast %cst_197 : f32 to vector<16x32xf32>
    %586 = arith.addf %585, %584 : vector<16x32xf32>
    %587 = arith.divf %585, %586 : vector<16x32xf32>
    %cst_198 = arith.constant dense<0.000000e+00> : vector<32x32xf32>
    %588 = tpu.matmul %587, %587, %cst_198 {dimension_numbers = #tpu.dot_dimension_numbers<[0], [0], [1], [1], [0, 1, 1, 1], [], []>} : vector<16x32xf32>, vector<16x32xf32>, vector<32x32xf32> -> vector<32x32xf32>
    %c0_199 = arith.constant 0 : index
    %c0_200 = arith.constant 0 : index
    %589 = vector.load %arg4[%c0_199, %c0_200] : memref<32x32xf32, #tpu.memory_space<vmem>>, vector<32x32xf32>
    tpu.vector_store %arg4[%c0_199, %c0_200], %588 {strides = array<i32>} : memref<32x32xf32, #tpu.memory_space<vmem>>, vector<32x32xf32>,
    return
  }
}

</mosaic_0001>

<llo_original>
// kernel: generator_forward.1
$region0: #{generator_forward.1}
  #allocation0 [shape = 'u32[]', space=smem, size = 0x4, offset = 0x4, fixed_abs, tag = 'smem constant byte address 0x4 - core index']
  #allocation1 [shape = 'u32[72,128]{1,0:T(1,128)}', space=vmem, size = 0x9000, scoped, tag = 'internal scratch']
  #allocation2 [shape = 'f32[16,256]{1,0:T(8,128)}', space=vmem, size = 0x4000, scoped, tag = 'scratch operand']
  %s0 = inlined_call_operand.vmem [shape: f32[16,16], index: 0, kind: input, shape index: {}]
  %s1 = inlined_call_operand.vmem [shape: f32[33,256], index: 1, kind: input, shape index: {}]
  %s2 = inlined_call_operand.vmem [shape: f32[32,32,2], index: 2, kind: input, shape index: {}]
  %s3 = inlined_call_operand.vmem [shape: f32[2,19,32], index: 3, kind: input, shape index: {}]
  %s4 = inlined_call_operand.hbm [shape: f32[32,32], index: 4, kind: output, shape index: {}]
  %s5 = sld [smem:[#allocation0]]
  $region26: #{generator_forward.1} parent=0
    _
  %s7 = ssub.s32 1, %s5
  %s8 = scalar_select 0, %s7, %s5
  $region1: #{generator_forward.1} parent=0
    #allocation3 [shape = 'u8[16384]{0}', space=vmem, size = 0x4000, scoped, tag = 'output window, operand 0, single buffered']
    #allocation4 [shape = 's32[1]{0}', space=sflag, size = 0x4, scoped, tag = 'scoped memory for generator_forward.1']
    %9 = vsyncpa [#allocation4], 0
    // Predicated region
    $region2: #{generator_forward.1} parent=1 // pred_check
      _
    $region3: #{generator_forward.1} parent=1 // pred_check_branch
      %11 = sbr.rel (0) target = $region5
    $region4: #{generator_forward.1} parent=1 // pred_region
      _
    $region5: #{generator_forward.1} parent=1 // pred_fallthru
      _
    // Predicated region
    $region6: #{generator_forward.1} parent=1 // pred_check
      _
    $region7: #{generator_forward.1} parent=1 // pred_check_branch
      %13 = sbr.rel (0) target = $region9
    $region8: #{generator_forward.1} parent=1 // pred_region
      _
    $region9: #{generator_forward.1} parent=1 // pred_fallthru
      _
    // Predicated region
    $region10: #{generator_forward.1} parent=1 // pred_check
      _
    $region11: #{generator_forward.1} parent=1 // pred_check_branch
      %15 = sbr.rel (0) target = $region13
    $region12: #{generator_forward.1} parent=1 // pred_region
      _
    $region13: #{generator_forward.1} parent=1 // pred_fallthru
      _
    // Predicated region
    $region14: #{generator_forward.1} parent=1 // pred_check
      _
    $region15: #{generator_forward.1} parent=1 // pred_check_branch
      %17 = sbr.rel (0) target = $region17
    $region16: #{generator_forward.1} parent=1 // pred_region
      _
    $region17: #{generator_forward.1} parent=1 // pred_fallthru
      _
    %v18 = vld [vmem:[%s0] sm:$0xff]
    %v19 = vld [vmem:[%s0 + $0x8] sm:$0xff]
    %v20 = vld [vmem:[%s1] sm:$0xff]
    %v21 = vld [vmem:[%s1 + $0x8] sm:$0xff]
    %v22 = vld [vmem:[%s1 + $0x10] sm:$0xff]
    %v23 = vld [vmem:[%s1 + $0x18] sm:$0xff]
    %v24 = vld [vmem:[%s1 + $0x20] sm:$0xff]
    %v25 = vld [vmem:[%s1 + $0x28] sm:$0xff]
    %v26 = vld [vmem:[%s1 + $0x30] sm:$0xff]
    %v27 = vld [vmem:[%s1 + $0x38] sm:$0xff]
    %s28 = scalar_lea.vmem %s1, 64
    %v29 = vld [vmem:[%s28] ss:$8 sm:$0x3]
    %30 = vxpose.xlu0.b32.start [1/16] %v18, 128
    %31 = vxpose.xlu0.b32.cont [2/16] %v19, 128
    %32 = vxpose.xlu0.b32.cont [3/16] 0.0, 128
    %33 = vxpose.xlu0.b32.cont [4/16] 0.0, 128
    %34 = vxpose.xlu0.b32.cont [5/16] 0.0, 128
    %35 = vxpose.xlu0.b32.cont [6/16] 0.0, 128
    %36 = vxpose.xlu0.b32.cont [7/16] 0.0, 128
    %37 = vxpose.xlu0.b32.cont [8/16] 0.0, 128
    %38 = vxpose.xlu0.b32.cont [9/16] 0.0, 128
    %39 = vxpose.xlu0.b32.cont [10/16] 0.0, 128
    %40 = vxpose.xlu0.b32.cont [11/16] 0.0, 128
    %41 = vxpose.xlu0.b32.cont [12/16] 0.0, 128
    %42 = vxpose.xlu0.b32.cont [13/16] 0.0, 128
    %43 = vxpose.xlu0.b32.cont [14/16] 0.0, 128
    %44 = vxpose.xlu0.b32.cont [15/16] 0.0, 128
    %45 = vxpose.xlu0.b32.end [16/16] 0.0, 128
    %v46 = vpop.trf.xlu0
    %v47 = vpop.trf.xlu0
    %v48 = vpop.trf.xlu0
    %v49 = vpop.trf.xlu0
    %v50 = vpop.trf.xlu0
    %v51 = vpop.trf.xlu0
    %v52 = vpop.trf.xlu0
    %v53 = vpop.trf.xlu0
    %v54 = vpop.trf.xlu0
    %v55 = vpop.trf.xlu0
    %v56 = vpop.trf.xlu0
    %v57 = vpop.trf.xlu0
    %v58 = vpop.trf.xlu0
    %v59 = vpop.trf.xlu0
    %v60 = vpop.trf.xlu0
    %v61 = vpop.trf.xlu0
    %vm62 = vcmask 130048
    %v64 = vsel %vm62, %v46, 0
    %v67 = vsel %vm62, %v47, 0
    %69 = vmatpush.msra.mxu0 0.0
    %70 = vmatpush.msra.mxu0 0.0
    %71 = vmatpush.msra.mxu0 0.0
    %72 = vmatpush.msra.mxu0 0.0
    %73 = vmatpush.msra.mxu0 0.0
    %74 = vmatpush.msra.mxu0 0.0
    %75 = vmatpush.msra.mxu0 0.0
    %76 = vmatpush.msra.mxu0 0.0
    %77 = vmatpush.msra.mxu0 0.0
    %78 = vmatpush.msra.mxu0 0.0
    %79 = vmatpush.msra.mxu0 0.0
    %80 = vmatpush.msra.mxu0 0.0
    %81 = vmatpush.msra.mxu0 0.0
    %82 = vmatpush.msra.mxu0 0.0
    %83 = vmatpush.msra.mxu0 %v22
    %84 = vmatpush.msra.mxu0 %v20
    %85 = vmatmul.f32.gmra.mxu0 %v64
    %v86 = vpop.f32.mrf.mxu0
    %v87 = vadd.f32 0.0, %v86
    %88 = vmatmul.f32.gmra.mxu0 %v67
    %v89 = vpop.f32.mrf.mxu0
    %v90 = vadd.f32 0.0, %v89
    %91 = vdwg.mxu0
    %92 = vmatpush.msra.mxu0 0.0
    %93 = vmatpush.msra.mxu0 0.0
    %94 = vmatpush.msra.mxu0 0.0
    %95 = vmatpush.msra.mxu0 0.0
    %96 = vmatpush.msra.mxu0 0.0
    %97 = vmatpush.msra.mxu0 0.0
    %98 = vmatpush.msra.mxu0 0.0
    %99 = vmatpush.msra.mxu0 0.0
    %100 = vmatpush.msra.mxu0 0.0
    %101 = vmatpush.msra.mxu0 0.0
    %102 = vmatpush.msra.mxu0 0.0
    %103 = vmatpush.msra.mxu0 0.0
    %104 = vmatpush.msra.mxu0 0.0
    %105 = vmatpush.msra.mxu0 0.0
    %106 = vmatpush.msra.mxu0 %v23
    %107 = vmatpush.msra.mxu0 %v21
    %108 = vmatmul.f32.gmra.mxu0 %v64
    %v109 = vpop.f32.mrf.mxu0
    %v110 = vadd.f32 0.0, %v109
    %111 = vmatmul.f32.gmra.mxu0 %v67
    %v112 = vpop.f32.mrf.mxu0
    %v113 = vadd.f32 0.0, %v112
    %114 = vdwg.mxu0
    %115 = vst [vmem:[#allocation2] sm:$0xff] %v87
    %116 = vst [vmem:[#allocation2 + $0x8] sm:$0xff] %v110
    %117 = vst [vmem:[#allocation2 + $0x10] sm:$0xff] %v90
    %118 = vst [vmem:[#allocation2 + $0x18] sm:$0xff] %v113
    %v120 = vperm.slane %v29, 0
    %v121 = vperm.slane %v29, 1
    %v124 = vld [vmem:[%s2] sm:$0xff]
    %v125 = vld [vmem:[%s2 + $0x8] sm:$0xff]
    %127 = vset.pattern.permute.xlu0 0
    %128 = vperm.xlu0 %127, %v124
    %v129 = vpop.permute.xlu0 %128
    %132 = vset.pattern.permute.xlu0 0
    %133 = vperm.xlu0 %132, %v125
    %v134 = vpop.permute.xlu0 %133
    %v136 = vmul.f32 %v120, %v129
    %v137 = vmul.f32 %v121, %v129
    %v138 = vmul.f32 %v120, %v134
    %v139 = vmul.f32 %v121, %v134
    %140 = vset.pattern.permute.xlu0 1
    %141 = vperm.xlu0 %140, %v124
    %v142 = vpop.permute.xlu0 %141
    %144 = vset.pattern.permute.xlu0 1
    %145 = vperm.xlu0 %144, %v125
    %v146 = vpop.permute.xlu0 %145
    %v148 = vadd.f32 %v136, %v142
    %v149 = vadd.f32 %v137, %v142
    %v150 = vadd.f32 %v138, %v146
    %v151 = vadd.f32 %v139, %v146
    %v152 = vmax.f32 %v148, 0.0
    %v153 = vmax.f32 %v149, 0.0
    %v154 = vmax.f32 %v150, 0.0
    %v155 = vmax.f32 %v151, 0.0
    %v156 = vld [vmem:[#allocation2] ss:$8 sm:$0x3]
    %v158 = vperm.slane %v156, 0
    %v159 = vperm.slane %v156, 1
    %v162 = vmul.f32 %v158, %v152
    %v163 = vmul.f32 %v159, %v153
    %v164 = vmul.f32 %v158, %v154
    %v165 = vmul.f32 %v159, %v155
    %s166 = scalar_lea.vmem %s2, 32
    %v167 = vld [vmem:[%s166] sm:$0xff]
    %v168 = vld [vmem:[%s166 + $0x8] sm:$0xff]
    %170 = vset.pattern.permute.xlu0 0
    %171 = vperm.xlu0 %170, %v167
    %v172 = vpop.permute.xlu0 %171
    %175 = vset.pattern.permute.xlu0 0
    %176 = vperm.xlu0 %175, %v168
    %v177 = vpop.permute.xlu0 %176
    %v179 = vmul.f32 %v120, %v172
    %v180 = vmul.f32 %v121, %v172
    %v181 = vmul.f32 %v120, %v177
    %v182 = vmul.f32 %v121, %v177
    %183 = vset.pattern.permute.xlu0 1
    %184 = vperm.xlu0 %183, %v167
    %v185 = vpop.permute.xlu0 %184
    %187 = vset.pattern.permute.xlu0 1
    %188 = vperm.xlu0 %187, %v168
    %v189 = vpop.permute.xlu0 %188
    %v191 = vadd.f32 %v179, %v185
    %v192 = vadd.f32 %v180, %v185
    %v193 = vadd.f32 %v181, %v189
    %v194 = vadd.f32 %v182, %v189
    %v195 = vmax.f32 %v191, 0.0
    %v196 = vmax.f32 %v192, 0.0
    %v197 = vmax.f32 %v193, 0.0
    %v198 = vmax.f32 %v194, 0.0
    %s199 = scalar_lea.vmem [#allocation2], 1
    %v200 = vld [vmem:[%s199] ss:$8 sm:$0x3]
    %v202 = vperm.slane %v200, 0
    %v203 = vperm.slane %v200, 1
    %v206 = vmul.f32 %v202, %v195
    %v207 = vmul.f32 %v203, %v196
    %v208 = vmul.f32 %v202, %v197
    %v209 = vmul.f32 %v203, %v198
    %v210 = vadd.f32 %v162, %v206
    %v211 = vadd.f32 %v163, %v207
    %v212 = vadd.f32 %v164, %v208
    %v213 = vadd.f32 %v165, %v209
    %s214 = scalar_lea.vmem %s2, 64
    %v215 = vld [vmem:[%s214] sm:$0xff]
    %v216 = vld [vmem:[%s214 + $0x8] sm:$0xff]
    %218 = vset.pattern.permute.xlu0 0
    %219 = vperm.xlu0 %218, %v215
    %v220 = vpop.permute.xlu0 %219
    %223 = vset.pattern.permute.xlu0 0
    %224 = vperm.xlu0 %223, %v216
    %v225 = vpop.permute.xlu0 %224
    %v227 = vmul.f32 %v120, %v220
    %v228 = vmul.f32 %v121, %v220
    %v229 = vmul.f32 %v120, %v225
    %v230 = vmul.f32 %v121, %v225
    %231 = vset.pattern.permute.xlu0 1
    %232 = vperm.xlu0 %231, %v215
    %v233 = vpop.permute.xlu0 %232
    %235 = vset.pattern.permute.xlu0 1
    %236 = vperm.xlu0 %235, %v216
    %v237 = vpop.permute.xlu0 %236
    %v239 = vadd.f32 %v227, %v233
    %v240 = vadd.f32 %v228, %v233
    %v241 = vadd.f32 %v229, %v237
    %v242 = vadd.f32 %v230, %v237
    %v243 = vmax.f32 %v239, 0.0
    %v244 = vmax.f32 %v240, 0.0
    %v245 = vmax.f32 %v241, 0.0
    %v246 = vmax.f32 %v242, 0.0
    %s247 = scalar_lea.vmem [#allocation2], 2
    %v248 = vld [vmem:[%s247] ss:$8 sm:$0x3]
    %v250 = vperm.slane %v248, 0
    %v251 = vperm.slane %v248, 1
    %v254 = vmul.f32 %v250, %v243
    %v255 = vmul.f32 %v251, %v244
    %v256 = vmul.f32 %v250, %v245
    %v257 = vmul.f32 %v251, %v246
    %v258 = vadd.f32 %v210, %v254
    %v259 = vadd.f32 %v211, %v255
    %v260 = vadd.f32 %v212, %v256
    %v261 = vadd.f32 %v213, %v257
    %s262 = scalar_lea.vmem %s2, 96
    %v263 = vld [vmem:[%s262] sm:$0xff]
    %v264 = vld [vmem:[%s262 + $0x8] sm:$0xff]
    %266 = vset.pattern.permute.xlu0 0
    %267 = vperm.xlu0 %266, %v263
    %v268 = vpop.permute.xlu0 %267
    %271 = vset.pattern.permute.xlu0 0
    %272 = vperm.xlu0 %271, %v264
    %v273 = vpop.permute.xlu0 %272
    %v275 = vmul.f32 %v120, %v268
    %v276 = vmul.f32 %v121, %v268
    %v277 = vmul.f32 %v120, %v273
    %v278 = vmul.f32 %v121, %v273
    %279 = vset.pattern.permute.xlu0 1
    %280 = vperm.xlu0 %279, %v263
    %v281 = vpop.permute.xlu0 %280
    %283 = vset.pattern.permute.xlu0 1
    %284 = vperm.xlu0 %283, %v264
    %v285 = vpop.permute.xlu0 %284
    %v287 = vadd.f32 %v275, %v281
    %v288 = vadd.f32 %v276, %v281
    %v289 = vadd.f32 %v277, %v285
    %v290 = vadd.f32 %v278, %v285
    %v291 = vmax.f32 %v287, 0.0
    %v292 = vmax.f32 %v288, 0.0
    %v293 = vmax.f32 %v289, 0.0
    %v294 = vmax.f32 %v290, 0.0
    %s295 = scalar_lea.vmem [#allocation2], 3
    %v296 = vld [vmem:[%s295] ss:$8 sm:$0x3]
    %v298 = vperm.slane %v296, 0
    %v299 = vperm.slane %v296, 1
    %v302 = vmul.f32 %v298, %v291
    %v303 = vmul.f32 %v299, %v292
    %v304 = vmul.f32 %v298, %v293
    %v305 = vmul.f32 %v299, %v294
    %v306 = vadd.f32 %v258, %v302
    %v307 = vadd.f32 %v259, %v303
    %v308 = vadd.f32 %v260, %v304
    %v309 = vadd.f32 %v261, %v305
    %s310 = scalar_lea.vmem %s2, 128
    %v311 = vld [vmem:[%s310] sm:$0xff]
    %v312 = vld [vmem:[%s310 + $0x8] sm:$0xff]
    %314 = vset.pattern.permute.xlu0 0
    %315 = vperm.xlu0 %314, %v311
    %v316 = vpop.permute.xlu0 %315
    %319 = vset.pattern.permute.xlu0 0
    %320 = vperm.xlu0 %319, %v312
    %v321 = vpop.permute.xlu0 %320
    %v323 = vmul.f32 %v120, %v316
    %v324 = vmul.f32 %v121, %v316
    %v325 = vmul.f32 %v120, %v321
    %v326 = vmul.f32 %v121, %v321
    %327 = vset.pattern.permute.xlu0 1
    %328 = vperm.xlu0 %327, %v311
    %v329 = vpop.permute.xlu0 %328
    %331 = vset.pattern.permute.xlu0 1
    %332 = vperm.xlu0 %331, %v312
    %v333 = vpop.permute.xlu0 %332
    %v335 = vadd.f32 %v323, %v329
    %v336 = vadd.f32 %v324, %v329
    %v337 = vadd.f32 %v325, %v333
    %v338 = vadd.f32 %v326, %v333
    %v339 = vmax.f32 %v335, 0.0
    %v340 = vmax.f32 %v336, 0.0
    %v341 = vmax.f32 %v337, 0.0
    %v342 = vmax.f32 %v338, 0.0
    %s343 = scalar_lea.vmem [#allocation2], 4
    %v344 = vld [vmem:[%s343] ss:$8 sm:$0x3]
    %v346 = vperm.slane %v344, 0
    %v347 = vperm.slane %v344, 1
    %v350 = vmul.f32 %v346, %v339
    %v351 = vmul.f32 %v347, %v340
    %v352 = vmul.f32 %v346, %v341
    %v353 = vmul.f32 %v347, %v342
    %v354 = vadd.f32 %v306, %v350
    %v355 = vadd.f32 %v307, %v351
    %v356 = vadd.f32 %v308, %v352
    %v357 = vadd.f32 %v309, %v353
    %s358 = scalar_lea.vmem %s2, 160
    %v359 = vld [vmem:[%s358] sm:$0xff]
    %v360 = vld [vmem:[%s358 + $0x8] sm:$0xff]
    %362 = vset.pattern.permute.xlu0 0
    %363 = vperm.xlu0 %362, %v359
    %v364 = vpop.permute.xlu0 %363
    %367 = vset.pattern.permute.xlu0 0
    %368 = vperm.xlu0 %367, %v360
    %v369 = vpop.permute.xlu0 %368
    %v371 = vmul.f32 %v120, %v364
    %v372 = vmul.f32 %v121, %v364
    %v373 = vmul.f32 %v120, %v369
    %v374 = vmul.f32 %v121, %v369
    %375 = vset.pattern.permute.xlu0 1
    %376 = vperm.xlu0 %375, %v359
    %v377 = vpop.permute.xlu0 %376
    %379 = vset.pattern.permute.xlu0 1
    %380 = vperm.xlu0 %379, %v360
    %v381 = vpop.permute.xlu0 %380
    %v383 = vadd.f32 %v371, %v377
    %v384 = vadd.f32 %v372, %v377
    %v385 = vadd.f32 %v373, %v381
    %v386 = vadd.f32 %v374, %v381
    %v387 = vmax.f32 %v383, 0.0
    %v388 = vmax.f32 %v384, 0.0
    %v389 = vmax.f32 %v385, 0.0
    %v390 = vmax.f32 %v386, 0.0
    %s391 = scalar_lea.vmem [#allocation2], 5
    %v392 = vld [vmem:[%s391] ss:$8 sm:$0x3]
    %v394 = vperm.slane %v392, 0
    %v395 = vperm.slane %v392, 1
    %v398 = vmul.f32 %v394, %v387
    %v399 = vmul.f32 %v395, %v388
    %v400 = vmul.f32 %v394, %v389
    %v401 = vmul.f32 %v395, %v390
    %v402 = vadd.f32 %v354, %v398
    %v403 = vadd.f32 %v355, %v399
    %v404 = vadd.f32 %v356, %v400
    %v405 = vadd.f32 %v357, %v401
    %s406 = scalar_lea.vmem %s2, 192
    %v407 = vld [vmem:[%s406] sm:$0xff]
    %v408 = vld [vmem:[%s406 + $0x8] sm:$0xff]
    %410 = vset.pattern.permute.xlu0 0
    %411 = vperm.xlu0 %410, %v407
    %v412 = vpop.permute.xlu0 %411
    %415 = vset.pattern.permute.xlu0 0
    %416 = vperm.xlu0 %415, %v408
    %v417 = vpop.permute.xlu0 %416
    %v419 = vmul.f32 %v120, %v412
    %v420 = vmul.f32 %v121, %v412
    %v421 = vmul.f32 %v120, %v417
    %v422 = vmul.f32 %v121, %v417
    %423 = vset.pattern.permute.xlu0 1
    %424 = vperm.xlu0 %423, %v407
    %v425 = vpop.permute.xlu0 %424
    %427 = vset.pattern.permute.xlu0 1
    %428 = vperm.xlu0 %427, %v408
    %v429 = vpop.permute.xlu0 %428
    %v431 = vadd.f32 %v419, %v425
    %v432 = vadd.f32 %v420, %v425
    %v433 = vadd.f32 %v421, %v429
    %v434 = vadd.f32 %v422, %v429
    %v435 = vmax.f32 %v431, 0.0
    %v436 = vmax.f32 %v432, 0.0
    %v437 = vmax.f32 %v433, 0.0
    %v438 = vmax.f32 %v434, 0.0
    %s439 = scalar_lea.vmem [#allocation2], 6
    %v440 = vld [vmem:[%s439] ss:$8 sm:$0x3]
    %v442 = vperm.slane %v440, 0
    %v443 = vperm.slane %v440, 1
    %v446 = vmul.f32 %v442, %v435
    %v447 = vmul.f32 %v443, %v436
    %v448 = vmul.f32 %v442, %v437
    %v449 = vmul.f32 %v443, %v438
    %v450 = vadd.f32 %v402, %v446
    %v451 = vadd.f32 %v403, %v447
    %v452 = vadd.f32 %v404, %v448
    %v453 = vadd.f32 %v405, %v449
    %s454 = scalar_lea.vmem %s2, 224
    %v455 = vld [vmem:[%s454] sm:$0xff]
    %v456 = vld [vmem:[%s454 + $0x8] sm:$0xff]
    %458 = vset.pattern.permute.xlu0 0
    %459 = vperm.xlu0 %458, %v455
    %v460 = vpop.permute.xlu0 %459
    %463 = vset.pattern.permute.xlu0 0
    %464 = vperm.xlu0 %463, %v456
    %v465 = vpop.permute.xlu0 %464
    %v467 = vmul.f32 %v120, %v460
    %v468 = vmul.f32 %v121, %v460
    %v469 = vmul.f32 %v120, %v465
    %v470 = vmul.f32 %v121, %v465
    %471 = vset.pattern.permute.xlu0 1
    %472 = vperm.xlu0 %471, %v455
    %v473 = vpop.permute.xlu0 %472
    %475 = vset.pattern.permute.xlu0 1
    %476 = vperm.xlu0 %475, %v456
    %v477 = vpop.permute.xlu0 %476
    %v479 = vadd.f32 %v467, %v473
    %v480 = vadd.f32 %v468, %v473
    %v481 = vadd.f32 %v469, %v477
    %v482 = vadd.f32 %v470, %v477
    %v483 = vmax.f32 %v479, 0.0
    %v484 = vmax.f32 %v480, 0.0
    %v485 = vmax.f32 %v481, 0.0
    %v486 = vmax.f32 %v482, 0.0
    %s487 = scalar_lea.vmem [#allocation2], 7
    %v488 = vld [vmem:[%s487] ss:$8 sm:$0x3]
    %v490 = vperm.slane %v488, 0
    %v491 = vperm.slane %v488, 1
    %v494 = vmul.f32 %v490, %v483
    %v495 = vmul.f32 %v491, %v484
    %v496 = vmul.f32 %v490, %v485
    %v497 = vmul.f32 %v491, %v486
    %v498 = vadd.f32 %v450, %v494
    %v499 = vadd.f32 %v451, %v495
    %v500 = vadd.f32 %v452, %v496
    %v501 = vadd.f32 %v453, %v497
    %s502 = scalar_lea.vmem %s2, 256
    %v503 = vld [vmem:[%s502] sm:$0xff]
    %v504 = vld [vmem:[%s502 + $0x8] sm:$0xff]
    %506 = vset.pattern.permute.xlu0 0
    %507 = vperm.xlu0 %506, %v503
    %v508 = vpop.permute.xlu0 %507
    %511 = vset.pattern.permute.xlu0 0
    %512 = vperm.xlu0 %511, %v504
    %v513 = vpop.permute.xlu0 %512
    %v515 = vmul.f32 %v120, %v508
    %v516 = vmul.f32 %v121, %v508
    %v517 = vmul.f32 %v120, %v513
    %v518 = vmul.f32 %v121, %v513
    %519 = vset.pattern.permute.xlu0 1
    %520 = vperm.xlu0 %519, %v503
    %v521 = vpop.permute.xlu0 %520
    %523 = vset.pattern.permute.xlu0 1
    %524 = vperm.xlu0 %523, %v504
    %v525 = vpop.permute.xlu0 %524
    %v527 = vadd.f32 %v515, %v521
    %v528 = vadd.f32 %v516, %v521
    %v529 = vadd.f32 %v517, %v525
    %v530 = vadd.f32 %v518, %v525
    %v531 = vmax.f32 %v527, 0.0
    %v532 = vmax.f32 %v528, 0.0
    %v533 = vmax.f32 %v529, 0.0
    %v534 = vmax.f32 %v530, 0.0
    %s535 = scalar_lea.vmem [#allocation2], 16
    %v536 = vld [vmem:[%s535] ss:$8 sm:$0x3]
    %v538 = vperm.slane %v536, 0
    %v539 = vperm.slane %v536, 1
    %v542 = vmul.f32 %v538, %v531
    %v543 = vmul.f32 %v539, %v532
    %v544 = vmul.f32 %v538, %v533
    %v545 = vmul.f32 %v539, %v534
    %v546 = vadd.f32 %v498, %v542
    %v547 = vadd.f32 %v499, %v543
    %v548 = vadd.f32 %v500, %v544
    %v549 = vadd.f32 %v501, %v545
    %s550 = scalar_lea.vmem %s2, 288
    %v551 = vld [vmem:[%s550] sm:$0xff]
    %v552 = vld [vmem:[%s550 + $0x8] sm:$0xff]
    %554 = vset.pattern.permute.xlu0 0
    %555 = vperm.xlu0 %554, %v551
    %v556 = vpop.permute.xlu0 %555
    %559 = vset.pattern.permute.xlu0 0
    %560 = vperm.xlu0 %559, %v552
    %v561 = vpop.permute.xlu0 %560
    %v563 = vmul.f32 %v120, %v556
    %v564 = vmul.f32 %v121, %v556
    %v565 = vmul.f32 %v120, %v561
    %v566 = vmul.f32 %v121, %v561
    %567 = vset.pattern.permute.xlu0 1
    %568 = vperm.xlu0 %567, %v551
    %v569 = vpop.permute.xlu0 %568
    %571 = vset.pattern.permute.xlu0 1
    %572 = vperm.xlu0 %571, %v552
    %v573 = vpop.permute.xlu0 %572
    %v575 = vadd.f32 %v563, %v569
    %v576 = vadd.f32 %v564, %v569
    %v577 = vadd.f32 %v565, %v573
    %v578 = vadd.f32 %v566, %v573
    %v579 = vmax.f32 %v575, 0.0
    %v580 = vmax.f32 %v576, 0.0
    %v581 = vmax.f32 %v577, 0.0
    %v582 = vmax.f32 %v578, 0.0
    %s583 = scalar_lea.vmem [#allocation2], 17
    %v584 = vld [vmem:[%s583] ss:$8 sm:$0x3]
    %v586 = vperm.slane %v584, 0
    %v587 = vperm.slane %v584, 1
    %v590 = vmul.f32 %v586, %v579
    %v591 = vmul.f32 %v587, %v580
    %v592 = vmul.f32 %v586, %v581
    %v593 = vmul.f32 %v587, %v582
    %v594 = vadd.f32 %v546, %v590
    %v595 = vadd.f32 %v547, %v591
    %v596 = vadd.f32 %v548, %v592
    %v597 = vadd.f32 %v549, %v593
    %s598 = scalar_lea.vmem %s2, 320
    %v599 = vld [vmem:[%s598] sm:$0xff]
    %v600 = vld [vmem:[%s598 + $0x8] sm:$0xff]
    %602 = vset.pattern.permute.xlu0 0
    %603 = vperm.xlu0 %602, %v599
    %v604 = vpop.permute.xlu0 %603
    %607 = vset.pattern.permute.xlu0 0
    %608 = vperm.xlu0 %607, %v600
    %v609 = vpop.permute.xlu0 %608
    %v611 = vmul.f32 %v120, %v604
    %v612 = vmul.f32 %v121, %v604
    %v613 = vmul.f32 %v120, %v609
    %v614 = vmul.f32 %v121, %v609
    %615 = vset.pattern.permute.xlu0 1
    %616 = vperm.xlu0 %615, %v599
    %v617 = vpop.permute.xlu0 %616
    %619 = vset.pattern.permute.xlu0 1
    %620 = vperm.xlu0 %619, %v600
    %v621 = vpop.permute.xlu0 %620
    %v623 = vadd.f32 %v611, %v617
    %v624 = vadd.f32 %v612, %v617
    %v625 = vadd.f32 %v613, %v621
    %v626 = vadd.f32 %v614, %v621
    %v627 = vmax.f32 %v623, 0.0
    %v628 = vmax.f32 %v624, 0.0
    %v629 = vmax.f32 %v625, 0.0
    %v630 = vmax.f32 %v626, 0.0
    %s631 = scalar_lea.vmem [#allocation2], 18
    %v632 = vld [vmem:[%s631] ss:$8 sm:$0x3]
    %v634 = vperm.slane %v632, 0
    %v635 = vperm.slane %v632, 1
    %v638 = vmul.f32 %v634, %v627
    %v639 = vmul.f32 %v635, %v628
    %v640 = vmul.f32 %v634, %v629
    %v641 = vmul.f32 %v635, %v630
    %v642 = vadd.f32 %v594, %v638
    %v643 = vadd.f32 %v595, %v639
    %v644 = vadd.f32 %v596, %v640
    %v645 = vadd.f32 %v597, %v641
    %s646 = scalar_lea.vmem %s2, 352
    %v647 = vld [vmem:[%s646] sm:$0xff]
    %v648 = vld [vmem:[%s646 + $0x8] sm:$0xff]
    %650 = vset.pattern.permute.xlu0 0
    %651 = vperm.xlu0 %650, %v647
    %v652 = vpop.permute.xlu0 %651
    %655 = vset.pattern.permute.xlu0 0
    %656 = vperm.xlu0 %655, %v648
    %v657 = vpop.permute.xlu0 %656
    %v659 = vmul.f32 %v120, %v652
    %v660 = vmul.f32 %v121, %v652
    %v661 = vmul.f32 %v120, %v657
    %v662 = vmul.f32 %v121, %v657
    %663 = vset.pattern.permute.xlu0 1
    %664 = vperm.xlu0 %663, %v647
    %v665 = vpop.permute.xlu0 %664
    %667 = vset.pattern.permute.xlu0 1
    %668 = vperm.xlu0 %667, %v648
    %v669 = vpop.permute.xlu0 %668
    %v671 = vadd.f32 %v659, %v665
    %v672 = vadd.f32 %v660, %v665
    %v673 = vadd.f32 %v661, %v669
    %v674 = vadd.f32 %v662, %v669
    %v675 = vmax.f32 %v671, 0.0
    %v676 = vmax.f32 %v672, 0.0
    %v677 = vmax.f32 %v673, 0.0
    %v678 = vmax.f32 %v674, 0.0
    %s679 = scalar_lea.vmem [#allocation2], 19
    %v680 = vld [vmem:[%s679] ss:$8 sm:$0x3]
    %v682 = vperm.slane %v680, 0
    %v683 = vperm.slane %v680, 1
    %v686 = vmul.f32 %v682, %v675
    %v687 = vmul.f32 %v683, %v676
    %v688 = vmul.f32 %v682, %v677
    %v689 = vmul.f32 %v683, %v678
    %v690 = vadd.f32 %v642, %v686
    %v691 = vadd.f32 %v643, %v687
    %v692 = vadd.f32 %v644, %v688
    %v693 = vadd.f32 %v645, %v689
    %s694 = scalar_lea.vmem %s2, 384
    %v695 = vld [vmem:[%s694] sm:$0xff]
    %v696 = vld [vmem:[%s694 + $0x8] sm:$0xff]
    %698 = vset.pattern.permute.xlu0 0
    %699 = vperm.xlu0 %698, %v695
    %v700 = vpop.permute.xlu0 %699
    %703 = vset.pattern.permute.xlu0 0
    %704 = vperm.xlu0 %703, %v696
    %v705 = vpop.permute.xlu0 %704
    %v707 = vmul.f32 %v120, %v700
    %v708 = vmul.f32 %v121, %v700
    %v709 = vmul.f32 %v120, %v705
    %v710 = vmul.f32 %v121, %v705
    %711 = vset.pattern.permute.xlu0 1
    %712 = vperm.xlu0 %711, %v695
    %v713 = vpop.permute.xlu0 %712
    %715 = vset.pattern.permute.xlu0 1
    %716 = vperm.xlu0 %715, %v696
    %v717 = vpop.permute.xlu0 %716
    %v719 = vadd.f32 %v707, %v713
    %v720 = vadd.f32 %v708, %v713
    %v721 = vadd.f32 %v709, %v717
    %v722 = vadd.f32 %v710, %v717
    %v723 = vmax.f32 %v719, 0.0
    %v724 = vmax.f32 %v720, 0.0
    %v725 = vmax.f32 %v721, 0.0
    %v726 = vmax.f32 %v722, 0.0
    %s727 = scalar_lea.vmem [#allocation2], 20
    %v728 = vld [vmem:[%s727] ss:$8 sm:$0x3]
    %v730 = vperm.slane %v728, 0
    %v731 = vperm.slane %v728, 1
    %v734 = vmul.f32 %v730, %v723
    %v735 = vmul.f32 %v731, %v724
    %v736 = vmul.f32 %v730, %v725
    %v737 = vmul.f32 %v731, %v726
    %v738 = vadd.f32 %v690, %v734
    %v739 = vadd.f32 %v691, %v735
    %v740 = vadd.f32 %v692, %v736
    %v741 = vadd.f32 %v693, %v737
    %s742 = scalar_lea.vmem %s2, 416
    %v743 = vld [vmem:[%s742] sm:$0xff]
    %v744 = vld [vmem:[%s742 + $0x8] sm:$0xff]
    %746 = vset.pattern.permute.xlu0 0
    %747 = vperm.xlu0 %746, %v743
    %v748 = vpop.permute.xlu0 %747
    %751 = vset.pattern.permute.xlu0 0
    %752 = vperm.xlu0 %751, %v744
    %v753 = vpop.permute.xlu0 %752
    %v755 = vmul.f32 %v120, %v748
    %v756 = vmul.f32 %v121, %v748
    %v757 = vmul.f32 %v120, %v753
    %v758 = vmul.f32 %v121, %v753
    %759 = vset.pattern.permute.xlu0 1
    %760 = vperm.xlu0 %759, %v743
    %v761 = vpop.permute.xlu0 %760
    %763 = vset.pattern.permute.xlu0 1
    %764 = vperm.xlu0 %763, %v744
    %v765 = vpop.permute.xlu0 %764
    %v767 = vadd.f32 %v755, %v761
    %v768 = vadd.f32 %v756, %v761
    %v769 = vadd.f32 %v757, %v765
    %v770 = vadd.f32 %v758, %v765
    %v771 = vmax.f32 %v767, 0.0
    %v772 = vmax.f32 %v768, 0.0
    %v773 = vmax.f32 %v769, 0.0
    %v774 = vmax.f32 %v770, 0.0
    %s775 = scalar_lea.vmem [#allocation2], 21
    %v776 = vld [vmem:[%s775] ss:$8 sm:$0x3]
    %v778 = vperm.slane %v776, 0
    %v779 = vperm.slane %v776, 1
    %v782 = vmul.f32 %v778, %v771
    %v783 = vmul.f32 %v779, %v772
    %v784 = vmul.f32 %v778, %v773
    %v785 = vmul.f32 %v779, %v774
    %v786 = vadd.f32 %v738, %v782
    %v787 = vadd.f32 %v739, %v783
    %v788 = vadd.f32 %v740, %v784
    %v789 = vadd.f32 %v741, %v785
    %s790 = scalar_lea.vmem %s2, 448
    %v791 = vld [vmem:[%s790] sm:$0xff]
    %v792 = vld [vmem:[%s790 + $0x8] sm:$0xff]
    %794 = vset.pattern.permute.xlu0 0
    %795 = vperm.xlu0 %794, %v791
    %v796 = vpop.permute.xlu0 %795
    %799 = vset.pattern.permute.xlu0 0
    %800 = vperm.xlu0 %799, %v792
    %v801 = vpop.permute.xlu0 %800
    %v803 = vmul.f32 %v120, %v796
    %v804 = vmul.f32 %v121, %v796
    %v805 = vmul.f32 %v120, %v801
    %v806 = vmul.f32 %v121, %v801
    %807 = vset.pattern.permute.xlu0 1
    %808 = vperm.xlu0 %807, %v791
    %v809 = vpop.permute.xlu0 %808
    %811 = vset.pattern.permute.xlu0 1
    %812 = vperm.xlu0 %811, %v792
    %v813 = vpop.permute.xlu0 %812
    %v815 = vadd.f32 %v803, %v809
    %v816 = vadd.f32 %v804, %v809
    %v817 = vadd.f32 %v805, %v813
    %v818 = vadd.f32 %v806, %v813
    %v819 = vmax.f32 %v815, 0.0
    %v820 = vmax.f32 %v816, 0.0
    %v821 = vmax.f32 %v817, 0.0
    %v822 = vmax.f32 %v818, 0.0
    %s823 = scalar_lea.vmem [#allocation2], 22
    %v824 = vld [vmem:[%s823] ss:$8 sm:$0x3]
    %v826 = vperm.slane %v824, 0
    %v827 = vperm.slane %v824, 1
    %v830 = vmul.f32 %v826, %v819
    %v831 = vmul.f32 %v827, %v820
    %v832 = vmul.f32 %v826, %v821
    %v833 = vmul.f32 %v827, %v822
    %v834 = vadd.f32 %v786, %v830
    %v835 = vadd.f32 %v787, %v831
    %v836 = vadd.f32 %v788, %v832
    %v837 = vadd.f32 %v789, %v833
    %s838 = scalar_lea.vmem %s2, 480
    %v839 = vld [vmem:[%s838] sm:$0xff]
    %v840 = vld [vmem:[%s838 + $0x8] sm:$0xff]
    %842 = vset.pattern.permute.xlu0 0
    %843 = vperm.xlu0 %842, %v839
    %v844 = vpop.permute.xlu0 %843
    %847 = vset.pattern.permute.xlu0 0
    %848 = vperm.xlu0 %847, %v840
    %v849 = vpop.permute.xlu0 %848
    %v851 = vmul.f32 %v120, %v844
    %v852 = vmul.f32 %v121, %v844
    %v853 = vmul.f32 %v120, %v849
    %v854 = vmul.f32 %v121, %v849
    %855 = vset.pattern.permute.xlu0 1
    %856 = vperm.xlu0 %855, %v839
    %v857 = vpop.permute.xlu0 %856
    %859 = vset.pattern.permute.xlu0 1
    %860 = vperm.xlu0 %859, %v840
    %v861 = vpop.permute.xlu0 %860
    %v863 = vadd.f32 %v851, %v857
    %v864 = vadd.f32 %v852, %v857
    %v865 = vadd.f32 %v853, %v861
    %v866 = vadd.f32 %v854, %v861
    %v867 = vmax.f32 %v863, 0.0
    %v868 = vmax.f32 %v864, 0.0
    %v869 = vmax.f32 %v865, 0.0
    %v870 = vmax.f32 %v866, 0.0
    %s871 = scalar_lea.vmem [#allocation2], 23
    %v872 = vld [vmem:[%s871] ss:$8 sm:$0x3]
    %v874 = vperm.slane %v872, 0
    %v875 = vperm.slane %v872, 1
    %v878 = vmul.f32 %v874, %v867
    %v879 = vmul.f32 %v875, %v868
    %v880 = vmul.f32 %v874, %v869
    %v881 = vmul.f32 %v875, %v870
    %v882 = vadd.f32 %v834, %v878
    %v883 = vadd.f32 %v835, %v879
    %v884 = vadd.f32 %v836, %v880
    %v885 = vadd.f32 %v837, %v881
    %v886 = vld [vmem:[%s3] sm:$0xff]
    %v887 = vld [vmem:[%s3 + $0x8] sm:$0xff]
    %v888 = vld [vmem:[%s3 + $0x10] sm:$0x7]
    %v890 = vsel %vm62, %v18, 0
    %v893 = vsel %vm62, %v19, 0
    %895 = vmatpush.msra.mxu0 0.0
    %896 = vmatpush.msra.mxu0 0.0
    %897 = vmatpush.msra.mxu0 0.0
    %898 = vmatpush.msra.mxu0 0.0
    %899 = vmatpush.msra.mxu0 0.0
    %900 = vmatpush.msra.mxu0 0.0
    %901 = vmatpush.msra.mxu0 0.0
    %902 = vmatpush.msra.mxu0 0.0
    %903 = vmatpush.msra.mxu0 0.0
    %904 = vmatpush.msra.mxu0 0.0
    %905 = vmatpush.msra.mxu0 0.0
    %906 = vmatpush.msra.mxu0 0.0
    %907 = vmatpush.msra.mxu0 0.0
    %908 = vmatpush.msra.mxu0 0.0
    %909 = vmatpush.msra.mxu0 %v887
    %910 = vmatpush.msra.mxu0 %v886
    %911 = vmatmul.f32.gmra.mxu0 %v890
    %v912 = vpop.f32.mrf.mxu0
    %v913 = vadd.f32 0.0, %v912
    %914 = vmatmul.f32.gmra.mxu0 %v893
    %v915 = vpop.f32.mrf.mxu0
    %v916 = vadd.f32 0.0, %v915
    %917 = vdwg.mxu0
    %918 = vmatpush.xpose.msra.mxu0 0.0
    %919 = vmatpush.xpose.msra.mxu0 0.0
    %920 = vmatpush.xpose.msra.mxu0 0.0
    %921 = vmatpush.xpose.msra.mxu0 0.0
    %922 = vmatpush.xpose.msra.mxu0 0.0
    %923 = vmatpush.xpose.msra.mxu0 0.0
    %924 = vmatpush.xpose.msra.mxu0 0.0
    %925 = vmatpush.xpose.msra.mxu0 0.0
    %926 = vmatpush.xpose.msra.mxu0 0.0
    %927 = vmatpush.xpose.msra.mxu0 0.0
    %928 = vmatpush.xpose.msra.mxu0 0.0
    %929 = vmatpush.xpose.msra.mxu0 0.0
    %930 = vmatpush.xpose.msra.mxu0 0.0
    %931 = vmatpush.xpose.msra.mxu0 0.0
    %932 = vmatpush.xpose.msra.mxu0 %v884
    %933 = vmatpush.xpose.msra.mxu0 %v882
    %934 = vmatmul.f32.gmra.mxu0 %v24
    %v935 = vpop.f32.mrf.mxu0
    %v936 = vadd.f32 %v913, %v935
    %937 = vmatmul.f32.gmra.mxu0 %v26
    %v938 = vpop.f32.mrf.mxu0
    %v939 = vadd.f32 %v916, %v938
    %940 = vdwg.mxu0
    %941 = vmatpush.xpose.msra.mxu0 0.0
    %942 = vmatpush.xpose.msra.mxu0 0.0
    %943 = vmatpush.xpose.msra.mxu0 0.0
    %944 = vmatpush.xpose.msra.mxu0 0.0
    %945 = vmatpush.xpose.msra.mxu0 0.0
    %946 = vmatpush.xpose.msra.mxu0 0.0
    %947 = vmatpush.xpose.msra.mxu0 0.0
    %948 = vmatpush.xpose.msra.mxu0 0.0
    %949 = vmatpush.xpose.msra.mxu0 0.0
    %950 = vmatpush.xpose.msra.mxu0 0.0
    %951 = vmatpush.xpose.msra.mxu0 0.0
    %952 = vmatpush.xpose.msra.mxu0 0.0
    %953 = vmatpush.xpose.msra.mxu0 0.0
    %954 = vmatpush.xpose.msra.mxu0 0.0
    %955 = vmatpush.xpose.msra.mxu0 %v885
    %956 = vmatpush.xpose.msra.mxu0 %v883
    %957 = vmatmul.f32.gmra.mxu0 %v25
    %v958 = vpop.f32.mrf.mxu0
    %v959 = vadd.f32 %v936, %v958
    %960 = vmatmul.f32.gmra.mxu0 %v27
    %v961 = vpop.f32.mrf.mxu0
    %v962 = vadd.f32 %v939, %v961
    %963 = vdwg.mxu0
    %v964 = vperm.slane %v888, 0
    %v965 = vadd.f32 %v959, %v964
    %v966 = vadd.f32 %v962, %v964
    %v967 = vperm.slane %v888, 1
    %v968 = vmul.f32 %v965, %v967
    %v969 = vmul.f32 %v966, %v967
    %v970 = vperm.slane %v888, 2
    %v971 = vadd.f32 %v968, %v970
    %v972 = vadd.f32 %v969, %v970
    %v973 = vxor.u32 %v971, 2147483648
    %v974 = vxor.u32 %v972, 2147483648
    %v975 = vmul.f32 %v973, 1.442695
    %v976 = vpow.pop %v975
    %v977 = vmul.f32 %v974, 1.442695
    %v978 = vpow.pop %v977
    %v979 = vadd.f32 %v976, 1.0
    %v980 = vadd.f32 %v978, 1.0
    %v981 = vrcp.pop %v979
    %v982 = vmul.f32 %v979, %v981
    %v983 = vsub.f32 1.0, %v982
    %v984 = vmul.f32 %v981, %v983
    %v985 = vadd.f32 %v981, %v984
    %vm986 = vweird.f32 %v979
    %vm987 = vweird.f32 %v981
    %vm988 = vmor %vm986, %vm987
    %v989 = vsel %vm988, %v981, %v985
    %v990 = vand.u32 2147483647, %v979
    %vm991 = vcmp.eq.f32.partialorder %v990, 8.507059e+37
    %v992 = vand.u32 %v979, 2147483648
    %v993 = vor.u32 1.1754944e-38, %v992
    %v994 = vsel %vm991, %v993, %v989
    %v995 = vmul.f32 1.0, %v994
    %v996 = vrcp.pop %v980
    %v997 = vmul.f32 %v980, %v996
    %v998 = vsub.f32 1.0, %v997
    %v999 = vmul.f32 %v996, %v998
    %v1000 = vadd.f32 %v996, %v999
    %vm1001 = vweird.f32 %v980
    %vm1002 = vweird.f32 %v996
    %vm1003 = vmor %vm1001, %vm1002
    %v1004 = vsel %vm1003, %v996, %v1000
    %v1005 = vand.u32 2147483647, %v980
    %vm1006 = vcmp.eq.f32.partialorder %v1005, 8.507059e+37
    %v1007 = vand.u32 %v980, 2147483648
    %v1008 = vor.u32 1.1754944e-38, %v1007
    %v1009 = vsel %vm1006, %v1008, %v1004
    %v1010 = vmul.f32 1.0, %v1009
    %1011 = vxpose.xlu0.b32.start [1/16] %v995, 128
    %1012 = vxpose.xlu0.b32.cont [2/16] %v1010, 128
    %1013 = vxpose.xlu0.b32.cont [3/16] 0.0, 128
    %1014 = vxpose.xlu0.b32.cont [4/16] 0.0, 128
    %1015 = vxpose.xlu0.b32.cont [5/16] 0.0, 128
    %1016 = vxpose.xlu0.b32.cont [6/16] 0.0, 128
    %1017 = vxpose.xlu0.b32.cont [7/16] 0.0, 128
    %1018 = vxpose.xlu0.b32.cont [8/16] 0.0, 128
    %1019 = vxpose.xlu0.b32.cont [9/16] 0.0, 128
    %1020 = vxpose.xlu0.b32.cont [10/16] 0.0, 128
    %1021 = vxpose.xlu0.b32.cont [11/16] 0.0, 128
    %1022 = vxpose.xlu0.b32.cont [12/16] 0.0, 128
    %1023 = vxpose.xlu0.b32.cont [13/16] 0.0, 128
    %1024 = vxpose.xlu0.b32.cont [14/16] 0.0, 128
    %1025 = vxpose.xlu0.b32.cont [15/16] 0.0, 128
    %1026 = vxpose.xlu0.b32.end [16/16] 0.0, 128
    %v1027 = vpop.trf.xlu0
    %v1028 = vpop.trf.xlu0
    %v1029 = vpop.trf.xlu0
    %v1030 = vpop.trf.xlu0
    %v1031 = vpop.trf.xlu0
    %v1032 = vpop.trf.xlu0
    %v1033 = vpop.trf.xlu0
    %v1034 = vpop.trf.xlu0
    %v1035 = vpop.trf.xlu0
    %v1036 = vpop.trf.xlu0
    %v1037 = vpop.trf.xlu0
    %v1038 = vpop.trf.xlu0
    %v1039 = vpop.trf.xlu0
    %v1040 = vpop.trf.xlu0
    %v1041 = vpop.trf.xlu0
    %v1042 = vpop.trf.xlu0
    %v1044 = vsel %vm62, %v1027, 0
    %v1047 = vsel %vm62, %v1028, 0
    %1049 = vmatpush.msra.mxu0 0.0
    %1050 = vmatpush.msra.mxu0 0.0
    %1051 = vmatpush.msra.mxu0 0.0
    %1052 = vmatpush.msra.mxu0 0.0
    %1053 = vmatpush.msra.mxu0 0.0
    %1054 = vmatpush.msra.mxu0 0.0
    %1055 = vmatpush.msra.mxu0 0.0
    %1056 = vmatpush.msra.mxu0 0.0
    %1057 = vmatpush.msra.mxu0 0.0
    %1058 = vmatpush.msra.mxu0 0.0
    %1059 = vmatpush.msra.mxu0 0.0
    %1060 = vmatpush.msra.mxu0 0.0
    %1061 = vmatpush.msra.mxu0 0.0
    %1062 = vmatpush.msra.mxu0 0.0
    %1063 = vmatpush.msra.mxu0 %v22
    %1064 = vmatpush.msra.mxu0 %v20
    %1065 = vmatmul.f32.gmra.mxu0 %v1044
    %v1066 = vpop.f32.mrf.mxu0
    %v1067 = vadd.f32 0.0, %v1066
    %1068 = vmatmul.f32.gmra.mxu0 %v1047
    %v1069 = vpop.f32.mrf.mxu0
    %v1070 = vadd.f32 0.0, %v1069
    %1071 = vdwg.mxu0
    %1072 = vmatpush.msra.mxu0 0.0
    %1073 = vmatpush.msra.mxu0 0.0
    %1074 = vmatpush.msra.mxu0 0.0
    %1075 = vmatpush.msra.mxu0 0.0
    %1076 = vmatpush.msra.mxu0 0.0
    %1077 = vmatpush.msra.mxu0 0.0
    %1078 = vmatpush.msra.mxu0 0.0
    %1079 = vmatpush.msra.mxu0 0.0
    %1080 = vmatpush.msra.mxu0 0.0
    %1081 = vmatpush.msra.mxu0 0.0
    %1082 = vmatpush.msra.mxu0 0.0
    %1083 = vmatpush.msra.mxu0 0.0
    %1084 = vmatpush.msra.mxu0 0.0
    %1085 = vmatpush.msra.mxu0 0.0
    %1086 = vmatpush.msra.mxu0 %v23
    %1087 = vmatpush.msra.mxu0 %v21
    %1088 = vmatmul.f32.gmra.mxu0 %v1044
    %v1089 = vpop.f32.mrf.mxu0
    %v1090 = vadd.f32 0.0, %v1089
    %1091 = vmatmul.f32.gmra.mxu0 %v1047
    %v1092 = vpop.f32.mrf.mxu0
    %v1093 = vadd.f32 0.0, %v1092
    %1094 = vdwg.mxu0
    %1095 = vst [vmem:[#allocation2] sm:$0xff] %v1067
    %1096 = vst [vmem:[#allocation2 + $0x8] sm:$0xff] %v1090
    %1097 = vst [vmem:[#allocation2 + $0x10] sm:$0xff] %v1070
    %1098 = vst [vmem:[#allocation2 + $0x18] sm:$0xff] %v1093
    %s1099 = scalar_lea.vmem %s2, 512
    %v1100 = vld [vmem:[%s1099] sm:$0xff]
    %v1101 = vld [vmem:[%s1099 + $0x8] sm:$0xff]
    %v1102 = vld [vmem:[%s1099 + $0x10] sm:$0xff]
    %v1103 = vld [vmem:[%s1099 + $0x18] sm:$0xff]
    %1105 = vset.pattern.permute.xlu0 0
    %1106 = vperm.xlu0 %1105, %v1100
    %v1107 = vpop.permute.xlu0 %1106
    %1110 = vset.pattern.permute.xlu0 0
    %1111 = vperm.xlu0 %1110, %v1101
    %v1112 = vpop.permute.xlu0 %1111
    %1115 = vset.pattern.permute.xlu0 0
    %1116 = vperm.xlu0 %1115, %v1102
    %v1117 = vpop.permute.xlu0 %1116
    %1120 = vset.pattern.permute.xlu0 0
    %1121 = vperm.xlu0 %1120, %v1103
    %v1122 = vpop.permute.xlu0 %1121
    %v1124 = vmul.f32 %v120, %v1107
    %v1125 = vmul.f32 %v121, %v1107
    %v1126 = vmul.f32 %v120, %v1112
    %v1127 = vmul.f32 %v121, %v1112
    %v1128 = vmul.f32 %v120, %v1117
    %v1129 = vmul.f32 %v121, %v1117
    %v1130 = vmul.f32 %v120, %v1122
    %v1131 = vmul.f32 %v121, %v1122
    %1132 = vset.pattern.permute.xlu0 1
    %1133 = vperm.xlu0 %1132, %v1100
    %v1134 = vpop.permute.xlu0 %1133
    %1136 = vset.pattern.permute.xlu0 1
    %1137 = vperm.xlu0 %1136, %v1101
    %v1138 = vpop.permute.xlu0 %1137
    %1140 = vset.pattern.permute.xlu0 1
    %1141 = vperm.xlu0 %1140, %v1102
    %v1142 = vpop.permute.xlu0 %1141
    %1144 = vset.pattern.permute.xlu0 1
    %1145 = vperm.xlu0 %1144, %v1103
    %v1146 = vpop.permute.xlu0 %1145
    %v1148 = vadd.f32 %v1124, %v1134
    %v1149 = vadd.f32 %v1125, %v1134
    %v1150 = vadd.f32 %v1126, %v1138
    %v1151 = vadd.f32 %v1127, %v1138
    %v1152 = vadd.f32 %v1128, %v1142
    %v1153 = vadd.f32 %v1129, %v1142
    %v1154 = vadd.f32 %v1130, %v1146
    %v1155 = vadd.f32 %v1131, %v1146
    %v1156 = vmax.f32 %v1148, 0.0
    %v1157 = vmax.f32 %v1149, 0.0
    %v1158 = vmax.f32 %v1150, 0.0
    %v1159 = vmax.f32 %v1151, 0.0
    %v1160 = vmax.f32 %v1152, 0.0
    %v1161 = vmax.f32 %v1153, 0.0
    %v1162 = vmax.f32 %v1154, 0.0
    %v1163 = vmax.f32 %v1155, 0.0
    %v1164 = vld [vmem:[#allocation2] ss:$8 sm:$0x3]
    %v1166 = vperm.slane %v1164, 0
    %v1167 = vperm.slane %v1164, 1
    %v1170 = vmul.f32 %v1166, %v1156
    %v1171 = vmul.f32 %v1167, %v1157
    %v1172 = vmul.f32 %v1166, %v1158
    %v1173 = vmul.f32 %v1167, %v1159
    %v1174 = vmul.f32 %v1166, %v1160
    %v1175 = vmul.f32 %v1167, %v1161
    %v1176 = vmul.f32 %v1166, %v1162
    %v1177 = vmul.f32 %v1167, %v1163
    %s1178 = scalar_lea.vmem %s2, 544
    %v1179 = vld [vmem:[%s1178] sm:$0xff]
    %v1180 = vld [vmem:[%s1178 + $0x8] sm:$0xff]
    %v1181 = vld [vmem:[%s1178 + $0x10] sm:$0xff]
    %v1182 = vld [vmem:[%s1178 + $0x18] sm:$0xff]
    %1184 = vset.pattern.permute.xlu0 0
    %1185 = vperm.xlu0 %1184, %v1179
    %v1186 = vpop.permute.xlu0 %1185
    %1189 = vset.pattern.permute.xlu0 0
    %1190 = vperm.xlu0 %1189, %v1180
    %v1191 = vpop.permute.xlu0 %1190
    %1194 = vset.pattern.permute.xlu0 0
    %1195 = vperm.xlu0 %1194, %v1181
    %v1196 = vpop.permute.xlu0 %1195
    %1199 = vset.pattern.permute.xlu0 0
    %1200 = vperm.xlu0 %1199, %v1182
    %v1201 = vpop.permute.xlu0 %1200
    %v1203 = vmul.f32 %v120, %v1186
    %v1204 = vmul.f32 %v121, %v1186
    %v1205 = vmul.f32 %v120, %v1191
    %v1206 = vmul.f32 %v121, %v1191
    %v1207 = vmul.f32 %v120, %v1196
    %v1208 = vmul.f32 %v121, %v1196
    %v1209 = vmul.f32 %v120, %v1201
    %v1210 = vmul.f32 %v121, %v1201
    %1211 = vset.pattern.permute.xlu0 1
    %1212 = vperm.xlu0 %1211, %v1179
    %v1213 = vpop.permute.xlu0 %1212
    %1215 = vset.pattern.permute.xlu0 1
    %1216 = vperm.xlu0 %1215, %v1180
    %v1217 = vpop.permute.xlu0 %1216
    %1219 = vset.pattern.permute.xlu0 1
    %1220 = vperm.xlu0 %1219, %v1181
    %v1221 = vpop.permute.xlu0 %1220
    %1223 = vset.pattern.permute.xlu0 1
    %1224 = vperm.xlu0 %1223, %v1182
    %v1225 = vpop.permute.xlu0 %1224
    %v1227 = vadd.f32 %v1203, %v1213
    %v1228 = vadd.f32 %v1204, %v1213
    %v1229 = vadd.f32 %v1205, %v1217
    %v1230 = vadd.f32 %v1206, %v1217
    %v1231 = vadd.f32 %v1207, %v1221
    %v1232 = vadd.f32 %v1208, %v1221
    %v1233 = vadd.f32 %v1209, %v1225
    %v1234 = vadd.f32 %v1210, %v1225
    %v1235 = vmax.f32 %v1227, 0.0
    %v1236 = vmax.f32 %v1228, 0.0
    %v1237 = vmax.f32 %v1229, 0.0
    %v1238 = vmax.f32 %v1230, 0.0
    %v1239 = vmax.f32 %v1231, 0.0
    %v1240 = vmax.f32 %v1232, 0.0
    %v1241 = vmax.f32 %v1233, 0.0
    %v1242 = vmax.f32 %v1234, 0.0
    %v1243 = vld [vmem:[%s199] ss:$8 sm:$0x3]
    %v1245 = vperm.slane %v1243, 0
    %v1246 = vperm.slane %v1243, 1
    %v1249 = vmul.f32 %v1245, %v1235
    %v1250 = vmul.f32 %v1246, %v1236
    %v1251 = vmul.f32 %v1245, %v1237
    %v1252 = vmul.f32 %v1246, %v1238
    %v1253 = vmul.f32 %v1245, %v1239
    %v1254 = vmul.f32 %v1246, %v1240
    %v1255 = vmul.f32 %v1245, %v1241
    %v1256 = vmul.f32 %v1246, %v1242
    %v1257 = vadd.f32 %v1170, %v1249
    %v1258 = vadd.f32 %v1171, %v1250
    %v1259 = vadd.f32 %v1172, %v1251
    %v1260 = vadd.f32 %v1173, %v1252
    %v1261 = vadd.f32 %v1174, %v1253
    %v1262 = vadd.f32 %v1175, %v1254
    %v1263 = vadd.f32 %v1176, %v1255
    %v1264 = vadd.f32 %v1177, %v1256
    %s1265 = scalar_lea.vmem %s2, 576
    %v1266 = vld [vmem:[%s1265] sm:$0xff]
    %v1267 = vld [vmem:[%s1265 + $0x8] sm:$0xff]
    %v1268 = vld [vmem:[%s1265 + $0x10] sm:$0xff]
    %v1269 = vld [vmem:[%s1265 + $0x18] sm:$0xff]
    %1271 = vset.pattern.permute.xlu0 0
    %1272 = vperm.xlu0 %1271, %v1266
    %v1273 = vpop.permute.xlu0 %1272
    %1276 = vset.pattern.permute.xlu0 0
    %1277 = vperm.xlu0 %1276, %v1267
    %v1278 = vpop.permute.xlu0 %1277
    %1281 = vset.pattern.permute.xlu0 0
    %1282 = vperm.xlu0 %1281, %v1268
    %v1283 = vpop.permute.xlu0 %1282
    %1286 = vset.pattern.permute.xlu0 0
    %1287 = vperm.xlu0 %1286, %v1269
    %v1288 = vpop.permute.xlu0 %1287
    %v1290 = vmul.f32 %v120, %v1273
    %v1291 = vmul.f32 %v121, %v1273
    %v1292 = vmul.f32 %v120, %v1278
    %v1293 = vmul.f32 %v121, %v1278
    %v1294 = vmul.f32 %v120, %v1283
    %v1295 = vmul.f32 %v121, %v1283
    %v1296 = vmul.f32 %v120, %v1288
    %v1297 = vmul.f32 %v121, %v1288
    %1298 = vset.pattern.permute.xlu0 1
    %1299 = vperm.xlu0 %1298, %v1266
    %v1300 = vpop.permute.xlu0 %1299
    %1302 = vset.pattern.permute.xlu0 1
    %1303 = vperm.xlu0 %1302, %v1267
    %v1304 = vpop.permute.xlu0 %1303
    %1306 = vset.pattern.permute.xlu0 1
    %1307 = vperm.xlu0 %1306, %v1268
    %v1308 = vpop.permute.xlu0 %1307
    %1310 = vset.pattern.permute.xlu0 1
    %1311 = vperm.xlu0 %1310, %v1269
    %v1312 = vpop.permute.xlu0 %1311
    %v1314 = vadd.f32 %v1290, %v1300
    %v1315 = vadd.f32 %v1291, %v1300
    %v1316 = vadd.f32 %v1292, %v1304
    %v1317 = vadd.f32 %v1293, %v1304
    %v1318 = vadd.f32 %v1294, %v1308
    %v1319 = vadd.f32 %v1295, %v1308
    %v1320 = vadd.f32 %v1296, %v1312
    %v1321 = vadd.f32 %v1297, %v1312
    %v1322 = vmax.f32 %v1314, 0.0
    %v1323 = vmax.f32 %v1315, 0.0
    %v1324 = vmax.f32 %v1316, 0.0
    %v1325 = vmax.f32 %v1317, 0.0
    %v1326 = vmax.f32 %v1318, 0.0
    %v1327 = vmax.f32 %v1319, 0.0
    %v1328 = vmax.f32 %v1320, 0.0
    %v1329 = vmax.f32 %v1321, 0.0
    %v1330 = vld [vmem:[%s247] ss:$8 sm:$0x3]
    %v1332 = vperm.slane %v1330, 0
    %v1333 = vperm.slane %v1330, 1
    %v1336 = vmul.f32 %v1332, %v1322
    %v1337 = vmul.f32 %v1333, %v1323
    %v1338 = vmul.f32 %v1332, %v1324
    %v1339 = vmul.f32 %v1333, %v1325
    %v1340 = vmul.f32 %v1332, %v1326
    %v1341 = vmul.f32 %v1333, %v1327
    %v1342 = vmul.f32 %v1332, %v1328
    %v1343 = vmul.f32 %v1333, %v1329
    %v1344 = vadd.f32 %v1257, %v1336
    %v1345 = vadd.f32 %v1258, %v1337
    %v1346 = vadd.f32 %v1259, %v1338
    %v1347 = vadd.f32 %v1260, %v1339
    %v1348 = vadd.f32 %v1261, %v1340
    %v1349 = vadd.f32 %v1262, %v1341
    %v1350 = vadd.f32 %v1263, %v1342
    %v1351 = vadd.f32 %v1264, %v1343
    %s1352 = scalar_lea.vmem %s2, 608
    %v1353 = vld [vmem:[%s1352] sm:$0xff]
    %v1354 = vld [vmem:[%s1352 + $0x8] sm:$0xff]
    %v1355 = vld [vmem:[%s1352 + $0x10] sm:$0xff]
    %v1356 = vld [vmem:[%s1352 + $0x18] sm:$0xff]
    %1358 = vset.pattern.permute.xlu0 0
    %1359 = vperm.xlu0 %1358, %v1353
    %v1360 = vpop.permute.xlu0 %1359
    %1363 = vset.pattern.permute.xlu0 0
    %1364 = vperm.xlu0 %1363, %v1354
    %v1365 = vpop.permute.xlu0 %1364
    %1368 = vset.pattern.permute.xlu0 0
    %1369 = vperm.xlu0 %1368, %v1355
    %v1370 = vpop.permute.xlu0 %1369
    %1373 = vset.pattern.permute.xlu0 0
    %1374 = vperm.xlu0 %1373, %v1356
    %v1375 = vpop.permute.xlu0 %1374
    %v1377 = vmul.f32 %v120, %v1360
    %v1378 = vmul.f32 %v121, %v1360
    %v1379 = vmul.f32 %v120, %v1365
    %v1380 = vmul.f32 %v121, %v1365
    %v1381 = vmul.f32 %v120, %v1370
    %v1382 = vmul.f32 %v121, %v1370
    %v1383 = vmul.f32 %v120, %v1375
    %v1384 = vmul.f32 %v121, %v1375
    %1385 = vset.pattern.permute.xlu0 1
    %1386 = vperm.xlu0 %1385, %v1353
    %v1387 = vpop.permute.xlu0 %1386
    %1389 = vset.pattern.permute.xlu0 1
    %1390 = vperm.xlu0 %1389, %v1354
    %v1391 = vpop.permute.xlu0 %1390
    %1393 = vset.pattern.permute.xlu0 1
    %1394 = vperm.xlu0 %1393, %v1355
    %v1395 = vpop.permute.xlu0 %1394
    %1397 = vset.pattern.permute.xlu0 1
    %1398 = vperm.xlu0 %1397, %v1356
    %v1399 = vpop.permute.xlu0 %1398
    %v1401 = vadd.f32 %v1377, %v1387
    %v1402 = vadd.f32 %v1378, %v1387
    %v1403 = vadd.f32 %v1379, %v1391
    %v1404 = vadd.f32 %v1380, %v1391
    %v1405 = vadd.f32 %v1381, %v1395
    %v1406 = vadd.f32 %v1382, %v1395
    %v1407 = vadd.f32 %v1383, %v1399
    %v1408 = vadd.f32 %v1384, %v1399
    %v1409 = vmax.f32 %v1401, 0.0
    %v1410 = vmax.f32 %v1402, 0.0
    %v1411 = vmax.f32 %v1403, 0.0
    %v1412 = vmax.f32 %v1404, 0.0
    %v1413 = vmax.f32 %v1405, 0.0
    %v1414 = vmax.f32 %v1406, 0.0
    %v1415 = vmax.f32 %v1407, 0.0
    %v1416 = vmax.f32 %v1408, 0.0
    %v1417 = vld [vmem:[%s295] ss:$8 sm:$0x3]
    %v1419 = vperm.slane %v1417, 0
    %v1420 = vperm.slane %v1417, 1
    %v1423 = vmul.f32 %v1419, %v1409
    %v1424 = vmul.f32 %v1420, %v1410
    %v1425 = vmul.f32 %v1419, %v1411
    %v1426 = vmul.f32 %v1420, %v1412
    %v1427 = vmul.f32 %v1419, %v1413
    %v1428 = vmul.f32 %v1420, %v1414
    %v1429 = vmul.f32 %v1419, %v1415
    %v1430 = vmul.f32 %v1420, %v1416
    %v1431 = vadd.f32 %v1344, %v1423
    %v1432 = vadd.f32 %v1345, %v1424
    %v1433 = vadd.f32 %v1346, %v1425
    %v1434 = vadd.f32 %v1347, %v1426
    %v1435 = vadd.f32 %v1348, %v1427
    %v1436 = vadd.f32 %v1349, %v1428
    %v1437 = vadd.f32 %v1350, %v1429
    %v1438 = vadd.f32 %v1351, %v1430
    %s1439 = scalar_lea.vmem %s2, 640
    %v1440 = vld [vmem:[%s1439] sm:$0xff]
    %v1441 = vld [vmem:[%s1439 + $0x8] sm:$0xff]
    %v1442 = vld [vmem:[%s1439 + $0x10] sm:$0xff]
    %v1443 = vld [vmem:[%s1439 + $0x18] sm:$0xff]
    %1445 = vset.pattern.permute.xlu0 0
    %1446 = vperm.xlu0 %1445, %v1440
    %v1447 = vpop.permute.xlu0 %1446
    %1450 = vset.pattern.permute.xlu0 0
    %1451 = vperm.xlu0 %1450, %v1441
    %v1452 = vpop.permute.xlu0 %1451
    %1455 = vset.pattern.permute.xlu0 0
    %1456 = vperm.xlu0 %1455, %v1442
    %v1457 = vpop.permute.xlu0 %1456
    %1460 = vset.pattern.permute.xlu0 0
    %1461 = vperm.xlu0 %1460, %v1443
    %v1462 = vpop.permute.xlu0 %1461
    %v1464 = vmul.f32 %v120, %v1447
    %v1465 = vmul.f32 %v121, %v1447
    %v1466 = vmul.f32 %v120, %v1452
    %v1467 = vmul.f32 %v121, %v1452
    %v1468 = vmul.f32 %v120, %v1457
    %v1469 = vmul.f32 %v121, %v1457
    %v1470 = vmul.f32 %v120, %v1462
    %v1471 = vmul.f32 %v121, %v1462
    %1472 = vset.pattern.permute.xlu0 1
    %1473 = vperm.xlu0 %1472, %v1440
    %v1474 = vpop.permute.xlu0 %1473
    %1476 = vset.pattern.permute.xlu0 1
    %1477 = vperm.xlu0 %1476, %v1441
    %v1478 = vpop.permute.xlu0 %1477
    %1480 = vset.pattern.permute.xlu0 1
    %1481 = vperm.xlu0 %1480, %v1442
    %v1482 = vpop.permute.xlu0 %1481
    %1484 = vset.pattern.permute.xlu0 1
    %1485 = vperm.xlu0 %1484, %v1443
    %v1486 = vpop.permute.xlu0 %1485
    %v1488 = vadd.f32 %v1464, %v1474
    %v1489 = vadd.f32 %v1465, %v1474
    %v1490 = vadd.f32 %v1466, %v1478
    %v1491 = vadd.f32 %v1467, %v1478
    %v1492 = vadd.f32 %v1468, %v1482
    %v1493 = vadd.f32 %v1469, %v1482
    %v1494 = vadd.f32 %v1470, %v1486
    %v1495 = vadd.f32 %v1471, %v1486
    %v1496 = vmax.f32 %v1488, 0.0
    %v1497 = vmax.f32 %v1489, 0.0
    %v1498 = vmax.f32 %v1490, 0.0
    %v1499 = vmax.f32 %v1491, 0.0
    %v1500 = vmax.f32 %v1492, 0.0
    %v1501 = vmax.f32 %v1493, 0.0
    %v1502 = vmax.f32 %v1494, 0.0
    %v1503 = vmax.f32 %v1495, 0.0
    %v1504 = vld [vmem:[%s343] ss:$8 sm:$0x3]
    %v1506 = vperm.slane %v1504, 0
    %v1507 = vperm.slane %v1504, 1
    %v1510 = vmul.f32 %v1506, %v1496
    %v1511 = vmul.f32 %v1507, %v1497
    %v1512 = vmul.f32 %v1506, %v1498
    %v1513 = vmul.f32 %v1507, %v1499
    %v1514 = vmul.f32 %v1506, %v1500
    %v1515 = vmul.f32 %v1507, %v1501
    %v1516 = vmul.f32 %v1506, %v1502
    %v1517 = vmul.f32 %v1507, %v1503
    %v1518 = vadd.f32 %v1431, %v1510
    %v1519 = vadd.f32 %v1432, %v1511
    %v1520 = vadd.f32 %v1433, %v1512
    %v1521 = vadd.f32 %v1434, %v1513
    %v1522 = vadd.f32 %v1435, %v1514
    %v1523 = vadd.f32 %v1436, %v1515
    %v1524 = vadd.f32 %v1437, %v1516
    %v1525 = vadd.f32 %v1438, %v1517
    %s1526 = scalar_lea.vmem %s2, 672
    %v1527 = vld [vmem:[%s1526] sm:$0xff]
    %v1528 = vld [vmem:[%s1526 + $0x8] sm:$0xff]
    %v1529 = vld [vmem:[%s1526 + $0x10] sm:$0xff]
    %v1530 = vld [vmem:[%s1526 + $0x18] sm:$0xff]
    %1532 = vset.pattern.permute.xlu0 0
    %1533 = vperm.xlu0 %1532, %v1527
    %v1534 = vpop.permute.xlu0 %1533
    %1537 = vset.pattern.permute.xlu0 0
    %1538 = vperm.xlu0 %1537, %v1528
    %v1539 = vpop.permute.xlu0 %1538
    %1542 = vset.pattern.permute.xlu0 0
    %1543 = vperm.xlu0 %1542, %v1529
    %v1544 = vpop.permute.xlu0 %1543
    %1547 = vset.pattern.permute.xlu0 0
    %1548 = vperm.xlu0 %1547, %v1530
    %v1549 = vpop.permute.xlu0 %1548
    %v1551 = vmul.f32 %v120, %v1534
    %v1552 = vmul.f32 %v121, %v1534
    %v1553 = vmul.f32 %v120, %v1539
    %v1554 = vmul.f32 %v121, %v1539
    %v1555 = vmul.f32 %v120, %v1544
    %v1556 = vmul.f32 %v121, %v1544
    %v1557 = vmul.f32 %v120, %v1549
    %v1558 = vmul.f32 %v121, %v1549
    %1559 = vset.pattern.permute.xlu0 1
    %1560 = vperm.xlu0 %1559, %v1527
    %v1561 = vpop.permute.xlu0 %1560
    %1563 = vset.pattern.permute.xlu0 1
    %1564 = vperm.xlu0 %1563, %v1528
    %v1565 = vpop.permute.xlu0 %1564
    %1567 = vset.pattern.permute.xlu0 1
    %1568 = vperm.xlu0 %1567, %v1529
    %v1569 = vpop.permute.xlu0 %1568
    %1571 = vset.pattern.permute.xlu0 1
    %1572 = vperm.xlu0 %1571, %v1530
    %v1573 = vpop.permute.xlu0 %1572
    %v1575 = vadd.f32 %v1551, %v1561
    %v1576 = vadd.f32 %v1552, %v1561
    %v1577 = vadd.f32 %v1553, %v1565
    %v1578 = vadd.f32 %v1554, %v1565
    %v1579 = vadd.f32 %v1555, %v1569
    %v1580 = vadd.f32 %v1556, %v1569
    %v1581 = vadd.f32 %v1557, %v1573
    %v1582 = vadd.f32 %v1558, %v1573
    %v1583 = vmax.f32 %v1575, 0.0
    %v1584 = vmax.f32 %v1576, 0.0
    %v1585 = vmax.f32 %v1577, 0.0
    %v1586 = vmax.f32 %v1578, 0.0
    %v1587 = vmax.f32 %v1579, 0.0
    %v1588 = vmax.f32 %v1580, 0.0
    %v1589 = vmax.f32 %v1581, 0.0
    %v1590 = vmax.f32 %v1582, 0.0
    %v1591 = vld [vmem:[%s391] ss:$8 sm:$0x3]
    %v1593 = vperm.slane %v1591, 0
    %v1594 = vperm.slane %v1591, 1
    %v1597 = vmul.f32 %v1593, %v1583
    %v1598 = vmul.f32 %v1594, %v1584
    %v1599 = vmul.f32 %v1593, %v1585
    %v1600 = vmul.f32 %v1594, %v1586
    %v1601 = vmul.f32 %v1593, %v1587
    %v1602 = vmul.f32 %v1594, %v1588
    %v1603 = vmul.f32 %v1593, %v1589
    %v1604 = vmul.f32 %v1594, %v1590
    %v1605 = vadd.f32 %v1518, %v1597
    %v1606 = vadd.f32 %v1519, %v1598
    %v1607 = vadd.f32 %v1520, %v1599
    %v1608 = vadd.f32 %v1521, %v1600
    %v1609 = vadd.f32 %v1522, %v1601
    %v1610 = vadd.f32 %v1523, %v1602
    %v1611 = vadd.f32 %v1524, %v1603
    %v1612 = vadd.f32 %v1525, %v1604
    %s1613 = scalar_lea.vmem %s2, 704
    %v1614 = vld [vmem:[%s1613] sm:$0xff]
    %v1615 = vld [vmem:[%s1613 + $0x8] sm:$0xff]
    %v1616 = vld [vmem:[%s1613 + $0x10] sm:$0xff]
    %v1617 = vld [vmem:[%s1613 + $0x18] sm:$0xff]
    %1619 = vset.pattern.permute.xlu0 0
    %1620 = vperm.xlu0 %1619, %v1614
    %v1621 = vpop.permute.xlu0 %1620
    %1624 = vset.pattern.permute.xlu0 0
    %1625 = vperm.xlu0 %1624, %v1615
    %v1626 = vpop.permute.xlu0 %1625
    %1629 = vset.pattern.permute.xlu0 0
    %1630 = vperm.xlu0 %1629, %v1616
    %v1631 = vpop.permute.xlu0 %1630
    %1634 = vset.pattern.permute.xlu0 0
    %1635 = vperm.xlu0 %1634, %v1617
    %v1636 = vpop.permute.xlu0 %1635
    %v1638 = vmul.f32 %v120, %v1621
    %v1639 = vmul.f32 %v121, %v1621
    %v1640 = vmul.f32 %v120, %v1626
    %v1641 = vmul.f32 %v121, %v1626
    %v1642 = vmul.f32 %v120, %v1631
    %v1643 = vmul.f32 %v121, %v1631
    %v1644 = vmul.f32 %v120, %v1636
    %v1645 = vmul.f32 %v121, %v1636
    %1646 = vset.pattern.permute.xlu0 1
    %1647 = vperm.xlu0 %1646, %v1614
    %v1648 = vpop.permute.xlu0 %1647
    %1650 = vset.pattern.permute.xlu0 1
    %1651 = vperm.xlu0 %1650, %v1615
    %v1652 = vpop.permute.xlu0 %1651
    %1654 = vset.pattern.permute.xlu0 1
    %1655 = vperm.xlu0 %1654, %v1616
    %v1656 = vpop.permute.xlu0 %1655
    %1658 = vset.pattern.permute.xlu0 1
    %1659 = vperm.xlu0 %1658, %v1617
    %v1660 = vpop.permute.xlu0 %1659
    %v1662 = vadd.f32 %v1638, %v1648
    %v1663 = vadd.f32 %v1639, %v1648
    %v1664 = vadd.f32 %v1640, %v1652
    %v1665 = vadd.f32 %v1641, %v1652
    %v1666 = vadd.f32 %v1642, %v1656
    %v1667 = vadd.f32 %v1643, %v1656
    %v1668 = vadd.f32 %v1644, %v1660
    %v1669 = vadd.f32 %v1645, %v1660
    %v1670 = vmax.f32 %v1662, 0.0
    %v1671 = vmax.f32 %v1663, 0.0
    %v1672 = vmax.f32 %v1664, 0.0
    %v1673 = vmax.f32 %v1665, 0.0
    %v1674 = vmax.f32 %v1666, 0.0
    %v1675 = vmax.f32 %v1667, 0.0
    %v1676 = vmax.f32 %v1668, 0.0
    %v1677 = vmax.f32 %v1669, 0.0
    %v1678 = vld [vmem:[%s439] ss:$8 sm:$0x3]
    %v1680 = vperm.slane %v1678, 0
    %v1681 = vperm.slane %v1678, 1
    %v1684 = vmul.f32 %v1680, %v1670
    %v1685 = vmul.f32 %v1681, %v1671
    %v1686 = vmul.f32 %v1680, %v1672
    %v1687 = vmul.f32 %v1681, %v1673
    %v1688 = vmul.f32 %v1680, %v1674
    %v1689 = vmul.f32 %v1681, %v1675
    %v1690 = vmul.f32 %v1680, %v1676
    %v1691 = vmul.f32 %v1681, %v1677
    %v1692 = vadd.f32 %v1605, %v1684
    %v1693 = vadd.f32 %v1606, %v1685
    %v1694 = vadd.f32 %v1607, %v1686
    %v1695 = vadd.f32 %v1608, %v1687
    %v1696 = vadd.f32 %v1609, %v1688
    %v1697 = vadd.f32 %v1610, %v1689
    %v1698 = vadd.f32 %v1611, %v1690
    %v1699 = vadd.f32 %v1612, %v1691
    %s1700 = scalar_lea.vmem %s2, 736
    %v1701 = vld [vmem:[%s1700] sm:$0xff]
    %v1702 = vld [vmem:[%s1700 + $0x8] sm:$0xff]
    %v1703 = vld [vmem:[%s1700 + $0x10] sm:$0xff]
    %v1704 = vld [vmem:[%s1700 + $0x18] sm:$0xff]
    %1706 = vset.pattern.permute.xlu0 0
    %1707 = vperm.xlu0 %1706, %v1701
    %v1708 = vpop.permute.xlu0 %1707
    %1711 = vset.pattern.permute.xlu0 0
    %1712 = vperm.xlu0 %1711, %v1702
    %v1713 = vpop.permute.xlu0 %1712
    %1716 = vset.pattern.permute.xlu0 0
    %1717 = vperm.xlu0 %1716, %v1703
    %v1718 = vpop.permute.xlu0 %1717
    %1721 = vset.pattern.permute.xlu0 0
    %1722 = vperm.xlu0 %1721, %v1704
    %v1723 = vpop.permute.xlu0 %1722
    %v1725 = vmul.f32 %v120, %v1708
    %v1726 = vmul.f32 %v121, %v1708
    %v1727 = vmul.f32 %v120, %v1713
    %v1728 = vmul.f32 %v121, %v1713
    %v1729 = vmul.f32 %v120, %v1718
    %v1730 = vmul.f32 %v121, %v1718
    %v1731 = vmul.f32 %v120, %v1723
    %v1732 = vmul.f32 %v121, %v1723
    %1733 = vset.pattern.permute.xlu0 1
    %1734 = vperm.xlu0 %1733, %v1701
    %v1735 = vpop.permute.xlu0 %1734
    %1737 = vset.pattern.permute.xlu0 1
    %1738 = vperm.xlu0 %1737, %v1702
    %v1739 = vpop.permute.xlu0 %1738
    %1741 = vset.pattern.permute.xlu0 1
    %1742 = vperm.xlu0 %1741, %v1703
    %v1743 = vpop.permute.xlu0 %1742
    %1745 = vset.pattern.permute.xlu0 1
    %1746 = vperm.xlu0 %1745, %v1704
    %v1747 = vpop.permute.xlu0 %1746
    %v1749 = vadd.f32 %v1725, %v1735
    %v1750 = vadd.f32 %v1726, %v1735
    %v1751 = vadd.f32 %v1727, %v1739
    %v1752 = vadd.f32 %v1728, %v1739
    %v1753 = vadd.f32 %v1729, %v1743
    %v1754 = vadd.f32 %v1730, %v1743
    %v1755 = vadd.f32 %v1731, %v1747
    %v1756 = vadd.f32 %v1732, %v1747
    %v1757 = vmax.f32 %v1749, 0.0
    %v1758 = vmax.f32 %v1750, 0.0
    %v1759 = vmax.f32 %v1751, 0.0
    %v1760 = vmax.f32 %v1752, 0.0
    %v1761 = vmax.f32 %v1753, 0.0
    %v1762 = vmax.f32 %v1754, 0.0
    %v1763 = vmax.f32 %v1755, 0.0
    %v1764 = vmax.f32 %v1756, 0.0
    %v1765 = vld [vmem:[%s487] ss:$8 sm:$0x3]
    %v1767 = vperm.slane %v1765, 0
    %v1768 = vperm.slane %v1765, 1
    %v1771 = vmul.f32 %v1767, %v1757
    %v1772 = vmul.f32 %v1768, %v1758
    %v1773 = vmul.f32 %v1767, %v1759
    %v1774 = vmul.f32 %v1768, %v1760
    %v1775 = vmul.f32 %v1767, %v1761
    %v1776 = vmul.f32 %v1768, %v1762
    %v1777 = vmul.f32 %v1767, %v1763
    %v1778 = vmul.f32 %v1768, %v1764
    %v1779 = vadd.f32 %v1692, %v1771
    %v1780 = vadd.f32 %v1693, %v1772
    %v1781 = vadd.f32 %v1694, %v1773
    %v1782 = vadd.f32 %v1695, %v1774
    %v1783 = vadd.f32 %v1696, %v1775
    %v1784 = vadd.f32 %v1697, %v1776
    %v1785 = vadd.f32 %v1698, %v1777
    %v1786 = vadd.f32 %v1699, %v1778
    %s1787 = scalar_lea.vmem %s2, 768
    %v1788 = vld [vmem:[%s1787] sm:$0xff]
    %v1789 = vld [vmem:[%s1787 + $0x8] sm:$0xff]
    %v1790 = vld [vmem:[%s1787 + $0x10] sm:$0xff]
    %v1791 = vld [vmem:[%s1787 + $0x18] sm:$0xff]
    %1793 = vset.pattern.permute.xlu0 0
    %1794 = vperm.xlu0 %1793, %v1788
    %v1795 = vpop.permute.xlu0 %1794
    %1798 = vset.pattern.permute.xlu0 0
    %1799 = vperm.xlu0 %1798, %v1789
    %v1800 = vpop.permute.xlu0 %1799
    %1803 = vset.pattern.permute.xlu0 0
    %1804 = vperm.xlu0 %1803, %v1790
    %v1805 = vpop.permute.xlu0 %1804
    %1808 = vset.pattern.permute.xlu0 0
    %1809 = vperm.xlu0 %1808, %v1791
    %v1810 = vpop.permute.xlu0 %1809
    %v1812 = vmul.f32 %v120, %v1795
    %v1813 = vmul.f32 %v121, %v1795
    %v1814 = vmul.f32 %v120, %v1800
    %v1815 = vmul.f32 %v121, %v1800
    %v1816 = vmul.f32 %v120, %v1805
    %v1817 = vmul.f32 %v121, %v1805
    %v1818 = vmul.f32 %v120, %v1810
    %v1819 = vmul.f32 %v121, %v1810
    %1820 = vset.pattern.permute.xlu0 1
    %1821 = vperm.xlu0 %1820, %v1788
    %v1822 = vpop.permute.xlu0 %1821
    %1824 = vset.pattern.permute.xlu0 1
    %1825 = vperm.xlu0 %1824, %v1789
    %v1826 = vpop.permute.xlu0 %1825
    %1828 = vset.pattern.permute.xlu0 1
    %1829 = vperm.xlu0 %1828, %v1790
    %v1830 = vpop.permute.xlu0 %1829
    %1832 = vset.pattern.permute.xlu0 1
    %1833 = vperm.xlu0 %1832, %v1791
    %v1834 = vpop.permute.xlu0 %1833
    %v1836 = vadd.f32 %v1812, %v1822
    %v1837 = vadd.f32 %v1813, %v1822
    %v1838 = vadd.f32 %v1814, %v1826
    %v1839 = vadd.f32 %v1815, %v1826
    %v1840 = vadd.f32 %v1816, %v1830
    %v1841 = vadd.f32 %v1817, %v1830
    %v1842 = vadd.f32 %v1818, %v1834
    %v1843 = vadd.f32 %v1819, %v1834
    %v1844 = vmax.f32 %v1836, 0.0
    %v1845 = vmax.f32 %v1837, 0.0
    %v1846 = vmax.f32 %v1838, 0.0
    %v1847 = vmax.f32 %v1839, 0.0
    %v1848 = vmax.f32 %v1840, 0.0
    %v1849 = vmax.f32 %v1841, 0.0
    %v1850 = vmax.f32 %v1842, 0.0
    %v1851 = vmax.f32 %v1843, 0.0
    %v1852 = vld [vmem:[%s535] ss:$8 sm:$0x3]
    %v1854 = vperm.slane %v1852, 0
    %v1855 = vperm.slane %v1852, 1
    %v1858 = vmul.f32 %v1854, %v1844
    %v1859 = vmul.f32 %v1855, %v1845
    %v1860 = vmul.f32 %v1854, %v1846
    %v1861 = vmul.f32 %v1855, %v1847
    %v1862 = vmul.f32 %v1854, %v1848
    %v1863 = vmul.f32 %v1855, %v1849
    %v1864 = vmul.f32 %v1854, %v1850
    %v1865 = vmul.f32 %v1855, %v1851
    %v1866 = vadd.f32 %v1779, %v1858
    %v1867 = vadd.f32 %v1780, %v1859
    %v1868 = vadd.f32 %v1781, %v1860
    %v1869 = vadd.f32 %v1782, %v1861
    %v1870 = vadd.f32 %v1783, %v1862
    %v1871 = vadd.f32 %v1784, %v1863
    %v1872 = vadd.f32 %v1785, %v1864
    %v1873 = vadd.f32 %v1786, %v1865
    %s1874 = scalar_lea.vmem %s2, 800
    %v1875 = vld [vmem:[%s1874] sm:$0xff]
    %v1876 = vld [vmem:[%s1874 + $0x8] sm:$0xff]
    %v1877 = vld [vmem:[%s1874 + $0x10] sm:$0xff]
    %v1878 = vld [vmem:[%s1874 + $0x18] sm:$0xff]
    %1880 = vset.pattern.permute.xlu0 0
    %1881 = vperm.xlu0 %1880, %v1875
    %v1882 = vpop.permute.xlu0 %1881
    %1885 = vset.pattern.permute.xlu0 0
    %1886 = vperm.xlu0 %1885, %v1876
    %v1887 = vpop.permute.xlu0 %1886
    %1890 = vset.pattern.permute.xlu0 0
    %1891 = vperm.xlu0 %1890, %v1877
    %v1892 = vpop.permute.xlu0 %1891
    %1895 = vset.pattern.permute.xlu0 0
    %1896 = vperm.xlu0 %1895, %v1878
    %v1897 = vpop.permute.xlu0 %1896
    %v1899 = vmul.f32 %v120, %v1882
    %v1900 = vmul.f32 %v121, %v1882
    %v1901 = vmul.f32 %v120, %v1887
    %v1902 = vmul.f32 %v121, %v1887
    %v1903 = vmul.f32 %v120, %v1892
    %v1904 = vmul.f32 %v121, %v1892
    %v1905 = vmul.f32 %v120, %v1897
    %v1906 = vmul.f32 %v121, %v1897
    %1907 = vset.pattern.permute.xlu0 1
    %1908 = vperm.xlu0 %1907, %v1875
    %v1909 = vpop.permute.xlu0 %1908
    %1911 = vset.pattern.permute.xlu0 1
    %1912 = vperm.xlu0 %1911, %v1876
    %v1913 = vpop.permute.xlu0 %1912
    %1915 = vset.pattern.permute.xlu0 1
    %1916 = vperm.xlu0 %1915, %v1877
    %v1917 = vpop.permute.xlu0 %1916
    %1919 = vset.pattern.permute.xlu0 1
    %1920 = vperm.xlu0 %1919, %v1878
    %v1921 = vpop.permute.xlu0 %1920
    %v1923 = vadd.f32 %v1899, %v1909
    %v1924 = vadd.f32 %v1900, %v1909
    %v1925 = vadd.f32 %v1901, %v1913
    %v1926 = vadd.f32 %v1902, %v1913
    %v1927 = vadd.f32 %v1903, %v1917
    %v1928 = vadd.f32 %v1904, %v1917
    %v1929 = vadd.f32 %v1905, %v1921
    %v1930 = vadd.f32 %v1906, %v1921
    %v1931 = vmax.f32 %v1923, 0.0
    %v1932 = vmax.f32 %v1924, 0.0
    %v1933 = vmax.f32 %v1925, 0.0
    %v1934 = vmax.f32 %v1926, 0.0
    %v1935 = vmax.f32 %v1927, 0.0
    %v1936 = vmax.f32 %v1928, 0.0
    %v1937 = vmax.f32 %v1929, 0.0
    %v1938 = vmax.f32 %v1930, 0.0
    %v1939 = vld [vmem:[%s583] ss:$8 sm:$0x3]
    %v1941 = vperm.slane %v1939, 0
    %v1942 = vperm.slane %v1939, 1
    %v1945 = vmul.f32 %v1941, %v1931
    %v1946 = vmul.f32 %v1942, %v1932
    %v1947 = vmul.f32 %v1941, %v1933
    %v1948 = vmul.f32 %v1942, %v1934
    %v1949 = vmul.f32 %v1941, %v1935
    %v1950 = vmul.f32 %v1942, %v1936
    %v1951 = vmul.f32 %v1941, %v1937
    %v1952 = vmul.f32 %v1942, %v1938
    %v1953 = vadd.f32 %v1866, %v1945
    %v1954 = vadd.f32 %v1867, %v1946
    %v1955 = vadd.f32 %v1868, %v1947
    %v1956 = vadd.f32 %v1869, %v1948
    %v1957 = vadd.f32 %v1870, %v1949
    %v1958 = vadd.f32 %v1871, %v1950
    %v1959 = vadd.f32 %v1872, %v1951
    %v1960 = vadd.f32 %v1873, %v1952
    %s1961 = scalar_lea.vmem %s2, 832
    %v1962 = vld [vmem:[%s1961] sm:$0xff]
    %v1963 = vld [vmem:[%s1961 + $0x8] sm:$0xff]
    %v1964 = vld [vmem:[%s1961 + $0x10] sm:$0xff]
    %v1965 = vld [vmem:[%s1961 + $0x18] sm:$0xff]
    %1967 = vset.pattern.permute.xlu0 0
    %1968 = vperm.xlu0 %1967, %v1962
    %v1969 = vpop.permute.xlu0 %1968
    %1972 = vset.pattern.permute.xlu0 0
    %1973 = vperm.xlu0 %1972, %v1963
    %v1974 = vpop.permute.xlu0 %1973
    %1977 = vset.pattern.permute.xlu0 0
    %1978 = vperm.xlu0 %1977, %v1964
    %v1979 = vpop.permute.xlu0 %1978
    %1982 = vset.pattern.permute.xlu0 0
    %1983 = vperm.xlu0 %1982, %v1965
    %v1984 = vpop.permute.xlu0 %1983
    %v1986 = vmul.f32 %v120, %v1969
    %v1987 = vmul.f32 %v121, %v1969
    %v1988 = vmul.f32 %v120, %v1974
    %v1989 = vmul.f32 %v121, %v1974
    %v1990 = vmul.f32 %v120, %v1979
    %v1991 = vmul.f32 %v121, %v1979
    %v1992 = vmul.f32 %v120, %v1984
    %v1993 = vmul.f32 %v121, %v1984
    %1994 = vset.pattern.permute.xlu0 1
    %1995 = vperm.xlu0 %1994, %v1962
    %v1996 = vpop.permute.xlu0 %1995
    %1998 = vset.pattern.permute.xlu0 1
    %1999 = vperm.xlu0 %1998, %v1963
    %v2000 = vpop.permute.xlu0 %1999
    %2002 = vset.pattern.permute.xlu0 1
    %2003 = vperm.xlu0 %2002, %v1964
    %v2004 = vpop.permute.xlu0 %2003
    %2006 = vset.pattern.permute.xlu0 1
    %2007 = vperm.xlu0 %2006, %v1965
    %v2008 = vpop.permute.xlu0 %2007
    %v2010 = vadd.f32 %v1986, %v1996
    %v2011 = vadd.f32 %v1987, %v1996
    %v2012 = vadd.f32 %v1988, %v2000
    %v2013 = vadd.f32 %v1989, %v2000
    %v2014 = vadd.f32 %v1990, %v2004
    %v2015 = vadd.f32 %v1991, %v2004
    %v2016 = vadd.f32 %v1992, %v2008
    %v2017 = vadd.f32 %v1993, %v2008
    %v2018 = vmax.f32 %v2010, 0.0
    %v2019 = vmax.f32 %v2011, 0.0
    %v2020 = vmax.f32 %v2012, 0.0
    %v2021 = vmax.f32 %v2013, 0.0
    %v2022 = vmax.f32 %v2014, 0.0
    %v2023 = vmax.f32 %v2015, 0.0
    %v2024 = vmax.f32 %v2016, 0.0
    %v2025 = vmax.f32 %v2017, 0.0
    %v2026 = vld [vmem:[%s631] ss:$8 sm:$0x3]
    %v2028 = vperm.slane %v2026, 0
    %v2029 = vperm.slane %v2026, 1
    %v2032 = vmul.f32 %v2028, %v2018
    %v2033 = vmul.f32 %v2029, %v2019
    %v2034 = vmul.f32 %v2028, %v2020
    %v2035 = vmul.f32 %v2029, %v2021
    %v2036 = vmul.f32 %v2028, %v2022
    %v2037 = vmul.f32 %v2029, %v2023
    %v2038 = vmul.f32 %v2028, %v2024
    %v2039 = vmul.f32 %v2029, %v2025
    %v2040 = vadd.f32 %v1953, %v2032
    %v2041 = vadd.f32 %v1954, %v2033
    %v2042 = vadd.f32 %v1955, %v2034
    %v2043 = vadd.f32 %v1956, %v2035
    %v2044 = vadd.f32 %v1957, %v2036
    %v2045 = vadd.f32 %v1958, %v2037
    %v2046 = vadd.f32 %v1959, %v2038
    %v2047 = vadd.f32 %v1960, %v2039
    %s2048 = scalar_lea.vmem %s2, 864
    %v2049 = vld [vmem:[%s2048] sm:$0xff]
    %v2050 = vld [vmem:[%s2048 + $0x8] sm:$0xff]
    %v2051 = vld [vmem:[%s2048 + $0x10] sm:$0xff]
    %v2052 = vld [vmem:[%s2048 + $0x18] sm:$0xff]
    %2054 = vset.pattern.permute.xlu0 0
    %2055 = vperm.xlu0 %2054, %v2049
    %v2056 = vpop.permute.xlu0 %2055
    %2059 = vset.pattern.permute.xlu0 0
    %2060 = vperm.xlu0 %2059, %v2050
    %v2061 = vpop.permute.xlu0 %2060
    %2064 = vset.pattern.permute.xlu0 0
    %2065 = vperm.xlu0 %2064, %v2051
    %v2066 = vpop.permute.xlu0 %2065
    %2069 = vset.pattern.permute.xlu0 0
    %2070 = vperm.xlu0 %2069, %v2052
    %v2071 = vpop.permute.xlu0 %2070
    %v2073 = vmul.f32 %v120, %v2056
    %v2074 = vmul.f32 %v121, %v2056
    %v2075 = vmul.f32 %v120, %v2061
    %v2076 = vmul.f32 %v121, %v2061
    %v2077 = vmul.f32 %v120, %v2066
    %v2078 = vmul.f32 %v121, %v2066
    %v2079 = vmul.f32 %v120, %v2071
    %v2080 = vmul.f32 %v121, %v2071
    %2081 = vset.pattern.permute.xlu0 1
    %2082 = vperm.xlu0 %2081, %v2049
    %v2083 = vpop.permute.xlu0 %2082
    %2085 = vset.pattern.permute.xlu0 1
    %2086 = vperm.xlu0 %2085, %v2050
    %v2087 = vpop.permute.xlu0 %2086
    %2089 = vset.pattern.permute.xlu0 1
    %2090 = vperm.xlu0 %2089, %v2051
    %v2091 = vpop.permute.xlu0 %2090
    %2093 = vset.pattern.permute.xlu0 1
    %2094 = vperm.xlu0 %2093, %v2052
    %v2095 = vpop.permute.xlu0 %2094
    %v2097 = vadd.f32 %v2073, %v2083
    %v2098 = vadd.f32 %v2074, %v2083
    %v2099 = vadd.f32 %v2075, %v2087
    %v2100 = vadd.f32 %v2076, %v2087
    %v2101 = vadd.f32 %v2077, %v2091
    %v2102 = vadd.f32 %v2078, %v2091
    %v2103 = vadd.f32 %v2079, %v2095
    %v2104 = vadd.f32 %v2080, %v2095
    %v2105 = vmax.f32 %v2097, 0.0
    %v2106 = vmax.f32 %v2098, 0.0
    %v2107 = vmax.f32 %v2099, 0.0
    %v2108 = vmax.f32 %v2100, 0.0
    %v2109 = vmax.f32 %v2101, 0.0
    %v2110 = vmax.f32 %v2102, 0.0
    %v2111 = vmax.f32 %v2103, 0.0
    %v2112 = vmax.f32 %v2104, 0.0
    %v2113 = vld [vmem:[%s679] ss:$8 sm:$0x3]
    %v2115 = vperm.slane %v2113, 0
    %v2116 = vperm.slane %v2113, 1
    %v2119 = vmul.f32 %v2115, %v2105
    %v2120 = vmul.f32 %v2116, %v2106
    %v2121 = vmul.f32 %v2115, %v2107
    %v2122 = vmul.f32 %v2116, %v2108
    %v2123 = vmul.f32 %v2115, %v2109
    %v2124 = vmul.f32 %v2116, %v2110
    %v2125 = vmul.f32 %v2115, %v2111
    %v2126 = vmul.f32 %v2116, %v2112
    %v2127 = vadd.f32 %v2040, %v2119
    %v2128 = vadd.f32 %v2041, %v2120
    %v2129 = vadd.f32 %v2042, %v2121
    %v2130 = vadd.f32 %v2043, %v2122
    %v2131 = vadd.f32 %v2044, %v2123
    %v2132 = vadd.f32 %v2045, %v2124
    %v2133 = vadd.f32 %v2046, %v2125
    %v2134 = vadd.f32 %v2047, %v2126
    %s2135 = scalar_lea.vmem %s2, 896
    %v2136 = vld [vmem:[%s2135] sm:$0xff]
    %v2137 = vld [vmem:[%s2135 + $0x8] sm:$0xff]
    %v2138 = vld [vmem:[%s2135 + $0x10] sm:$0xff]
    %v2139 = vld [vmem:[%s2135 + $0x18] sm:$0xff]
    %2141 = vset.pattern.permute.xlu0 0
    %2142 = vperm.xlu0 %2141, %v2136
    %v2143 = vpop.permute.xlu0 %2142
    %2146 = vset.pattern.permute.xlu0 0
    %2147 = vperm.xlu0 %2146, %v2137
    %v2148 = vpop.permute.xlu0 %2147
    %2151 = vset.pattern.permute.xlu0 0
    %2152 = vperm.xlu0 %2151, %v2138
    %v2153 = vpop.permute.xlu0 %2152
    %2156 = vset.pattern.permute.xlu0 0
    %2157 = vperm.xlu0 %2156, %v2139
    %v2158 = vpop.permute.xlu0 %2157
    %v2160 = vmul.f32 %v120, %v2143
    %v2161 = vmul.f32 %v121, %v2143
    %v2162 = vmul.f32 %v120, %v2148
    %v2163 = vmul.f32 %v121, %v2148
    %v2164 = vmul.f32 %v120, %v2153
    %v2165 = vmul.f32 %v121, %v2153
    %v2166 = vmul.f32 %v120, %v2158
    %v2167 = vmul.f32 %v121, %v2158
    %2168 = vset.pattern.permute.xlu0 1
    %2169 = vperm.xlu0 %2168, %v2136
    %v2170 = vpop.permute.xlu0 %2169
    %2172 = vset.pattern.permute.xlu0 1
    %2173 = vperm.xlu0 %2172, %v2137
    %v2174 = vpop.permute.xlu0 %2173
    %2176 = vset.pattern.permute.xlu0 1
    %2177 = vperm.xlu0 %2176, %v2138
    %v2178 = vpop.permute.xlu0 %2177
    %2180 = vset.pattern.permute.xlu0 1
    %2181 = vperm.xlu0 %2180, %v2139
    %v2182 = vpop.permute.xlu0 %2181
    %v2184 = vadd.f32 %v2160, %v2170
    %v2185 = vadd.f32 %v2161, %v2170
    %v2186 = vadd.f32 %v2162, %v2174
    %v2187 = vadd.f32 %v2163, %v2174
    %v2188 = vadd.f32 %v2164, %v2178
    %v2189 = vadd.f32 %v2165, %v2178
    %v2190 = vadd.f32 %v2166, %v2182
    %v2191 = vadd.f32 %v2167, %v2182
    %v2192 = vmax.f32 %v2184, 0.0
    %v2193 = vmax.f32 %v2185, 0.0
    %v2194 = vmax.f32 %v2186, 0.0
    %v2195 = vmax.f32 %v2187, 0.0
    %v2196 = vmax.f32 %v2188, 0.0
    %v2197 = vmax.f32 %v2189, 0.0
    %v2198 = vmax.f32 %v2190, 0.0
    %v2199 = vmax.f32 %v2191, 0.0
    %v2200 = vld [vmem:[%s727] ss:$8 sm:$0x3]
    %v2202 = vperm.slane %v2200, 0
    %v2203 = vperm.slane %v2200, 1
    %v2206 = vmul.f32 %v2202, %v2192
    %v2207 = vmul.f32 %v2203, %v2193
    %v2208 = vmul.f32 %v2202, %v2194
    %v2209 = vmul.f32 %v2203, %v2195
    %v2210 = vmul.f32 %v2202, %v2196
    %v2211 = vmul.f32 %v2203, %v2197
    %v2212 = vmul.f32 %v2202, %v2198
    %v2213 = vmul.f32 %v2203, %v2199
    %v2214 = vadd.f32 %v2127, %v2206
    %v2215 = vadd.f32 %v2128, %v2207
    %v2216 = vadd.f32 %v2129, %v2208
    %v2217 = vadd.f32 %v2130, %v2209
    %v2218 = vadd.f32 %v2131, %v2210
    %v2219 = vadd.f32 %v2132, %v2211
    %v2220 = vadd.f32 %v2133, %v2212
    %v2221 = vadd.f32 %v2134, %v2213
    %s2222 = scalar_lea.vmem %s2, 928
    %v2223 = vld [vmem:[%s2222] sm:$0xff]
    %v2224 = vld [vmem:[%s2222 + $0x8] sm:$0xff]
    %v2225 = vld [vmem:[%s2222 + $0x10] sm:$0xff]
    %v2226 = vld [vmem:[%s2222 + $0x18] sm:$0xff]
    %2228 = vset.pattern.permute.xlu0 0
    %2229 = vperm.xlu0 %2228, %v2223
    %v2230 = vpop.permute.xlu0 %2229
    %2233 = vset.pattern.permute.xlu0 0
    %2234 = vperm.xlu0 %2233, %v2224
    %v2235 = vpop.permute.xlu0 %2234
    %2238 = vset.pattern.permute.xlu0 0
    %2239 = vperm.xlu0 %2238, %v2225
    %v2240 = vpop.permute.xlu0 %2239
    %2243 = vset.pattern.permute.xlu0 0
    %2244 = vperm.xlu0 %2243, %v2226
    %v2245 = vpop.permute.xlu0 %2244
    %v2247 = vmul.f32 %v120, %v2230
    %v2248 = vmul.f32 %v121, %v2230
    %v2249 = vmul.f32 %v120, %v2235
    %v2250 = vmul.f32 %v121, %v2235
    %v2251 = vmul.f32 %v120, %v2240
    %v2252 = vmul.f32 %v121, %v2240
    %v2253 = vmul.f32 %v120, %v2245
    %v2254 = vmul.f32 %v121, %v2245
    %2255 = vset.pattern.permute.xlu0 1
    %2256 = vperm.xlu0 %2255, %v2223
    %v2257 = vpop.permute.xlu0 %2256
    %2259 = vset.pattern.permute.xlu0 1
    %2260 = vperm.xlu0 %2259, %v2224
    %v2261 = vpop.permute.xlu0 %2260
    %2263 = vset.pattern.permute.xlu0 1
    %2264 = vperm.xlu0 %2263, %v2225
    %v2265 = vpop.permute.xlu0 %2264
    %2267 = vset.pattern.permute.xlu0 1
    %2268 = vperm.xlu0 %2267, %v2226
    %v2269 = vpop.permute.xlu0 %2268
    %v2271 = vadd.f32 %v2247, %v2257
    %v2272 = vadd.f32 %v2248, %v2257
    %v2273 = vadd.f32 %v2249, %v2261
    %v2274 = vadd.f32 %v2250, %v2261
    %v2275 = vadd.f32 %v2251, %v2265
    %v2276 = vadd.f32 %v2252, %v2265
    %v2277 = vadd.f32 %v2253, %v2269
    %v2278 = vadd.f32 %v2254, %v2269
    %v2279 = vmax.f32 %v2271, 0.0
    %v2280 = vmax.f32 %v2272, 0.0
    %v2281 = vmax.f32 %v2273, 0.0
    %v2282 = vmax.f32 %v2274, 0.0
    %v2283 = vmax.f32 %v2275, 0.0
    %v2284 = vmax.f32 %v2276, 0.0
    %v2285 = vmax.f32 %v2277, 0.0
    %v2286 = vmax.f32 %v2278, 0.0
    %v2287 = vld [vmem:[%s775] ss:$8 sm:$0x3]
    %v2289 = vperm.slane %v2287, 0
    %v2290 = vperm.slane %v2287, 1
    %v2293 = vmul.f32 %v2289, %v2279
    %v2294 = vmul.f32 %v2290, %v2280
    %v2295 = vmul.f32 %v2289, %v2281
    %v2296 = vmul.f32 %v2290, %v2282
    %v2297 = vmul.f32 %v2289, %v2283
    %v2298 = vmul.f32 %v2290, %v2284
    %v2299 = vmul.f32 %v2289, %v2285
    %v2300 = vmul.f32 %v2290, %v2286
    %v2301 = vadd.f32 %v2214, %v2293
    %v2302 = vadd.f32 %v2215, %v2294
    %v2303 = vadd.f32 %v2216, %v2295
    %v2304 = vadd.f32 %v2217, %v2296
    %v2305 = vadd.f32 %v2218, %v2297
    %v2306 = vadd.f32 %v2219, %v2298
    %v2307 = vadd.f32 %v2220, %v2299
    %v2308 = vadd.f32 %v2221, %v2300
    %s2309 = scalar_lea.vmem %s2, 960
    %v2310 = vld [vmem:[%s2309] sm:$0xff]
    %v2311 = vld [vmem:[%s2309 + $0x8] sm:$0xff]
    %v2312 = vld [vmem:[%s2309 + $0x10] sm:$0xff]
    %v2313 = vld [vmem:[%s2309 + $0x18] sm:$0xff]
    %2315 = vset.pattern.permute.xlu0 0
    %2316 = vperm.xlu0 %2315, %v2310
    %v2317 = vpop.permute.xlu0 %2316
    %2320 = vset.pattern.permute.xlu0 0
    %2321 = vperm.xlu0 %2320, %v2311
    %v2322 = vpop.permute.xlu0 %2321
    %2325 = vset.pattern.permute.xlu0 0
    %2326 = vperm.xlu0 %2325, %v2312
    %v2327 = vpop.permute.xlu0 %2326
    %2330 = vset.pattern.permute.xlu0 0
    %2331 = vperm.xlu0 %2330, %v2313
    %v2332 = vpop.permute.xlu0 %2331
    %v2334 = vmul.f32 %v120, %v2317
    %v2335 = vmul.f32 %v121, %v2317
    %v2336 = vmul.f32 %v120, %v2322
    %v2337 = vmul.f32 %v121, %v2322
    %v2338 = vmul.f32 %v120, %v2327
    %v2339 = vmul.f32 %v121, %v2327
    %v2340 = vmul.f32 %v120, %v2332
    %v2341 = vmul.f32 %v121, %v2332
    %2342 = vset.pattern.permute.xlu0 1
    %2343 = vperm.xlu0 %2342, %v2310
    %v2344 = vpop.permute.xlu0 %2343
    %2346 = vset.pattern.permute.xlu0 1
    %2347 = vperm.xlu0 %2346, %v2311
    %v2348 = vpop.permute.xlu0 %2347
    %2350 = vset.pattern.permute.xlu0 1
    %2351 = vperm.xlu0 %2350, %v2312
    %v2352 = vpop.permute.xlu0 %2351
    %2354 = vset.pattern.permute.xlu0 1
    %2355 = vperm.xlu0 %2354, %v2313
    %v2356 = vpop.permute.xlu0 %2355
    %v2358 = vadd.f32 %v2334, %v2344
    %v2359 = vadd.f32 %v2335, %v2344
    %v2360 = vadd.f32 %v2336, %v2348
    %v2361 = vadd.f32 %v2337, %v2348
    %v2362 = vadd.f32 %v2338, %v2352
    %v2363 = vadd.f32 %v2339, %v2352
    %v2364 = vadd.f32 %v2340, %v2356
    %v2365 = vadd.f32 %v2341, %v2356
    %v2366 = vmax.f32 %v2358, 0.0
    %v2367 = vmax.f32 %v2359, 0.0
    %v2368 = vmax.f32 %v2360, 0.0
    %v2369 = vmax.f32 %v2361, 0.0
    %v2370 = vmax.f32 %v2362, 0.0
    %v2371 = vmax.f32 %v2363, 0.0
    %v2372 = vmax.f32 %v2364, 0.0
    %v2373 = vmax.f32 %v2365, 0.0
    %v2374 = vld [vmem:[%s823] ss:$8 sm:$0x3]
    %v2376 = vperm.slane %v2374, 0
    %v2377 = vperm.slane %v2374, 1
    %v2380 = vmul.f32 %v2376, %v2366
    %v2381 = vmul.f32 %v2377, %v2367
    %v2382 = vmul.f32 %v2376, %v2368
    %v2383 = vmul.f32 %v2377, %v2369
    %v2384 = vmul.f32 %v2376, %v2370
    %v2385 = vmul.f32 %v2377, %v2371
    %v2386 = vmul.f32 %v2376, %v2372
    %v2387 = vmul.f32 %v2377, %v2373
    %v2388 = vadd.f32 %v2301, %v2380
    %v2389 = vadd.f32 %v2302, %v2381
    %v2390 = vadd.f32 %v2303, %v2382
    %v2391 = vadd.f32 %v2304, %v2383
    %v2392 = vadd.f32 %v2305, %v2384
    %v2393 = vadd.f32 %v2306, %v2385
    %v2394 = vadd.f32 %v2307, %v2386
    %v2395 = vadd.f32 %v2308, %v2387
    %s2396 = scalar_lea.vmem %s2, 992
    %v2397 = vld [vmem:[%s2396] sm:$0xff]
    %v2398 = vld [vmem:[%s2396 + $0x8] sm:$0xff]
    %v2399 = vld [vmem:[%s2396 + $0x10] sm:$0xff]
    %v2400 = vld [vmem:[%s2396 + $0x18] sm:$0xff]
    %2402 = vset.pattern.permute.xlu0 0
    %2403 = vperm.xlu0 %2402, %v2397
    %v2404 = vpop.permute.xlu0 %2403
    %2407 = vset.pattern.permute.xlu0 0
    %2408 = vperm.xlu0 %2407, %v2398
    %v2409 = vpop.permute.xlu0 %2408
    %2412 = vset.pattern.permute.xlu0 0
    %2413 = vperm.xlu0 %2412, %v2399
    %v2414 = vpop.permute.xlu0 %2413
    %2417 = vset.pattern.permute.xlu0 0
    %2418 = vperm.xlu0 %2417, %v2400
    %v2419 = vpop.permute.xlu0 %2418
    %v2421 = vmul.f32 %v120, %v2404
    %v2422 = vmul.f32 %v121, %v2404
    %v2423 = vmul.f32 %v120, %v2409
    %v2424 = vmul.f32 %v121, %v2409
    %v2425 = vmul.f32 %v120, %v2414
    %v2426 = vmul.f32 %v121, %v2414
    %v2427 = vmul.f32 %v120, %v2419
    %v2428 = vmul.f32 %v121, %v2419
    %2429 = vset.pattern.permute.xlu0 1
    %2430 = vperm.xlu0 %2429, %v2397
    %v2431 = vpop.permute.xlu0 %2430
    %2433 = vset.pattern.permute.xlu0 1
    %2434 = vperm.xlu0 %2433, %v2398
    %v2435 = vpop.permute.xlu0 %2434
    %2437 = vset.pattern.permute.xlu0 1
    %2438 = vperm.xlu0 %2437, %v2399
    %v2439 = vpop.permute.xlu0 %2438
    %2441 = vset.pattern.permute.xlu0 1
    %2442 = vperm.xlu0 %2441, %v2400
    %v2443 = vpop.permute.xlu0 %2442
    %v2445 = vadd.f32 %v2421, %v2431
    %v2446 = vadd.f32 %v2422, %v2431
    %v2447 = vadd.f32 %v2423, %v2435
    %v2448 = vadd.f32 %v2424, %v2435
    %v2449 = vadd.f32 %v2425, %v2439
    %v2450 = vadd.f32 %v2426, %v2439
    %v2451 = vadd.f32 %v2427, %v2443
    %v2452 = vadd.f32 %v2428, %v2443
    %v2453 = vmax.f32 %v2445, 0.0
    %v2454 = vmax.f32 %v2446, 0.0
    %v2455 = vmax.f32 %v2447, 0.0
    %v2456 = vmax.f32 %v2448, 0.0
    %v2457 = vmax.f32 %v2449, 0.0
    %v2458 = vmax.f32 %v2450, 0.0
    %v2459 = vmax.f32 %v2451, 0.0
    %v2460 = vmax.f32 %v2452, 0.0
    %v2461 = vld [vmem:[%s871] ss:$8 sm:$0x3]
    %v2463 = vperm.slane %v2461, 0
    %v2464 = vperm.slane %v2461, 1
    %v2467 = vmul.f32 %v2463, %v2453
    %v2468 = vmul.f32 %v2464, %v2454
    %v2469 = vmul.f32 %v2463, %v2455
    %v2470 = vmul.f32 %v2464, %v2456
    %v2471 = vmul.f32 %v2463, %v2457
    %v2472 = vmul.f32 %v2464, %v2458
    %v2473 = vmul.f32 %v2463, %v2459
    %v2474 = vmul.f32 %v2464, %v2460
    %v2475 = vadd.f32 %v2388, %v2467
    %v2476 = vadd.f32 %v2389, %v2468
    %v2477 = vadd.f32 %v2390, %v2469
    %v2478 = vadd.f32 %v2391, %v2470
    %v2479 = vadd.f32 %v2392, %v2471
    %v2480 = vadd.f32 %v2393, %v2472
    %v2481 = vadd.f32 %v2394, %v2473
    %v2482 = vadd.f32 %v2395, %v2474
    %s2483 = scalar_lea.vmem %s3, 24
    %v2484 = vld [vmem:[%s2483] sm:$0xff]
    %v2485 = vld [vmem:[%s2483 + $0x8] sm:$0xff]
    %v2486 = vld [vmem:[%s2483 + $0x10] sm:$0x7]
    %v2488 = vsel %vm62, %v995, 0
    %v2491 = vsel %vm62, %v1010, 0
    %2493 = vmatpush.msra.mxu0 0.0
    %2494 = vmatpush.msra.mxu0 0.0
    %2495 = vmatpush.msra.mxu0 0.0
    %2496 = vmatpush.msra.mxu0 0.0
    %2497 = vmatpush.msra.mxu0 0.0
    %2498 = vmatpush.msra.mxu0 0.0
    %2499 = vmatpush.msra.mxu0 0.0
    %2500 = vmatpush.msra.mxu0 0.0
    %2501 = vmatpush.msra.mxu0 0.0
    %2502 = vmatpush.msra.mxu0 0.0
    %2503 = vmatpush.msra.mxu0 0.0
    %2504 = vmatpush.msra.mxu0 0.0
    %2505 = vmatpush.msra.mxu0 0.0
    %2506 = vmatpush.msra.mxu0 0.0
    %2507 = vmatpush.msra.mxu0 %v2485
    %2508 = vmatpush.msra.mxu0 %v2484
    %2509 = vmatmul.f32.gmra.mxu0 %v2488
    %v2510 = vpop.f32.mrf.mxu0
    %v2511 = vadd.f32 0.0, %v2510
    %2512 = vmatmul.f32.gmra.mxu0 %v2491
    %v2513 = vpop.f32.mrf.mxu0
    %v2514 = vadd.f32 0.0, %v2513
    %2515 = vdwg.mxu0
    %2516 = vmatpush.xpose.msra.mxu0 0.0
    %2517 = vmatpush.xpose.msra.mxu0 0.0
    %2518 = vmatpush.xpose.msra.mxu0 0.0
    %2519 = vmatpush.xpose.msra.mxu0 0.0
    %2520 = vmatpush.xpose.msra.mxu0 0.0
    %2521 = vmatpush.xpose.msra.mxu0 0.0
    %2522 = vmatpush.xpose.msra.mxu0 0.0
    %2523 = vmatpush.xpose.msra.mxu0 0.0
    %2524 = vmatpush.xpose.msra.mxu0 0.0
    %2525 = vmatpush.xpose.msra.mxu0 0.0
    %2526 = vmatpush.xpose.msra.mxu0 0.0
    %2527 = vmatpush.xpose.msra.mxu0 0.0
    %2528 = vmatpush.xpose.msra.mxu0 %v2481
    %2529 = vmatpush.xpose.msra.mxu0 %v2479
    %2530 = vmatpush.xpose.msra.mxu0 %v2477
    %2531 = vmatpush.xpose.msra.mxu0 %v2475
    %2532 = vmatmul.f32.gmra.mxu0 %v24
    %v2533 = vpop.f32.mrf.mxu0
    %v2534 = vadd.f32 %v2511, %v2533
    %2535 = vmatmul.f32.gmra.mxu0 %v26
    %v2536 = vpop.f32.mrf.mxu0
    %v2537 = vadd.f32 %v2514, %v2536
    %2538 = vdwg.mxu0
    %2539 = vmatpush.xpose.msra.mxu0 0.0
    %2540 = vmatpush.xpose.msra.mxu0 0.0
    %2541 = vmatpush.xpose.msra.mxu0 0.0
    %2542 = vmatpush.xpose.msra.mxu0 0.0
    %2543 = vmatpush.xpose.msra.mxu0 0.0
    %2544 = vmatpush.xpose.msra.mxu0 0.0
    %2545 = vmatpush.xpose.msra.mxu0 0.0
    %2546 = vmatpush.xpose.msra.mxu0 0.0
    %2547 = vmatpush.xpose.msra.mxu0 0.0
    %2548 = vmatpush.xpose.msra.mxu0 0.0
    %2549 = vmatpush.xpose.msra.mxu0 0.0
    %2550 = vmatpush.xpose.msra.mxu0 0.0
    %2551 = vmatpush.xpose.msra.mxu0 %v2482
    %2552 = vmatpush.xpose.msra.mxu0 %v2480
    %2553 = vmatpush.xpose.msra.mxu0 %v2478
    %2554 = vmatpush.xpose.msra.mxu0 %v2476
    %2555 = vmatmul.f32.gmra.mxu0 %v25
    %v2556 = vpop.f32.mrf.mxu0
    %v2557 = vadd.f32 %v2534, %v2556
    %2558 = vmatmul.f32.gmra.mxu0 %v27
    %v2559 = vpop.f32.mrf.mxu0
    %v2560 = vadd.f32 %v2537, %v2559
    %2561 = vdwg.mxu0
    %v2562 = vperm.slane %v2486, 0
    %v2563 = vadd.f32 %v2557, %v2562
    %v2564 = vadd.f32 %v2560, %v2562
    %v2565 = vperm.slane %v2486, 1
    %v2566 = vmul.f32 %v2563, %v2565
    %v2567 = vmul.f32 %v2564, %v2565
    %v2568 = vperm.slane %v2486, 2
    %v2569 = vadd.f32 %v2566, %v2568
    %v2570 = vadd.f32 %v2567, %v2568
    %v2571 = vxor.u32 %v2569, 2147483648
    %v2572 = vxor.u32 %v2570, 2147483648
    %v2573 = vmul.f32 %v2571, 1.442695
    %v2574 = vpow.pop %v2573
    %v2575 = vmul.f32 %v2572, 1.442695
    %v2576 = vpow.pop %v2575
    %v2577 = vadd.f32 %v2574, 1.0
    %v2578 = vadd.f32 %v2576, 1.0
    %v2579 = vrcp.pop %v2577
    %v2580 = vmul.f32 %v2577, %v2579
    %v2581 = vsub.f32 1.0, %v2580
    %v2582 = vmul.f32 %v2579, %v2581
    %v2583 = vadd.f32 %v2579, %v2582
    %vm2584 = vweird.f32 %v2577
    %vm2585 = vweird.f32 %v2579
    %vm2586 = vmor %vm2584, %vm2585
    %v2587 = vsel %vm2586, %v2579, %v2583
    %v2588 = vand.u32 2147483647, %v2577
    %vm2589 = vcmp.eq.f32.partialorder %v2588, 8.507059e+37
    %v2590 = vand.u32 %v2577, 2147483648
    %v2591 = vor.u32 1.1754944e-38, %v2590
    %v2592 = vsel %vm2589, %v2591, %v2587
    %v2593 = vmul.f32 1.0, %v2592
    %v2594 = vrcp.pop %v2578
    %v2595 = vmul.f32 %v2578, %v2594
    %v2596 = vsub.f32 1.0, %v2595
    %v2597 = vmul.f32 %v2594, %v2596
    %v2598 = vadd.f32 %v2594, %v2597
    %vm2599 = vweird.f32 %v2578
    %vm2600 = vweird.f32 %v2594
    %vm2601 = vmor %vm2599, %vm2600
    %v2602 = vsel %vm2601, %v2594, %v2598
    %v2603 = vand.u32 2147483647, %v2578
    %vm2604 = vcmp.eq.f32.partialorder %v2603, 8.507059e+37
    %v2605 = vand.u32 %v2578, 2147483648
    %v2606 = vor.u32 1.1754944e-38, %v2605
    %v2607 = vsel %vm2604, %v2606, %v2602
    %v2608 = vmul.f32 1.0, %v2607
    %2609 = vxpose.xlu0.b32.start [1/16] %v2593, 128
    %2610 = vxpose.xlu0.b32.cont [2/16] %v2608, 128
    %2611 = vxpose.xlu0.b32.cont [3/16] 0.0, 128
    %2612 = vxpose.xlu0.b32.cont [4/16] 0.0, 128
    %2613 = vxpose.xlu0.b32.cont [5/16] 0.0, 128
    %2614 = vxpose.xlu0.b32.cont [6/16] 0.0, 128
    %2615 = vxpose.xlu0.b32.cont [7/16] 0.0, 128
    %2616 = vxpose.xlu0.b32.cont [8/16] 0.0, 128
    %2617 = vxpose.xlu0.b32.cont [9/16] 0.0, 128
    %2618 = vxpose.xlu0.b32.cont [10/16] 0.0, 128
    %2619 = vxpose.xlu0.b32.cont [11/16] 0.0, 128
    %2620 = vxpose.xlu0.b32.cont [12/16] 0.0, 128
    %2621 = vxpose.xlu0.b32.cont [13/16] 0.0, 128
    %2622 = vxpose.xlu0.b32.cont [14/16] 0.0, 128
    %2623 = vxpose.xlu0.b32.cont [15/16] 0.0, 128
    %2624 = vxpose.xlu0.b32.end [16/16] 0.0, 128
    %v2625 = vpop.trf.xlu0
    %v2626 = vpop.trf.xlu0
    %v2627 = vpop.trf.xlu0
    %v2628 = vpop.trf.xlu0
    %v2629 = vpop.trf.xlu0
    %v2630 = vpop.trf.xlu0
    %v2631 = vpop.trf.xlu0
    %v2632 = vpop.trf.xlu0
    %v2633 = vpop.trf.xlu0
    %v2634 = vpop.trf.xlu0
    %v2635 = vpop.trf.xlu0
    %v2636 = vpop.trf.xlu0
    %v2637 = vpop.trf.xlu0
    %v2638 = vpop.trf.xlu0
    %v2639 = vpop.trf.xlu0
    %v2640 = vpop.trf.xlu0
    %v2642 = vsel %vm62, %v2625, 0
    %v2645 = vsel %vm62, %v2626, 0
    %v2648 = vsel %vm62, %v2627, 0
    %v2651 = vsel %vm62, %v2628, 0
    %2653 = vmatpush.msra.mxu0 0.0
    %2654 = vmatpush.msra.mxu0 0.0
    %2655 = vmatpush.msra.mxu0 0.0
    %2656 = vmatpush.msra.mxu0 0.0
    %2657 = vmatpush.msra.mxu0 0.0
    %2658 = vmatpush.msra.mxu0 0.0
    %2659 = vmatpush.msra.mxu0 0.0
    %2660 = vmatpush.msra.mxu0 0.0
    %2661 = vmatpush.msra.mxu0 0.0
    %2662 = vmatpush.msra.mxu0 0.0
    %2663 = vmatpush.msra.mxu0 0.0
    %2664 = vmatpush.msra.mxu0 0.0
    %2665 = vmatpush.msra.mxu0 0.0
    %2666 = vmatpush.msra.mxu0 0.0
    %2667 = vmatpush.msra.mxu0 %v2608
    %2668 = vmatpush.msra.mxu0 %v2593
    %2669 = vmatmul.f32.gmra.mxu0 %v2642
    %v2670 = vpop.f32.mrf.mxu0
    %v2671 = vadd.f32 0.0, %v2670
    %2672 = vmatmul.f32.gmra.mxu0 %v2645
    %v2673 = vpop.f32.mrf.mxu0
    %v2674 = vadd.f32 0.0, %v2673
    %2675 = vmatmul.f32.gmra.mxu0 %v2648
    %v2676 = vpop.f32.mrf.mxu0
    %v2677 = vadd.f32 0.0, %v2676
    %2678 = vmatmul.f32.gmra.mxu0 %v2651
    %v2679 = vpop.f32.mrf.mxu0
    %v2680 = vadd.f32 0.0, %v2679
    %2681 = vdwg.mxu0
    %vm2682 = vcmask 261120
    %2683 = vst.msk [vmem:[#allocation3] sm:$0xff] %vm2682, %v2671
    %2684 = vst.msk [vmem:[#allocation3 + $0x8] sm:$0xff] %vm2682, %v2674
    %2685 = vst.msk [vmem:[#allocation3 + $0x10] sm:$0xff] %vm2682, %v2677
    %2686 = vst.msk [vmem:[#allocation3 + $0x18] sm:$0xff] %vm2682, %v2680
    // Predicated region
    $region18: #{generator_forward.1} parent=1 // pred_check
      _
    $region19: #{generator_forward.1} parent=1 // pred_check_branch
      %2688 = sbr.rel (0) target = $region21
    $region20: #{generator_forward.1} parent=1 // pred_region
      %2690 = vsyncadd [#allocation4], 0
      %s2691 = sshll.u32 [#allocation3], 4
      %s2692 = int_to_ptr.vmem [resolvable:$true] %s2691
      %s2693 = sshll.u32 %s4, 4
      %s2694 = int_to_ptr.hbm [resolvable:$true] %s2693
      %2699 = dma.vmem_to_hbm [thread:$0]  %s2692, 512, %s2694, [#allocation4], 128, 128, 8
    $region21: #{generator_forward.1} parent=1 // pred_fallthru
      _
    // Predicated region
    $region22: #{generator_forward.1} parent=1 // pred_check
      _
    $region23: #{generator_forward.1} parent=1 // pred_check_branch
      %2701 = sbr.rel (0) target = $region25
    $region24: #{generator_forward.1} parent=1 // pred_region
      %2703 = dma.done [#allocation4], 512
    $region25: #{generator_forward.1} parent=1 // pred_fallthru
      _
    %2704 = vsyncpa [#allocation4], 1

</llo_original>
